<compile_context>
chip_gen: v7x
topology: tpu7x:2x2x1
jax: 0.10.0
libtpu: 0.0.40
codegen_flags: <defaults>
</compile_context>

<pallas_src>
import functools

import numpy as np
import jax
import jax.numpy as jnp
from jax.experimental import pallas as pl
from jax.experimental.pallas import tpu as pltpu


def _normalize_rows(x, eps):
    """F.normalize(x, dim=-1, eps): x / max(||x||, eps), via rsqrt (EUP slot)."""
    s = jnp.sum(x * x, axis=-1, keepdims=True)
    inv = jnp.where(s > eps * eps, jax.lax.rsqrt(s), 1.0 / eps)
    return x * inv


def _loss_kernel(feat_ref, logits_ref, onehot_ref, cw_ref, eq_ref, wh_ref,
                 chol_ref, noise_ref, out_ref, acc_ref,
                 *, alpha, beta, ce_weight, quantum_weight, B, D, TI):
    eps = 1e-8
    g = pl.program_id(0)

    @pl.when(g == 0)
    def _init():
        acc_ref[...] = jnp.zeros_like(acc_ref)

    # ---------------- j-side quantities (all B rows; O(B*D), cheap) ------------
    feat = feat_ref[...]                                        # [B, D]
    xn = _normalize_rows(feat, eps)                             # F.normalize(features)

    # torch.gradient(xn, dim=1)[0]: central differences inside, one-sided at the
    # edges.  Two XLU lane rotations instead of a DxD matmul (MXU/DMA saved).
    xp1 = pltpu.roll(xn, shift=D - 1, axis=1)                   # xn[:, k+1] (wraps)
    xm1 = pltpu.roll(xn, shift=1, axis=1)                       # xn[:, k-1] (wraps)
    col = jax.lax.broadcasted_iota(jnp.int32, (B, D), 1)
    grad = 0.5 * (xp1 - xm1)
    grad = jnp.where(col == 0, xp1 - xn, grad)                  # x[1] - x[0]
    grad = jnp.where(col == D - 1, xn - xm1, grad)              # x[D-1] - x[D-2]
    # structure term: alpha * (g g^T) x == alpha * g * <g, x>
    struct = alpha * grad * jnp.sum(grad * xn, axis=1, keepdims=True)    # [B, D]

    # ---------------- i-side chunk for this grid step ---------------------------
    i0 = g * TI
    if TI % 8 == 0:
        i0 = pl.multiple_of(i0, 8)
    xn_i = _normalize_rows(feat_ref[pl.ds(i0, TI), :], eps)     # [TI, D]

    # ---------------- random term: beta * noise @ chol (bf16 in, f32 acc) -------
    # The PyTorch module does randn_like(x) @ chol_sigma; we match that order.
    noise = noise_ref[...]                                      # [TI, B, D] bf16
    rnd = beta * jnp.dot(noise.reshape(TI * B, D), chol_ref[...],
                         preferred_element_type=jnp.float32).reshape(TI, B, D)

    # perturbed, re-normalized state of features[j] for each ordered pair (i, j)
    x2p = xn[None, :, :] + struct[None, :, :] + rnd             # [TI, B, D]
    x2p = _normalize_rows(x2p, eps)

    wh = jnp.maximum(wh_ref[...], 0.0)                          # relu(W_h)  [1, D]
    # |sum_d exp(i*pi*wh_d*(x2p_d - xn_i_d))|
    theta = jnp.pi * wh[None, :, :] * (x2p - xn_i[:, None, :])  # [TI, B, D]
    re = jnp.sum(jnp.cos(theta), axis=-1)                       # [TI, B]
    im = jnp.sum(jnp.sin(theta), axis=-1)                       # [TI, B]
    fid_raw = jnp.sqrt(re * re + im * im)

    # cosine similarity of the ORIGINAL features (same eps=1e-8 norm) -> MXU
    cossim = jax.lax.dot_general(xn_i, xn, (((1,), (1,)), ((), ())),
                                 preferred_element_type=jnp.float32)     # [TI, B]
    fid = jnp.clip(fid_raw * 0.5 * (1.0 + cossim), 0.0, 1.0)

    eq = eq_ref[...]                                            # [TI, B] float {0,1}
    ii = jax.lax.broadcasted_iota(jnp.int32, (TI, B), 0) + i0
    jj = jax.lax.broadcasted_iota(jnp.int32, (TI, B), 1)
    contrib = jnp.where(eq > 0.5, 1.0 - fid, fid)
    contrib = jnp.where(ii == jj, 0.0, contrib)
    acc_ref[...] += jnp.sum(contrib)

    # ---------------- finalize on the last step ---------------------------------
    @pl.when(g == pl.num_programs(0) - 1)
    def _finalize():
        # weighted cross entropy (F.cross_entropy with class weights)
        logits = logits_ref[...]                                # [B, C]
        onehot = onehot_ref[...]                                # [B, C]
        cw = cw_ref[...]                                        # [1, C]
        m = jnp.max(logits, axis=1, keepdims=True)
        z = logits - m
        lse = jnp.log(jnp.sum(jnp.exp(z), axis=1, keepdims=True))
        logp = z - lse
        nll = -jnp.sum(onehot * logp, axis=1, keepdims=True)    # [B, 1]
        w = jnp.sum(onehot * cw, axis=1, keepdims=True)         # [B, 1]
        ce = jnp.sum(w * nll) / jnp.sum(w)
        q_loss = acc_ref[...] / float(B * (B - 1))              # (1, 1)
        out_ref[...] = ce_weight * ce + quantum_weight * q_loss


def _pick_tile_i(B, D):
    """Largest i-tile (multiple of 8, dividing B) whose live f32 temporaries and
    double-buffered bf16 noise tile stay well under v7x's 64 MiB VMEM."""
    if B <= 8 or B % 8 != 0:
        return B
    budget = 24 * 1024 * 1024
    per_row = 6 * B * D * 4 + 2 * B * D * 2      # ~6 [B,D] f32 temps + 2x bf16 noise per i-row
    cap = max(8, (budget // per_row) // 8 * 8)
    ti = min(cap, B)
    while B % ti:
        ti -= 8
    return ti


def combined_quantum_loss(features, outputs, labels, noise,
                          W_h, sigma, class_weights,
                          ce_weight=0.7, quantum_weight=0.2,
                          alpha=0.5, beta=0.1, tile_i=None):
    """Pallas implementation of CombinedQuantumLoss.forward.

    `noise` replaces torch.randn_like: one pre-drawn gaussian row per ordered
    pair (i, j), shaped [B, B, D] (or [B*B, D]).
    """
    features = features.astype(jnp.float32)
    outputs = outputs.astype(jnp.float32)
    B, D = features.shape
    C = outputs.shape[1]
    # TODO(synk): the module returns 0 for the quantum term when batch_size <= 1;
    # this wrapper assumes B >= 2.

    TI = _pick_tile_i(B, D) if tile_i is None else tile_i
    assert B % TI == 0 and (TI == B or TI % 8 == 0)
    grid = (B // TI,)

    onehot = jax.nn.one_hot(labels, C, dtype=jnp.float32)                  # [B, C]
    eq = (labels[:, None] == labels[None, :]).astype(jnp.float32)          # [B, B]
    cw = class_weights.astype(jnp.float32).reshape(1, C)
    wh = W_h.astype(jnp.float32).reshape(1, D)
    # TODO(synk): torch's try/except RuntimeError around cholesky has no JAX/Pallas
    # equivalent; cholesky is computed in glue and assumed to succeed.
    chol = jnp.linalg.cholesky(
        sigma.astype(jnp.float32) + 1e-6 * jnp.eye(D, dtype=jnp.float32))
    chol_bf16 = chol.astype(jnp.bfloat16)
    # Dominant HBM read: stream the per-pair noise in bf16 (f32 accumulation on MXU).
    noise = jnp.asarray(noise).reshape(B, B, D).astype(jnp.bfloat16)

    kernel = functools.partial(
        _loss_kernel, alpha=alpha, beta=beta, ce_weight=ce_weight,
        quantum_weight=quantum_weight, B=B, D=D, TI=TI)

    cost = pl.CostEstimate(
        flops=2 * B * B * D * D + 14 * B * B * D,
        transcendentals=2 * B * B * D + 2 * B * B,
        bytes_accessed=(B * B * D * 2 + B * D * 4 + D * D * 2
                        + B * B * 4 + 2 * B * C * 4 + (D + C) * 4 + 4))

    out = pl.pallas_call(
        kernel,
        out_shape=jax.ShapeDtypeStruct((1, 1), jnp.float32),
        grid=grid,
        in_specs=[
            pl.BlockSpec((B, D), lambda g: (0, 0)),         # features (resident)
            pl.BlockSpec((B, C), lambda g: (0, 0)),         # logits (resident)
            pl.BlockSpec((B, C), lambda g: (0, 0)),         # one-hot labels
            pl.BlockSpec((1, C), lambda g: (0, 0)),         # class weights
            pl.BlockSpec((TI, B), lambda g: (g, 0)),        # label-equality i-chunk
            pl.BlockSpec((1, D), lambda g: (0, 0)),         # W_h
            pl.BlockSpec((D, D), lambda g: (0, 0)),         # chol(sigma+1e-6 I) bf16
            pl.BlockSpec((TI, B, D), lambda g: (g, 0, 0)),  # per-pair noise bf16 (streamed)
        ],
        out_specs=pl.BlockSpec((1, 1), lambda g: (0, 0)),
        scratch_shapes=[pltpu.VMEM((1, 1), jnp.float32)],   # quantum-term accumulator
        compiler_params=pltpu.CompilerParams(
            dimension_semantics=("arbitrary",),             # accumulator across i-tiles
            vmem_limit_bytes=48 * 1024 * 1024),
        cost_estimate=cost,
    )(features, outputs, onehot, cw, eq, wh, chol_bf16, noise)
    return out[0, 0]


def reference_loss(features, outputs, labels, noise, W_h, sigma, class_weights,
                   ce_weight=0.7, quantum_weight=0.2, alpha=0.5, beta=0.1):
    """Pure-JAX reference mirroring the PyTorch module (same pre-drawn noise)."""
    B, D = features.shape
    eps = 1e-8
    logp = jax.nn.log_softmax(outputs, axis=1)
    nll = -jnp.take_along_axis(logp, labels[:, None], axis=1)[:, 0]
    w = class_weights[labels]
    ce = jnp.sum(w * nll) / jnp.sum(w)

    xn = features / jnp.maximum(jnp.linalg.norm(features, axis=1, keepdims=True), eps)
    g = jnp.gradient(xn, axis=1)
    struct = alpha * g * jnp.sum(g * xn, axis=1, keepdims=True)
    chol = jnp.linalg.cholesky(sigma + 1e-6 * jnp.eye(D, dtype=sigma.dtype))
    rnd = (beta * (noise.reshape(B * B, D) @ chol)).reshape(B, B, D)
    x2p = xn[None] + struct[None] + rnd
    x2p = x2p / jnp.maximum(jnp.linalg.norm(x2p, axis=-1, keepdims=True), eps)
    wh = jnp.maximum(W_h, 0.0)
    theta = jnp.pi * wh[None, None, :] * (x2p - xn[:, None, :])
    fid_raw = jnp.sqrt(jnp.sum(jnp.cos(theta), -1) ** 2 + jnp.sum(jnp.sin(theta), -1) ** 2)
    cossim = xn @ xn.T
    fid = jnp.clip(fid_raw * 0.5 * (1.0 + cossim), 0.0, 1.0)
    eqm = labels[:, None] == labels[None, :]
    contrib = jnp.where(eqm, 1.0 - fid, fid) * (1.0 - jnp.eye(B))
    q = jnp.sum(contrib) / (B * (B - 1))
    return ce_weight * ce + quantum_weight * q


if __name__ == "__main__":
    B, D, C = 16, 128, 4   # small shapes: batch=16, feat_dim=128, num_classes=4

    key = jax.random.PRNGKey(0)
    kf, ko, kl, kn, kw, ks = jax.random.split(key, 6)
    features = jax.random.normal(kf, (B, D), dtype=jnp.float32)
    outputs = jax.random.normal(ko, (B, C), dtype=jnp.float32)
    labels = jax.random.randint(kl, (B,), 0, C, dtype=jnp.int32)
    # TODO(synk): torch.randn_like draws fresh noise per (i, j) call inside the loop;
    # here one gaussian row per ordered pair is pre-drawn deterministically.
    noise = jax.random.normal(kn, (B, B, D), dtype=jnp.float32)

    # Config 1: parameters exactly as in __init__ (W_h = 1, sigma = I, weights = 1).
    configs = [(jnp.ones((D,), jnp.float32),
                jnp.eye(D, dtype=jnp.float32),
                jnp.ones((C,), jnp.float32))]
    # Config 2: "trained"-looking parameters — spread W_h, generic SPD sigma,
    # non-uniform class weights (exercises relu(W_h), chol and weighted-CE paths).
    A = jax.random.normal(ks, (D, D), dtype=jnp.float32)
    configs.append((3.0 * jnp.abs(jax.random.normal(kw, (D,), dtype=jnp.float32)),
                    A @ A.T / D + 0.5 * jnp.eye(D, dtype=jnp.float32),
                    jnp.array([1.0, 2.0, 0.5, 1.5], jnp.float32)))

    for W_h, sigma, class_weights in configs:
        # tile_i=8 -> grid of 2 steps, exercising the accumulator / pl.when paths.
        loss = combined_quantum_loss(features, outputs, labels, noise,
                                     W_h, sigma, class_weights, tile_i=8)
        loss = jax.block_until_ready(loss)
        ref = reference_loss(features, outputs, labels, noise,
                             W_h, sigma, class_weights)
        np.testing.assert_allclose(np.asarray(loss), np.asarray(ref),
                                   rtol=5e-2, atol=5e-2)

    print("KERNEL_OK")
</pallas_src>

<mosaic_0001>
module attributes {stable_mosaic.version = 11 : i64} {
  func.func @_loss_kernel(%arg0: i32, %arg1: memref<16x128xf32, #tpu.memory_space<vmem>>, %arg2: memref<16x4xf32, #tpu.memory_space<vmem>>, %arg3: memref<16x4xf32, #tpu.memory_space<vmem>>, %arg4: memref<1x4xf32, #tpu.memory_space<vmem>>, %arg5: memref<8x16xf32, #tpu.memory_space<vmem>>, %arg6: memref<1x128xf32, #tpu.memory_space<vmem>>, %arg7: memref<128x128xbf16, #tpu.memory_space<vmem>>, %arg8: memref<8x16x128xbf16, #tpu.memory_space<vmem>>, %arg9: memref<1x1xf32, #tpu.memory_space<vmem>>, %arg10: memref<1x1xf32, #tpu.memory_space<vmem>>) attributes {dimension_semantics = [#tpu.dimension_semantics<arbitrary>], iteration_bounds = array<i64: 2>, scalar_prefetch = 0 : i64, scratch_operands = 1 : i64, tpu.core_type = #tpu.core_type<tc>, window_params = [{pipeline_mode = #tpu.pipeline_mode<synchronous>, transform_indices = @transform_0, window_bounds = array<i64: 16, 128>}, {pipeline_mode = #tpu.pipeline_mode<synchronous>, transform_indices = @transform_1, window_bounds = array<i64: 16, 4>}, {pipeline_mode = #tpu.pipeline_mode<synchronous>, transform_indices = @transform_2, window_bounds = array<i64: 16, 4>}, {pipeline_mode = #tpu.pipeline_mode<synchronous>, transform_indices = @transform_3, window_bounds = array<i64: 1, 4>}, {transform_indices = @transform_4, window_bounds = array<i64: 8, 16>}, {pipeline_mode = #tpu.pipeline_mode<synchronous>, transform_indices = @transform_5, window_bounds = array<i64: 1, 128>}, {pipeline_mode = #tpu.pipeline_mode<synchronous>, transform_indices = @transform_6, window_bounds = array<i64: 128, 128>}, {transform_indices = @transform_7, window_bounds = array<i64: 8, 16, 128>}, {pipeline_mode = #tpu.pipeline_mode<synchronous>, transform_indices = @transform_8, window_bounds = array<i64: 1, 1>}]} {
    %c0_i32 = arith.constant 0 : i32
    %0 = arith.cmpi eq, %arg0, %c0_i32 : i32
    %1 = arith.extui %0 : i1 to i32
    %c0_i32_0 = arith.constant 0 : i32
    %2 = arith.cmpi ne, %1, %c0_i32_0 : i32
    scf.if %2 {
      %cst_46 = arith.constant 0.000000e+00 : f32
      %124 = vector.broadcast %cst_46 : f32 to vector<1x1xf32>
      %c0_47 = arith.constant 0 : index
      %c0_48 = arith.constant 0 : index
      %125 = vector.load %arg10[%c0_47, %c0_48] : memref<1x1xf32, #tpu.memory_space<vmem>>, vector<1x1xf32>
      tpu.vector_store %arg10[%c0_47, %c0_48], %124 {strides = array<i32>} : memref<1x1xf32, #tpu.memory_space<vmem>>, vector<1x1xf32>,
    } else {
    }
    %c0 = arith.constant 0 : index
    %c0_1 = arith.constant 0 : index
    %3 = vector.load %arg1[%c0, %c0_1] : memref<16x128xf32, #tpu.memory_space<vmem>>, vector<16x128xf32>
    %4 = arith.mulf %3, %3 : vector<16x128xf32>
    %cst = arith.constant dense<0.000000e+00> : vector<16xf32>
    %5 = vector.multi_reduction <add>, %4, %cst [1] : vector<16x128xf32> to vector<16xf32>
    %6 = vector.shape_cast %5 : vector<16xf32> to vector<16x1xf32>
    %cst_2 = arith.constant 1.000000e-16 : f32
    %7 = vector.broadcast %cst_2 : f32 to vector<16x1xf32>
    %8 = arith.cmpf ogt, %6, %7 : vector<16x1xf32>
    %9 = math.rsqrt %6 : vector<16x1xf32>
    %cst_3 = arith.constant 1.000000e+08 : f32
    %10 = vector.broadcast %cst_3 : f32 to vector<16x1xf32>
    %11 = arith.select %8, %9, %10 : vector<16x1xi1>, vector<16x1xf32>
    %12 = vector.broadcast %11 : vector<16x1xf32> to vector<16x128xf32>
    %13 = arith.mulf %3, %12 : vector<16x128xf32>
    %c127_i32 = arith.constant 127 : i32
    %14 = tpu.dynamic_rotate %13 by %c127_i32 dim 1 : vector<16x128xf32>, i32 -> vector<16x128xf32>
    %c1_i32 = arith.constant 1 : i32
    %15 = tpu.dynamic_rotate %13 by %c1_i32 dim 1 : vector<16x128xf32>, i32 -> vector<16x128xf32>
    %16 = tpu.iota {dimensions = array<i32: 1>} : vector<16x128xi32>
    %17 = arith.subf %14, %15 : vector<16x128xf32>
    %cst_4 = arith.constant 5.000000e-01 : f32
    %18 = vector.broadcast %cst_4 : f32 to vector<16x128xf32>
    %19 = arith.mulf %18, %17 : vector<16x128xf32>
    %c0_i32_5 = arith.constant 0 : i32
    %20 = vector.broadcast %c0_i32_5 : i32 to vector<16x128xi32>
    %21 = arith.cmpi eq, %16, %20 : vector<16x128xi32>
    %22 = arith.subf %14, %13 : vector<16x128xf32>
    %23 = arith.select %21, %22, %19 : vector<16x128xi1>, vector<16x128xf32>
    %c127_i32_6 = arith.constant 127 : i32
    %24 = vector.broadcast %c127_i32_6 : i32 to vector<16x128xi32>
    %25 = arith.cmpi eq, %16, %24 : vector<16x128xi32>
    %26 = arith.subf %13, %15 : vector<16x128xf32>
    %27 = arith.select %25, %26, %23 : vector<16x128xi1>, vector<16x128xf32>
    %cst_7 = arith.constant 5.000000e-01 : f32
    %28 = vector.broadcast %cst_7 : f32 to vector<16x128xf32>
    %29 = arith.mulf %28, %27 : vector<16x128xf32>
    %30 = arith.mulf %27, %13 : vector<16x128xf32>
    %cst_8 = arith.constant dense<0.000000e+00> : vector<16xf32>
    %31 = vector.multi_reduction <add>, %30, %cst_8 [1] : vector<16x128xf32> to vector<16xf32>
    %32 = vector.shape_cast %31 : vector<16xf32> to vector<16x1xf32>
    %33 = vector.broadcast %32 : vector<16x1xf32> to vector<16x128xf32>
    %34 = arith.mulf %29, %33 : vector<16x128xf32>
    %c8_i32 = arith.constant 8 : i32
    %35 = arith.muli %arg0, %c8_i32 : i32
    %36 = tpu.assume_multiple %35, 8 : i32
    %37 = arith.index_cast %36 : i32 to index
    %c0_9 = arith.constant 0 : index
    %38 = vector.load %arg1[%37, %c0_9] : memref<16x128xf32, #tpu.memory_space<vmem>>, vector<8x128xf32>
    %39 = arith.mulf %38, %38 : vector<8x128xf32>
    %cst_10 = arith.constant dense<0.000000e+00> : vector<8xf32>
    %40 = vector.multi_reduction <add>, %39, %cst_10 [1] : vector<8x128xf32> to vector<8xf32>
    %41 = vector.shape_cast %40 : vector<8xf32> to vector<8x1xf32>
    %cst_11 = arith.constant 1.000000e-16 : f32
    %42 = vector.broadcast %cst_11 : f32 to vector<8x1xf32>
    %43 = arith.cmpf ogt, %41, %42 : vector<8x1xf32>
    %44 = math.rsqrt %41 : vector<8x1xf32>
    %cst_12 = arith.constant 1.000000e+08 : f32
    %45 = vector.broadcast %cst_12 : f32 to vector<8x1xf32>
    %46 = arith.select %43, %44, %45 : vector<8x1xi1>, vector<8x1xf32>
    %47 = vector.broadcast %46 : vector<8x1xf32> to vector<8x128xf32>
    %48 = arith.mulf %38, %47 : vector<8x128xf32>
    %c0_13 = arith.constant 0 : index
    %c0_14 = arith.constant 0 : index
    %c0_15 = arith.constant 0 : index
    %49 = vector.load %arg8[%c0_13, %c0_14, %c0_15] : memref<8x16x128xbf16, #tpu.memory_space<vmem>>, vector<8x16x128xbf16>
    %50 = vector.shape_cast %49 : vector<8x16x128xbf16> to vector<128x128xbf16>
    %c0_16 = arith.constant 0 : index
    %c0_17 = arith.constant 0 : index
    %51 = vector.load %arg7[%c0_16, %c0_17] : memref<128x128xbf16, #tpu.memory_space<vmem>>, vector<128x128xbf16>
    %cst_18 = arith.constant dense<0.000000e+00> : vector<128x128xf32>
    %52 = tpu.matmul %50, %51, %cst_18 {dimension_numbers = #tpu.dot_dimension_numbers<[1], [0], [0], [1], [0, 0, 1, 1], [], []>} : vector<128x128xbf16>, vector<128x128xbf16>, vector<128x128xf32> -> vector<128x128xf32>
    %53 = vector.shape_cast %52 : vector<128x128xf32> to vector<8x16x128xf32>
    %cst_19 = arith.constant 1.000000e-01 : f32
    %54 = vector.broadcast %cst_19 : f32 to vector<8x16x128xf32>
    %55 = arith.mulf %54, %53 : vector<8x16x128xf32>
    %56 = vector.shape_cast %13 : vector<16x128xf32> to vector<1x16x128xf32>
    %57 = vector.shape_cast %34 : vector<16x128xf32> to vector<1x16x128xf32>
    %58 = arith.addf %56, %57 : vector<1x16x128xf32>
    %59 = vector.broadcast %58 : vector<1x16x128xf32> to vector<8x16x128xf32>
    %60 = arith.addf %59, %55 : vector<8x16x128xf32>
    %61 = arith.mulf %60, %60 : vector<8x16x128xf32>
    %cst_20 = arith.constant dense<0.000000e+00> : vector<8x16xf32>
    %62 = vector.multi_reduction <add>, %61, %cst_20 [2] : vector<8x16x128xf32> to vector<8x16xf32>
    %63 = vector.shape_cast %62 : vector<8x16xf32> to vector<8x16x1xf32>
    %cst_21 = arith.constant 1.000000e-16 : f32
    %64 = vector.broadcast %cst_21 : f32 to vector<8x16x1xf32>
    %65 = arith.cmpf ogt, %63, %64 : vector<8x16x1xf32>
    %66 = math.rsqrt %63 : vector<8x16x1xf32>
    %cst_22 = arith.constant 1.000000e+08 : f32
    %67 = vector.broadcast %cst_22 : f32 to vector<8x16x1xf32>
    %68 = arith.select %65, %66, %67 : vector<8x16x1xi1>, vector<8x16x1xf32>
    %69 = vector.broadcast %68 : vector<8x16x1xf32> to vector<8x16x128xf32>
    %70 = arith.mulf %60, %69 : vector<8x16x128xf32>
    %c0_23 = arith.constant 0 : index
    %c0_24 = arith.constant 0 : index
    %71 = vector.load %arg6[%c0_23, %c0_24] : memref<1x128xf32, #tpu.memory_space<vmem>>, vector<1x128xf32>
    %cst_25 = arith.constant 0.000000e+00 : f32
    %72 = vector.broadcast %cst_25 : f32 to vector<1x128xf32>
    %73 = arith.maximumf %71, %72 : vector<1x128xf32>
    %74 = vector.shape_cast %73 : vector<1x128xf32> to vector<1x1x128xf32>
    %cst_26 = arith.constant 3.14159274 : f32
    %75 = vector.broadcast %cst_26 : f32 to vector<1x1x128xf32>
    %76 = arith.mulf %75, %74 : vector<1x1x128xf32>
    %77 = vector.shape_cast %48 : vector<8x128xf32> to vector<8x1x128xf32>
    %78 = vector.broadcast %77 : vector<8x1x128xf32> to vector<8x16x128xf32>
    %79 = arith.subf %70, %78 : vector<8x16x128xf32>
    %80 = vector.broadcast %76 : vector<1x1x128xf32> to vector<8x16x128xf32>
    %81 = arith.mulf %80, %79 : vector<8x16x128xf32>
    %82 = math.cos %81 : vector<8x16x128xf32>
    %cst_27 = arith.constant dense<0.000000e+00> : vector<8x16xf32>
    %83 = vector.multi_reduction <add>, %82, %cst_27 [2] : vector<8x16x128xf32> to vector<8x16xf32>
    %84 = math.sin %81 : vector<8x16x128xf32>
    %cst_28 = arith.constant dense<0.000000e+00> : vector<8x16xf32>
    %85 = vector.multi_reduction <add>, %84, %cst_28 [2] : vector<8x16x128xf32> to vector<8x16xf32>
    %86 = arith.mulf %83, %83 : vector<8x16xf32>
    %87 = arith.mulf %85, %85 : vector<8x16xf32>
    %88 = arith.addf %86, %87 : vector<8x16xf32>
    %89 = math.sqrt %88 : vector<8x16xf32>
    %cst_29 = arith.constant dense<0.000000e+00> : vector<8x16xf32>
    %90 = tpu.matmul %48, %13, %cst_29 {dimension_numbers = #tpu.dot_dimension_numbers<[1], [1], [0], [0], [0, 0, 1, 0], [], []>} : vector<8x128xf32>, vector<16x128xf32>, vector<8x16xf32> -> vector<8x16xf32>
    %cst_30 = arith.constant 5.000000e-01 : f32
    %91 = vector.broadcast %cst_30 : f32 to vector<8x16xf32>
    %92 = arith.mulf %89, %91 : vector<8x16xf32>
    %cst_31 = arith.constant 1.000000e+00 : f32
    %93 = vector.broadcast %cst_31 : f32 to vector<8x16xf32>
    %94 = arith.addf %93, %90 : vector<8x16xf32>
    %95 = arith.mulf %92, %94 : vector<8x16xf32>
    %cst_32 = arith.constant 0.000000e+00 : f32
    %cst_33 = arith.constant 1.000000e+00 : f32
    %96 = vector.broadcast %cst_32 : f32 to vector<8x16xf32>
    %97 = arith.maximumf %96, %95 : vector<8x16xf32>
    %98 = vector.broadcast %cst_33 : f32 to vector<8x16xf32>
    %99 = arith.minimumf %98, %97 : vector<8x16xf32>
    %c0_34 = arith.constant 0 : index
    %c0_35 = arith.constant 0 : index
    %100 = vector.load %arg5[%c0_34, %c0_35] : memref<8x16xf32, #tpu.memory_space<vmem>>, vector<8x16xf32>
    %101 = tpu.iota {dimensions = array<i32: 0>} : vector<8x16xi32>
    %102 = vector.broadcast %36 : i32 to vector<8x16xi32>
    %103 = arith.addi %101, %102 : vector<8x16xi32>
    %104 = tpu.iota {dimensions = array<i32: 1>} : vector<8x16xi32>
    %cst_36 = arith.constant 5.000000e-01 : f32
    %105 = vector.broadcast %cst_36 : f32 to vector<8x16xf32>
    %106 = arith.cmpf ogt, %100, %105 : vector<8x16xf32>
    %cst_37 = arith.constant 1.000000e+00 : f32
    %107 = vector.broadcast %cst_37 : f32 to vector<8x16xf32>
    %108 = arith.subf %107, %99 : vector<8x16xf32>
    %109 = arith.select %106, %108, %99 : vector<8x16xi1>, vector<8x16xf32>
    %110 = arith.cmpi eq, %103, %104 : vector<8x16xi32>
    %cst_38 = arith.constant 0.000000e+00 : f32
    %111 = vector.broadcast %cst_38 : f32 to vector<8x16xf32>
    %112 = arith.select %110, %111, %109 : vector<8x16xi1>, vector<8x16xf32>
    %c0_39 = arith.constant 0 : index
    %c0_40 = arith.constant 0 : index
    %113 = vector.load %arg10[%c0_39, %c0_40] : memref<1x1xf32, #tpu.memory_space<vmem>>, vector<1x1xf32>
    %114 = vector.shape_cast %112 : vector<8x16xf32> to vector<1x8x16xf32>
    %cst_41 = arith.constant dense<0.000000e+00> : vector<1xf32>
    %115 = vector.multi_reduction <add>, %114, %cst_41 [1, 2] : vector<1x8x16xf32> to vector<1xf32>
    %116 = vector.shape_cast %115 : vector<1xf32> to vector<1x1x1xf32>
    %117 = vector.extract %116[0, 0, 0] : f32 from vector<1x1x1xf32>
    %118 = vector.broadcast %117 : f32 to vector<1x1xf32>
    %119 = arith.addf %113, %118 : vector<1x1xf32>
    %c0_42 = arith.constant 0 : index
    %c0_43 = arith.constant 0 : index
    %120 = vector.load %arg10[%c0_42, %c0_43] : memref<1x1xf32, #tpu.memory_space<vmem>>, vector<1x1xf32>
    tpu.vector_store %arg10[%c0_42, %c0_43], %119 {strides = array<i32>} : memref<1x1xf32, #tpu.memory_space<vmem>>, vector<1x1xf32>,
    %c1_i32_44 = arith.constant 1 : i32
    %121 = arith.cmpi eq, %arg0, %c1_i32_44 : i32
    %122 = arith.extui %121 : i1 to i32
    %c0_i32_45 = arith.constant 0 : i32
    %123 = arith.cmpi ne, %122, %c0_i32_45 : i32
    scf.if %123 {
      %c0_46 = arith.constant 0 : index
      %c0_47 = arith.constant 0 : index
      %124 = vector.load %arg2[%c0_46, %c0_47] : memref<16x4xf32, #tpu.memory_space<vmem>>, vector<16x4xf32>
      %c0_48 = arith.constant 0 : index
      %c0_49 = arith.constant 0 : index
      %125 = vector.load %arg3[%c0_48, %c0_49] : memref<16x4xf32, #tpu.memory_space<vmem>>, vector<16x4xf32>
      %c0_50 = arith.constant 0 : index
      %c0_51 = arith.constant 0 : index
      %126 = vector.load %arg4[%c0_50, %c0_51] : memref<1x4xf32, #tpu.memory_space<vmem>>, vector<1x4xf32>
      %cst_52 = arith.constant dense<0xFF800000> : vector<16xf32>
      %127 = vector.multi_reduction <maximumf>, %124, %cst_52 [1] : vector<16x4xf32> to vector<16xf32>
      %128 = vector.shape_cast %127 : vector<16xf32> to vector<16x1xf32>
      %129 = vector.broadcast %128 : vector<16x1xf32> to vector<16x4xf32>
      %130 = arith.subf %124, %129 : vector<16x4xf32>
      %131 = math.exp %130 : vector<16x4xf32>
      %cst_53 = arith.constant dense<0.000000e+00> : vector<16xf32>
      %132 = vector.multi_reduction <add>, %131, %cst_53 [1] : vector<16x4xf32> to vector<16xf32>
      %133 = vector.shape_cast %132 : vector<16xf32> to vector<16x1xf32>
      %134 = math.log %133 : vector<16x1xf32>
      %135 = vector.broadcast %134 : vector<16x1xf32> to vector<16x4xf32>
      %136 = arith.subf %130, %135 : vector<16x4xf32>
      %137 = arith.mulf %125, %136 : vector<16x4xf32>
      %cst_54 = arith.constant dense<0.000000e+00> : vector<16xf32>
      %138 = vector.multi_reduction <add>, %137, %cst_54 [1] : vector<16x4xf32> to vector<16xf32>
      %139 = vector.shape_cast %138 : vector<16xf32> to vector<16x1xf32>
      %cst_55 = arith.constant 0.000000e+00 : f32
      %140 = vector.broadcast %cst_55 : f32 to vector<16x1xf32>
      %141 = arith.subf %140, %139 : vector<16x1xf32>
      %142 = vector.broadcast %126 : vector<1x4xf32> to vector<16x4xf32>
      %143 = arith.mulf %125, %142 : vector<16x4xf32>
      %cst_56 = arith.constant dense<0.000000e+00> : vector<16xf32>
      %144 = vector.multi_reduction <add>, %143, %cst_56 [1] : vector<16x4xf32> to vector<16xf32>
      %145 = vector.shape_cast %144 : vector<16xf32> to vector<16x1xf32>
      %146 = arith.mulf %145, %141 : vector<16x1xf32>
      %147 = vector.shape_cast %146 : vector<16x1xf32> to vector<1x16x1xf32>
      %cst_57 = arith.constant dense<0.000000e+00> : vector<1xf32>
      %148 = vector.multi_reduction <add>, %147, %cst_57 [1, 2] : vector<1x16x1xf32> to vector<1xf32>
      %149 = vector.shape_cast %148 : vector<1xf32> to vector<1x1x1xf32>
      %150 = vector.extract %149[0, 0, 0] : f32 from vector<1x1x1xf32>
      %151 = vector.shape_cast %145 : vector<16x1xf32> to vector<1x16x1xf32>
      %cst_58 = arith.constant dense<0.000000e+00> : vector<1xf32>
      %152 = vector.multi_reduction <add>, %151, %cst_58 [1, 2] : vector<1x16x1xf32> to vector<1xf32>
      %153 = vector.shape_cast %152 : vector<1xf32> to vector<1x1x1xf32>
      %154 = vector.extract %153[0, 0, 0] : f32 from vector<1x1x1xf32>
      %155 = arith.divf %150, %154 : f32
      %c0_59 = arith.constant 0 : index
      %c0_60 = arith.constant 0 : index
      %156 = vector.load %arg10[%c0_59, %c0_60] : memref<1x1xf32, #tpu.memory_space<vmem>>, vector<1x1xf32>
      %cst_61 = arith.constant 2.400000e+02 : f32
      %157 = vector.broadcast %cst_61 : f32 to vector<1x1xf32>
      %158 = arith.divf %156, %157 : vector<1x1xf32>
      %cst_62 = arith.constant 0.699999988 : f32
      %159 = arith.mulf %cst_62, %155 : f32
      %cst_63 = arith.constant 2.000000e-01 : f32
      %160 = vector.broadcast %cst_63 : f32 to vector<1x1xf32>
      %161 = arith.mulf %160, %158 : vector<1x1xf32>
      %162 = vector.broadcast %159 : f32 to vector<1x1xf32>
      %163 = arith.addf %162, %161 : vector<1x1xf32>
      %c0_64 = arith.constant 0 : index
      %c0_65 = arith.constant 0 : index
      %164 = vector.load %arg9[%c0_64, %c0_65] : memref<1x1xf32, #tpu.memory_space<vmem>>, vector<1x1xf32>
      tpu.vector_store %arg9[%c0_64, %c0_65], %163 {strides = array<i32>} : memref<1x1xf32, #tpu.memory_space<vmem>>, vector<1x1xf32>,
    } else {
    }
    return
  }
  func.func @transform_0(%arg0: i32) -> (i32, i32) {
    %c0_i32 = arith.constant 0 : i32
    %c0_i32_0 = arith.constant 0 : i32
    %c0_i32_1 = arith.constant 0 : i32
    return %c0_i32, %c0_i32_0 : i32, i32
  }
  func.func @transform_1(%arg0: i32) -> (i32, i32) {
    %c0_i32 = arith.constant 0 : i32
    %c0_i32_0 = arith.constant 0 : i32
    %c0_i32_1 = arith.constant 0 : i32
    return %c0_i32, %c0_i32_0 : i32, i32
  }
  func.func @transform_2(%arg0: i32) -> (i32, i32) {
    %c0_i32 = arith.constant 0 : i32
    %c0_i32_0 = arith.constant 0 : i32
    %c0_i32_1 = arith.constant 0 : i32
    return %c0_i32, %c0_i32_0 : i32, i32
  }
  func.func @transform_3(%arg0: i32) -> (i32, i32) {
    %c0_i32 = arith.constant 0 : i32
    %c0_i32_0 = arith.constant 0 : i32
    %c0_i32_1 = arith.constant 0 : i32
    return %c0_i32, %c0_i32_0 : i32, i32
  }
  func.func @transform_4(%arg0: i32) -> (i32, i32) {
    %c0_i32 = arith.constant 0 : i32
    %c0_i32_0 = arith.constant 0 : i32
    return %arg0, %c0_i32 : i32, i32
  }
  func.func @transform_5(%arg0: i32) -> (i32, i32) {
    %c0_i32 = arith.constant 0 : i32
    %c0_i32_0 = arith.constant 0 : i32
    %c0_i32_1 = arith.constant 0 : i32
    return %c0_i32, %c0_i32_0 : i32, i32
  }
  func.func @transform_6(%arg0: i32) -> (i32, i32) {
    %c0_i32 = arith.constant 0 : i32
    %c0_i32_0 = arith.constant 0 : i32
    %c0_i32_1 = arith.constant 0 : i32
    return %c0_i32, %c0_i32_0 : i32, i32
  }
  func.func @transform_7(%arg0: i32) -> (i32, i32, i32) {
    %c0_i32 = arith.constant 0 : i32
    %c0_i32_0 = arith.constant 0 : i32
    %c0_i32_1 = arith.constant 0 : i32
    return %arg0, %c0_i32, %c0_i32_0 : i32, i32, i32
  }
  func.func @transform_8(%arg0: i32) -> (i32, i32) {
    %c0_i32 = arith.constant 0 : i32
    %c0_i32_0 = arith.constant 0 : i32
    %c0_i32_1 = arith.constant 0 : i32
    return %c0_i32, %c0_i32_0 : i32, i32
  }
}

</mosaic_0001>

<llo_original>
// kernel: tpu_custom_call.1
$region0: #{tpu_custom_call.1}
  #allocation0 [shape = 'u32[]', space=smem, size = 0x4, offset = 0x4, fixed_abs, tag = 'smem constant byte address 0x4 - core index']
  #allocation1 [shape = 'u32[144,128]{1,0:T(1,128)}', space=vmem, size = 0x12000, scoped, tag = 'internal scratch']
  #allocation2 [shape = 'f32[1,1]{1,0:T(1,128)}', space=vmem, size = 0x200, scoped, tag = 'scratch operand']
  %s0 = inlined_call_operand.vmem [shape: f32[16,128], index: 0, kind: input, shape index: {}]
  %s1 = inlined_call_operand.vmem [shape: f32[16,4], index: 1, kind: input, shape index: {}]
  %s2 = inlined_call_operand.vmem [shape: f32[16,4], index: 2, kind: input, shape index: {}]
  %s3 = inlined_call_operand.vmem [shape: f32[1,4], index: 3, kind: input, shape index: {}]
  %s4 = inlined_call_operand.vmem [shape: f32[16,16], index: 4, kind: input, shape index: {}]
  %s5 = inlined_call_operand.vmem [shape: f32[1,128], index: 5, kind: input, shape index: {}]
  %s6 = inlined_call_operand.hbm [shape: bf16[128,128], index: 6, kind: input, shape index: {}]
  %s7 = inlined_call_operand.hbm [shape: bf16[16,16,128], index: 7, kind: input, shape index: {}]
  %s8 = inlined_call_operand.hbm [shape: f32[1,1], index: 8, kind: output, shape index: {}]
  %s9 = sld [smem:[#allocation0]]
  $region81: #{tpu_custom_call.1} parent=0
    _
  %s11 = ssub.s32 1, %s9
  %s12 = scalar_select 0, %s11, %s9
  $region1: #{tpu_custom_call.1} parent=0
    #allocation3 [shape = 'u8[32768]{0}', space=vmem, size = 0x8000, scoped, tag = 'input window, operand 6, single buffered']
    #allocation4 [shape = 's32[2]{0}', space=sflag, size = 0x8, scoped, tag = 'scoped memory for tpu_custom_call.1']
    #allocation5 [shape = 's32[2]{0}', space=sflag, size = 0x8, scoped, tag = 'scoped memory for tpu_custom_call.1']
    #allocation6 [shape = 'u8[65536]{0}', space=vmem, size = 0x10000, scoped, tag = 'input window, operand 7']
    #allocation7 [shape = 's32[2]{0}', space=sflag, size = 0x8, scoped, tag = 'scoped memory for tpu_custom_call.1']
    #allocation8 [shape = 'u8[512]{0}', space=vmem, size = 0x400, scoped, tag = 'output window, operand 0, single buffered']
    %13 = vsyncpa [#allocation4], 0
    %14 = vsyncpa [#allocation7], 0
    %s15 = scalar_lea.sflag [#allocation7], 1
    %16 = vsyncpa %s15, 0
    %17 = vsyncpa [#allocation5], 0
    loop: start=0, step=1, limit=4
    $region2: #{tpu_custom_call.1} parent=1 // loop_pre_header
      _
    $region3: #{tpu_custom_call.1} parent=1 // loop_header
      %s19 = sphi 0, %s23
      %p20 = scmp.ge.s32.totalorder %s19, 4
      %s27 = sphi 0, %s27
      %s29 = sphi 0, %s27
      %s30 = sphi 0, %s29
      %s44 = sphi 0, %s30
      %s48 = sphi 0, %s48
      %s50 = sphi 0, %s48
      %s51 = sphi 0, %s50
      %s65 = sphi 0, %s51
      %s69 = sphi 0, %s69
      %s71 = sphi 0, %s69
      %s72 = sphi 0, %s71
      %s86 = sphi 0, %s72
      %s90 = sphi 0, %s90
      %s92 = sphi 0, %s90
      %s93 = sphi 0, %s92
      %s107 = sphi 0, %s93
      %s113 = sphi 0, %s115
      %s116 = sphi 0, %s113
      %s117 = sphi 0, %s116
      %s133 = sphi 0, %s117
      %s137 = sphi 0, %s137
      %s139 = sphi 0, %s137
      %s140 = sphi 0, %s139
      %s154 = sphi 0, %s140
      %s158 = sphi 0, %s158
      %s160 = sphi 0, %s158
      %s161 = sphi 0, %s160
      %s175 = sphi 0, %s161
      %s181 = sphi 0, %s183
      %s184 = sphi 0, %s181
      %s185 = sphi 0, %s184
      %s201 = sphi 0, %s185
      %s205 = sphi 0, %s205
      %s207 = sphi 0, %s205
      %s208 = sphi 0, %s207
      %s222 = sphi 0, %s208
    $region4: #{tpu_custom_call.1} parent=1 // loop_header_branch
      %22 = sbr.rel (%p20) target = $region8
    $region5: #{tpu_custom_call.1} parent=1 // loop_body
      %s24 = ssub.s32 %s19, 1
      %s25 = ssub.s32 %s19, 2
      %s26 = sadd.s32 %s19, 1
      %s28 = sadd.s32 %s27, 1
      %p31 = scmp.eq.s32.totalorder %s19, 1
      %p32 = scmp.ne.s32.totalorder %s27, %s29
      %p33 = scmp.eq.s32.totalorder %s19, 0
      %p34 = por %p32, %p33
      %p35 = scmp.ne.s32.totalorder %s27, %s29
      %p36 = scmp.eq.s32.totalorder %s24, 1
      %p37 = por %p35, %p36
      %p38 = scmp.ne.s32.totalorder %s29, %s30
      %p39 = scmp.eq.s32.totalorder %s24, 0
      %p40 = por %p38, %p39
      %p41 = scmp.ne.s32.totalorder %s29, %s30
      %p42 = scmp.eq.s32.totalorder %s25, 1
      %p43 = por %p41, %p42
      %p45 = scmp.ne.s32.totalorder %s30, %s44
      %p46 = scmp.eq.s32.totalorder %s25, 0
      %p47 = por %p45, %p46
      %s49 = sadd.s32 %s48, 1
      %p52 = scmp.eq.s32.totalorder %s19, 1
      %p53 = scmp.ne.s32.totalorder %s48, %s50
      %p54 = scmp.eq.s32.totalorder %s19, 0
      %p55 = por %p53, %p54
      %p56 = scmp.ne.s32.totalorder %s48, %s50
      %p57 = scmp.eq.s32.totalorder %s24, 1
      %p58 = por %p56, %p57
      %p59 = scmp.ne.s32.totalorder %s50, %s51
      %p60 = scmp.eq.s32.totalorder %s24, 0
      %p61 = por %p59, %p60
      %p62 = scmp.ne.s32.totalorder %s50, %s51
      %p63 = scmp.eq.s32.totalorder %s25, 1
      %p64 = por %p62, %p63
      %p66 = scmp.ne.s32.totalorder %s51, %s65
      %p67 = scmp.eq.s32.totalorder %s25, 0
      %p68 = por %p66, %p67
      %s70 = sadd.s32 %s69, 1
      %p73 = scmp.eq.s32.totalorder %s19, 1
      %p74 = scmp.ne.s32.totalorder %s69, %s71
      %p75 = scmp.eq.s32.totalorder %s19, 0
      %p76 = por %p74, %p75
      %p77 = scmp.ne.s32.totalorder %s69, %s71
      %p78 = scmp.eq.s32.totalorder %s24, 1
      %p79 = por %p77, %p78
      %p80 = scmp.ne.s32.totalorder %s71, %s72
      %p81 = scmp.eq.s32.totalorder %s24, 0
      %p82 = por %p80, %p81
      %p83 = scmp.ne.s32.totalorder %s71, %s72
      %p84 = scmp.eq.s32.totalorder %s25, 1
      %p85 = por %p83, %p84
      %p87 = scmp.ne.s32.totalorder %s72, %s86
      %p88 = scmp.eq.s32.totalorder %s25, 0
      %p89 = por %p87, %p88
      %s91 = sadd.s32 %s90, 1
      %p94 = scmp.eq.s32.totalorder %s19, 1
      %p95 = scmp.ne.s32.totalorder %s90, %s92
      %p96 = scmp.eq.s32.totalorder %s19, 0
      %p97 = por %p95, %p96
      %p98 = scmp.ne.s32.totalorder %s90, %s92
      %p99 = scmp.eq.s32.totalorder %s24, 1
      %p100 = por %p98, %p99
      %p101 = scmp.ne.s32.totalorder %s92, %s93
      %p102 = scmp.eq.s32.totalorder %s24, 0
      %p103 = por %p101, %p102
      %p104 = scmp.ne.s32.totalorder %s92, %s93
      %p105 = scmp.eq.s32.totalorder %s25, 1
      %p106 = por %p104, %p105
      %p108 = scmp.ne.s32.totalorder %s93, %s107
      %p109 = scmp.eq.s32.totalorder %s25, 0
      %p110 = por %p108, %p109
      %s111 = ssub.s32 %s19, %s26
      %p112 = scmp.eq.s32.totalorder %s111, 0
      %s114 = sadd.s32 %s113, 1
      %s115 = scalar_select %p112, %s113, %s114
      %p118 = pneg %p112
      %p119 = scmp.eq.s32.totalorder %s19, 1
      %p120 = por %p118, %p119
      %p121 = scmp.ne.s32.totalorder %s113, %s116
      %p122 = scmp.eq.s32.totalorder %s19, 0
      %p123 = por %p121, %p122
      %p124 = scmp.ne.s32.totalorder %s113, %s116
      %p125 = scmp.eq.s32.totalorder %s24, 1
      %p126 = por %p124, %p125
      %p127 = scmp.ne.s32.totalorder %s116, %s117
      %p128 = scmp.eq.s32.totalorder %s24, 0
      %p129 = por %p127, %p128
      %p130 = scmp.ne.s32.totalorder %s116, %s117
      %p131 = scmp.eq.s32.totalorder %s25, 1
      %p132 = por %p130, %p131
      %p134 = scmp.ne.s32.totalorder %s117, %s133
      %p135 = scmp.eq.s32.totalorder %s25, 0
      %p136 = por %p134, %p135
      %s138 = sadd.s32 %s137, 1
      %p141 = scmp.eq.s32.totalorder %s19, 1
      %p142 = scmp.ne.s32.totalorder %s137, %s139
      %p143 = scmp.eq.s32.totalorder %s19, 0
      %p144 = por %p142, %p143
      %p145 = scmp.ne.s32.totalorder %s137, %s139
      %p146 = scmp.eq.s32.totalorder %s24, 1
      %p147 = por %p145, %p146
      %p148 = scmp.ne.s32.totalorder %s139, %s140
      %p149 = scmp.eq.s32.totalorder %s24, 0
      %p150 = por %p148, %p149
      %p151 = scmp.ne.s32.totalorder %s139, %s140
      %p152 = scmp.eq.s32.totalorder %s25, 1
      %p153 = por %p151, %p152
      %p155 = scmp.ne.s32.totalorder %s140, %s154
      %p156 = scmp.eq.s32.totalorder %s25, 0
      %p157 = por %p155, %p156
      %s159 = sadd.s32 %s158, 1
      %p162 = scmp.eq.s32.totalorder %s19, 1
      %p163 = scmp.ne.s32.totalorder %s158, %s160
      %p164 = scmp.eq.s32.totalorder %s19, 0
      %p165 = por %p163, %p164
      %p166 = scmp.ne.s32.totalorder %s158, %s160
      %p167 = scmp.eq.s32.totalorder %s24, 1
      %p168 = por %p166, %p167
      %p169 = scmp.ne.s32.totalorder %s160, %s161
      %p170 = scmp.eq.s32.totalorder %s24, 0
      %p171 = por %p169, %p170
      %p172 = scmp.ne.s32.totalorder %s160, %s161
      %p173 = scmp.eq.s32.totalorder %s25, 1
      %p174 = por %p172, %p173
      %p176 = scmp.ne.s32.totalorder %s161, %s175
      %p177 = scmp.eq.s32.totalorder %s25, 0
      %p178 = por %p176, %p177
      %s179 = ssub.s32 %s19, %s26
      %p180 = scmp.eq.s32.totalorder %s179, 0
      %s182 = sadd.s32 %s181, 1
      %s183 = scalar_select %p180, %s181, %s182
      %p186 = pneg %p180
      %p187 = scmp.eq.s32.totalorder %s19, 1
      %p188 = por %p186, %p187
      %p189 = scmp.ne.s32.totalorder %s181, %s184
      %p190 = scmp.eq.s32.totalorder %s19, 0
      %p191 = por %p189, %p190
      %p192 = scmp.ne.s32.totalorder %s181, %s184
      %p193 = scmp.eq.s32.totalorder %s24, 1
      %p194 = por %p192, %p193
      %p195 = scmp.ne.s32.totalorder %s184, %s185
      %p196 = scmp.eq.s32.totalorder %s24, 0
      %p197 = por %p195, %p196
      %p198 = scmp.ne.s32.totalorder %s184, %s185
      %p199 = scmp.eq.s32.totalorder %s25, 1
      %p200 = por %p198, %p199
      %p202 = scmp.ne.s32.totalorder %s185, %s201
      %p203 = scmp.eq.s32.totalorder %s25, 0
      %p204 = por %p202, %p203
      %s206 = sadd.s32 %s205, 1
      %p209 = scmp.eq.s32.totalorder %s19, 1
      %p210 = scmp.ne.s32.totalorder %s205, %s207
      %p211 = scmp.eq.s32.totalorder %s19, 0
      %p212 = por %p210, %p211
      %p213 = scmp.ne.s32.totalorder %s205, %s207
      %p214 = scmp.eq.s32.totalorder %s24, 1
      %p215 = por %p213, %p214
      %p216 = scmp.ne.s32.totalorder %s207, %s208
      %p217 = scmp.eq.s32.totalorder %s24, 0
      %p218 = por %p216, %p217
      %p219 = scmp.ne.s32.totalorder %s207, %s208
      %p220 = scmp.eq.s32.totalorder %s25, 1
      %p221 = por %p219, %p220
      %p223 = scmp.ne.s32.totalorder %s208, %s222
      %p224 = scmp.eq.s32.totalorder %s25, 0
      %p225 = por %p223, %p224
      %p226 = scmp.le.s32.totalorder 1, %s19
      %p227 = scmp.lt.s32.totalorder %s19, 3
      %p228 = pnand %p226, %p227
      %p229 = pneg %p228
      // Predicated region
      $region9: #{tpu_custom_call.1} parent=5 // pred_check
        _
      $region10: #{tpu_custom_call.1} parent=5 // pred_check_branch
        %231 = sbr.rel (%p228) target = $region12
      $region11: #{tpu_custom_call.1} parent=5 // pred_region
        %s232 = ssub.s32 %s19, 1
        // Predicated region
        $region13: #{tpu_custom_call.1} parent=11 // pred_check
          %p233 = pneg %p40
        $region14: #{tpu_custom_call.1} parent=11 // pred_check_branch
          %235 = sbr.rel (%p233) target = $region16
        $region15: #{tpu_custom_call.1} parent=11 // pred_region
          _
        $region16: #{tpu_custom_call.1} parent=11 // pred_fallthru
          _
        // Predicated region
        $region17: #{tpu_custom_call.1} parent=11 // pred_check
          %p236 = pneg %p61
        $region18: #{tpu_custom_call.1} parent=11 // pred_check_branch
          %238 = sbr.rel (%p236) target = $region20
        $region19: #{tpu_custom_call.1} parent=11 // pred_region
          _
        $region20: #{tpu_custom_call.1} parent=11 // pred_fallthru
          _
        // Predicated region
        $region21: #{tpu_custom_call.1} parent=11 // pred_check
          %p239 = pneg %p82
        $region22: #{tpu_custom_call.1} parent=11 // pred_check_branch
          %241 = sbr.rel (%p239) target = $region24
        $region23: #{tpu_custom_call.1} parent=11 // pred_region
          _
        $region24: #{tpu_custom_call.1} parent=11 // pred_fallthru
          _
        // Predicated region
        $region25: #{tpu_custom_call.1} parent=11 // pred_check
          %p242 = pneg %p103
        $region26: #{tpu_custom_call.1} parent=11 // pred_check_branch
          %244 = sbr.rel (%p242) target = $region28
        $region27: #{tpu_custom_call.1} parent=11 // pred_region
          _
        $region28: #{tpu_custom_call.1} parent=11 // pred_fallthru
          _
        // Predicated region
        $region29: #{tpu_custom_call.1} parent=11 // pred_check
          %p245 = pneg %p150
        $region30: #{tpu_custom_call.1} parent=11 // pred_check_branch
          %247 = sbr.rel (%p245) target = $region32
        $region31: #{tpu_custom_call.1} parent=11 // pred_region
          _
        $region32: #{tpu_custom_call.1} parent=11 // pred_fallthru
          _
        // Predicated region
        $region33: #{tpu_custom_call.1} parent=11 // pred_check
          %p248 = pneg %p171
        $region34: #{tpu_custom_call.1} parent=11 // pred_check_branch
          %250 = sbr.rel (%p248) target = $region36
        $region35: #{tpu_custom_call.1} parent=11 // pred_region
          %s252 = ssub.s32 1024, 1024
          %253 = vsyncadd [#allocation4], %s252
          %s254 = sshll.u32 [#allocation3], 4
          %s255 = int_to_ptr.vmem [resolvable:$true] %s254
          %260 = dma.hbm_to_vmem [thread:$0]  %s6, 1024, %s255, [#allocation4], 64, 64, 4
        $region36: #{tpu_custom_call.1} parent=11 // pred_fallthru
          _
      $region12: #{tpu_custom_call.1} parent=5 // pred_fallthru
        _
      %p261 = scmp.lt.s32.totalorder %s19, 2
      // Predicated region
      $region37: #{tpu_custom_call.1} parent=5 // pred_check
        %p262 = pneg %p261
      $region38: #{tpu_custom_call.1} parent=5 // pred_check_branch
        %264 = sbr.rel (%p262) target = $region40
      $region39: #{tpu_custom_call.1} parent=5 // pred_region
        // Predicated region
        $region41: #{tpu_custom_call.1} parent=39 // pred_check
          %p265 = pneg %p123
        $region42: #{tpu_custom_call.1} parent=39 // pred_check_branch
          %267 = sbr.rel (%p265) target = $region44
        $region43: #{tpu_custom_call.1} parent=39 // pred_region
          %p268 = scmp.lt.s32.totalorder %s19, 1
          %s269 = scalar_select %p268, %s19, 1
          %s270 = smul.addr %s269, 8
          %s271 = scalar_lea.vmem %s4, %s270
        $region44: #{tpu_custom_call.1} parent=39 // pred_fallthru
          _
        // Predicated region
        $region45: #{tpu_custom_call.1} parent=39 // pred_check
          %p272 = pneg %p191
        $region46: #{tpu_custom_call.1} parent=39 // pred_check_branch
          %274 = sbr.rel (%p272) target = $region48
        $region47: #{tpu_custom_call.1} parent=39 // pred_region
          %s275 = sand.u32 %s181, 1
          %s276 = scalar_lea.sflag [#allocation7], %s275
          %s277 = sand.u32 %s181, 1
          %s278 = smul.addr %s277, 64
          %s279 = scalar_lea.vmem [#allocation6], %s278
          %s280 = smul.u32 8, %s19
          %s282 = ssub.s32 1024, 1024
          %283 = vsyncadd %s276, %s282
          %s284 = smul.addr %s280, 2
          %s285 = smul.addr %s284, 64
          %s286 = scalar_lea.hbm %s7, %s285
          %s287 = sshll.u32 %s279, 4
          %s288 = int_to_ptr.vmem [resolvable:$true] %s287
          %293 = dma.hbm_to_vmem [thread:$0]  %s286, 1024, %s288, %s276, 64, 64, 4
        $region48: #{tpu_custom_call.1} parent=39 // pred_fallthru
          _
      $region40: #{tpu_custom_call.1} parent=5 // pred_fallthru
        _
      %p294 = scmp.le.s32.totalorder 1, %s19
      %p295 = scmp.lt.s32.totalorder %s19, 3
      %p296 = pnand %p294, %p295
      %p297 = pneg %p296
      // Predicated region
      $region49: #{tpu_custom_call.1} parent=5 // pred_check
        _
      $region50: #{tpu_custom_call.1} parent=5 // pred_check_branch
        %299 = sbr.rel (%p296) target = $region52
      $region51: #{tpu_custom_call.1} parent=5 // pred_region
        %s300 = ssub.s32 %s19, 1
        // Predicated region
        $region53: #{tpu_custom_call.1} parent=51 // pred_check
          %p301 = pneg %p171
        $region54: #{tpu_custom_call.1} parent=51 // pred_check_branch
          %303 = sbr.rel (%p301) target = $region56
        $region55: #{tpu_custom_call.1} parent=51 // pred_region
          %304 = dma.done [#allocation4], 1024
        $region56: #{tpu_custom_call.1} parent=51 // pred_fallthru
          _
        %s305 = sand.u32 %s184, 1
        %s306 = scalar_lea.sflag [#allocation7], %s305
        %s307 = sand.u32 %s184, 1
        %s308 = smul.addr %s307, 64
        %s309 = scalar_lea.vmem [#allocation6], %s308
        // Predicated region
        $region57: #{tpu_custom_call.1} parent=51 // pred_check
          %p310 = pneg %p197
        $region58: #{tpu_custom_call.1} parent=51 // pred_check_branch
          %312 = sbr.rel (%p310) target = $region60
        $region59: #{tpu_custom_call.1} parent=51 // pred_region
          %313 = dma.done %s306, 1024
        $region60: #{tpu_custom_call.1} parent=51 // pred_fallthru
          _
        %p314 = pneg %p40
        %p315 = pneg %p37
        %p316 = pneg %p61
        %p317 = pneg %p58
        %p318 = pneg %p82
        %p319 = pneg %p79
        %p320 = pneg %p103
        %p321 = pneg %p100
        %p322 = scmp.lt.s32.totalorder %s24, 1
        %s323 = scalar_select %p322, %s24, 1
        %s324 = smul.addr %s323, 8
        %s325 = scalar_lea.vmem %s4, %s324
        %p326 = pneg %p129
        %p327 = pneg %p126
        %p328 = pneg %p150
        %p329 = pneg %p147
        %p330 = pneg %p171
        %p331 = pneg %p168
        %s332 = sand.u32 %s184, 1
        %s333 = scalar_lea.sflag [#allocation7], %s332
        %s334 = sand.u32 %s184, 1
        %s335 = smul.addr %s334, 64
        %s336 = scalar_lea.vmem [#allocation6], %s335
        %p337 = pneg %p197
        %p338 = pneg %p194
        %p339 = pneg %p218
        %p340 = pneg %p215
        %p341 = scmp.lt.s32.totalorder %s24, 1
        %s342 = scalar_select %p341, %s24, 1
        %s343 = smul.addr %s342, 8
        %s344 = scalar_lea.vmem %s4, %s343
        %s345 = smul.u32 8, %s24
        %p347 = scmp.eq.s32.totalorder %s24, 0
        // Predicated region
        $region61: #{tpu_custom_call.1} parent=51 // pred_check
          %p348 = pneg %p347
        $region62: #{tpu_custom_call.1} parent=51 // pred_check_branch
          %350 = sbr.rel (%p348) target = $region64
        $region63: #{tpu_custom_call.1} parent=51 // pred_region
          %vm351 = vcmask 0
          %352 = vst.msk [vmem:[#allocation2] sm:$0x1] %vm351, 0.0
        $region64: #{tpu_custom_call.1} parent=51 // pred_fallthru
          _
        %v353 = vld [vmem:[%s0] sm:$0xff]
        %v354 = vld [vmem:[%s0 + $0x8] sm:$0xff]
        %v355 = vmul.f32 %v353, %v353
        %v356 = vmul.f32 %v354, %v354
        %357 = vadd.xlane.f32.xlu0 %v355
        %v358 = vpop.xlane.xlu0 %357
        %359 = vadd.xlane.f32.xlu0 %v356
        %v360 = vpop.xlane.xlu0 %359
        %vm361 = vcmp.gt.f32.partialorder %v358, 1e-16
        %vm362 = vcmp.gt.f32.partialorder %v360, 1e-16
        %v363 = vrsqrt.pop %v358
        %v364 = vrsqrt.pop %v360
        %v365 = vsel %vm361, %v363, 1e+08
        %v366 = vsel %vm362, %v364, 1e+08
        %v367 = vmul.f32 %v353, %v365
        %v368 = vmul.f32 %v354, %v366
        %369 = vrot.lane.b32.xlu0 %v367, 127
        %v370 = vpop.permute.xlu0 %369
        %371 = vrot.lane.b32.xlu0 %v368, 127
        %v372 = vpop.permute.xlu0 %371
        %373 = vrot.lane.b32.xlu0 %v367, 1
        %v374 = vpop.permute.xlu0 %373
        %375 = vrot.lane.b32.xlu0 %v368, 1
        %v376 = vpop.permute.xlu0 %375
        %v377 = vlaneseq
        %v378 = vand.u32 %v377, 127
        %v379 = vsub.f32 %v370, %v374
        %v380 = vsub.f32 %v372, %v376
        %v381 = vmul.f32 %v379, 0.5
        %v382 = vmul.f32 %v380, 0.5
        %vm383 = vcmp.eq.s32.totalorder %v378, 0
        %v384 = vsub.f32 %v370, %v367
        %v385 = vsub.f32 %v372, %v368
        %v386 = vsel %vm383, %v384, %v381
        %v387 = vsel %vm383, %v385, %v382
        %vm388 = vcmp.eq.s32.totalorder %v378, 127
        %v389 = vsub.f32 %v367, %v374
        %v390 = vsub.f32 %v368, %v376
        %v391 = vsel %vm388, %v389, %v386
        %v392 = vsel %vm388, %v390, %v387
        %v393 = vmul.f32 %v391, 0.5
        %v394 = vmul.f32 %v392, 0.5
        %v395 = vmul.f32 %v391, %v367
        %v396 = vmul.f32 %v392, %v368
        %397 = vadd.xlane.f32.xlu0 %v395
        %v398 = vpop.xlane.xlu0 %397
        %399 = vadd.xlane.f32.xlu0 %v396
        %v400 = vpop.xlane.xlu0 %399
        %v401 = vmul.f32 %v393, %v398
        %v402 = vmul.f32 %v394, %v400
        %s403 = smul.u32 %s24, 8
        %s404 = scalar_lea.vmem %s0, %s403
        %v405 = vld [vmem:[%s404] sm:$0xff]
        %v406 = vmul.f32 %v405, %v405
        %407 = vadd.xlane.f32.xlu0 %v406
        %v408 = vpop.xlane.xlu0 %407
        %vm409 = vcmp.gt.f32.partialorder %v408, 1e-16
        %v410 = vrsqrt.pop %v408
        %v411 = vsel %vm409, %v410, 1e+08
        %v412 = vmul.f32 %v405, %v411
        %v413 = vld [vmem:[%s309] sm:$0xf]
        %v414 = vld [vmem:[%s309 + $0x4] sm:$0xf]
        %v415 = vld [vmem:[%s309 + $0x8] sm:$0xf]
        %v416 = vld [vmem:[%s309 + $0xc] sm:$0xf]
        %v417 = vld [vmem:[%s309 + $0x10] sm:$0xf]
        %v418 = vld [vmem:[%s309 + $0x14] sm:$0xf]
        %v419 = vld [vmem:[%s309 + $0x18] sm:$0xf]
        %v420 = vld [vmem:[%s309 + $0x1c] sm:$0xf]
        %v421 = vld [vmem:[%s309 + $0x20] sm:$0xf]
        %v422 = vld [vmem:[%s309 + $0x24] sm:$0xf]
        %v423 = vld [vmem:[%s309 + $0x28] sm:$0xf]
        %v424 = vld [vmem:[%s309 + $0x2c] sm:$0xf]
        %v425 = vld [vmem:[%s309 + $0x30] sm:$0xf]
        %v426 = vld [vmem:[%s309 + $0x34] sm:$0xf]
        %v427 = vld [vmem:[%s309 + $0x38] sm:$0xf]
        %v428 = vld [vmem:[%s309 + $0x3c] sm:$0xf]
        %v429 = vld [vmem:[#allocation3] sm:$0xf]
        %v430 = vld [vmem:[#allocation3 + $0x4] sm:$0xf]
        %v431 = vld [vmem:[#allocation3 + $0x8] sm:$0xf]
        %v432 = vld [vmem:[#allocation3 + $0xc] sm:$0xf]
        %v433 = vld [vmem:[#allocation3 + $0x10] sm:$0xf]
        %v434 = vld [vmem:[#allocation3 + $0x14] sm:$0xf]
        %v435 = vld [vmem:[#allocation3 + $0x18] sm:$0xf]
        %v436 = vld [vmem:[#allocation3 + $0x1c] sm:$0xf]
        %v437 = vld [vmem:[#allocation3 + $0x20] sm:$0xf]
        %v438 = vld [vmem:[#allocation3 + $0x24] sm:$0xf]
        %v439 = vld [vmem:[#allocation3 + $0x28] sm:$0xf]
        %v440 = vld [vmem:[#allocation3 + $0x2c] sm:$0xf]
        %v441 = vld [vmem:[#allocation3 + $0x30] sm:$0xf]
        %v442 = vld [vmem:[#allocation3 + $0x34] sm:$0xf]
        %v443 = vld [vmem:[#allocation3 + $0x38] sm:$0xf]
        %v444 = vld [vmem:[#allocation3 + $0x3c] sm:$0xf]
        %v461 = vunpack.c.l.b16 %v413
        %v462 = vunpack.c.l.b16 %v414
        %v463 = vunpack.c.l.b16 %v415
        %v464 = vunpack.c.l.b16 %v416
        %v465 = vunpack.c.l.b16 %v417
        %v466 = vunpack.c.l.b16 %v418
        %v467 = vunpack.c.l.b16 %v419
        %v468 = vunpack.c.l.b16 %v420
        %v469 = vunpack.c.l.b16 %v421
        %v470 = vunpack.c.l.b16 %v422
        %v471 = vunpack.c.l.b16 %v423
        %v472 = vunpack.c.l.b16 %v424
        %v473 = vunpack.c.l.b16 %v425
        %v474 = vunpack.c.l.b16 %v426
        %v475 = vunpack.c.l.b16 %v427
        %v476 = vunpack.c.l.b16 %v428
        %v477 = vpack.c.b16 %v462, %v461
        %v478 = vpack.c.b16 %v464, %v463
        %v479 = vpack.c.b16 %v466, %v465
        %v480 = vpack.c.b16 %v468, %v467
        %v481 = vpack.c.b16 %v470, %v469
        %v482 = vpack.c.b16 %v472, %v471
        %v483 = vpack.c.b16 %v474, %v473
        %v484 = vpack.c.b16 %v476, %v475
        %v509 = vunpack.c.l.b16 %v429
        %v510 = vunpack.c.l.b16 %v430
        %v511 = vunpack.c.l.b16 %v431
        %v512 = vunpack.c.l.b16 %v432
        %v513 = vunpack.c.l.b16 %v433
        %v514 = vunpack.c.l.b16 %v434
        %v515 = vunpack.c.l.b16 %v435
        %v516 = vunpack.c.l.b16 %v436
        %v517 = vunpack.c.l.b16 %v437
        %v518 = vunpack.c.l.b16 %v438
        %v519 = vunpack.c.l.b16 %v439
        %v520 = vunpack.c.l.b16 %v440
        %v521 = vunpack.c.l.b16 %v441
        %v522 = vunpack.c.l.b16 %v442
        %v523 = vunpack.c.l.b16 %v443
        %v524 = vunpack.c.l.b16 %v444
        %v525 = vpack.c.b16 %v510, %v509
        %v526 = vpack.c.b16 %v512, %v511
        %v527 = vpack.c.b16 %v514, %v513
        %v528 = vpack.c.b16 %v516, %v515
        %v529 = vpack.c.b16 %v518, %v517
        %v530 = vpack.c.b16 %v520, %v519
        %v531 = vpack.c.b16 %v522, %v521
        %v532 = vpack.c.b16 %v524, %v523
        %541 = vmatprep.subr.bf16.mxu0 0
        %542 = vmatpush1.bf16.msra.mxu0 %v525
        %543 = vmatprep.subr.bf16.mxu0 0
        %544 = vmatpush1.bf16.msra.mxu0 %v526
        %545 = vmatprep.subr.bf16.mxu0 0
        %546 = vmatpush1.bf16.msra.mxu0 %v527
        %547 = vmatprep.subr.bf16.mxu0 0
        %548 = vmatpush1.bf16.msra.mxu0 %v528
        %549 = vmatprep.subr.bf16.mxu0 0
        %550 = vmatpush1.bf16.msra.mxu0 %v529
        %551 = vmatprep.subr.bf16.mxu0 0
        %552 = vmatpush1.bf16.msra.mxu0 %v530
        %553 = vmatprep.subr.bf16.mxu0 0
        %554 = vmatpush1.bf16.msra.mxu0 %v531
        %555 = vmatprep.subr.bf16.mxu0 0
        %556 = vmatpush1.bf16.msra.mxu0 %v532
        %557 = vmatprep.subr.bf16.mxu0 0
        %558 = vmatpush1.bf16.msra.mxu0 0
        %559 = vmatprep.subr.bf16.mxu0 0
        %560 = vmatpush1.bf16.msra.mxu0 0
        %561 = vmatprep.subr.bf16.mxu0 0
        %562 = vmatpush1.bf16.msra.mxu0 0
        %563 = vmatprep.subr.bf16.mxu0 0
        %564 = vmatpush1.bf16.msra.mxu0 0
        %565 = vmatprep.subr.bf16.mxu0 0
        %566 = vmatpush1.bf16.msra.mxu0 0
        %567 = vmatprep.subr.bf16.mxu0 0
        %568 = vmatpush1.bf16.msra.mxu0 0
        %569 = vmatprep.subr.bf16.mxu0 0
        %570 = vmatpush1.bf16.msra.mxu0 0
        %571 = vmatprep.subr.bf16.mxu0 0
        %572 = vmatpush1.bf16.msra.mxu0 0
        %573 = vmatprep.mubr.bf16.mxu0 0
        %574 = vmatmul.mubr.bf16.gmra.mrb[0].mxu0 %v477
        %v575 = vpop.f32.mrb[0].mxu0
        %v576 = vadd.f32 0.0, %v575
        %v577 = vpop.f32.mrb[0].mxu0
        %v578 = vpop.f32.mrb[0].mxu0
        %v579 = vadd.f32 0.0, %v578
        %v580 = vpop.f32.mrb[0].mxu0
        %581 = vmatprep.mubr.bf16.mxu0 0
        %582 = vmatmul.mubr.bf16.gmra.mrb[0].mxu0 %v478
        %v583 = vpop.f32.mrb[0].mxu0
        %v584 = vadd.f32 0.0, %v583
        %v585 = vpop.f32.mrb[0].mxu0
        %v586 = vpop.f32.mrb[0].mxu0
        %v587 = vadd.f32 0.0, %v586
        %v588 = vpop.f32.mrb[0].mxu0
        %589 = vmatprep.mubr.bf16.mxu0 0
        %590 = vmatmul.mubr.bf16.gmra.mrb[0].mxu0 %v479
        %v591 = vpop.f32.mrb[0].mxu0
        %v592 = vadd.f32 0.0, %v591
        %v593 = vpop.f32.mrb[0].mxu0
        %v594 = vpop.f32.mrb[0].mxu0
        %v595 = vadd.f32 0.0, %v594
        %v596 = vpop.f32.mrb[0].mxu0
        %597 = vmatprep.mubr.bf16.mxu0 0
        %598 = vmatmul.mubr.bf16.gmra.mrb[0].mxu0 %v480
        %v599 = vpop.f32.mrb[0].mxu0
        %v600 = vadd.f32 0.0, %v599
        %v601 = vpop.f32.mrb[0].mxu0
        %v602 = vpop.f32.mrb[0].mxu0
        %v603 = vadd.f32 0.0, %v602
        %v604 = vpop.f32.mrb[0].mxu0
        %605 = vmatprep.mubr.bf16.mxu0 0
        %606 = vmatmul.mubr.bf16.gmra.mrb[0].mxu0 %v481
        %v607 = vpop.f32.mrb[0].mxu0
        %v608 = vadd.f32 0.0, %v607
        %v609 = vpop.f32.mrb[0].mxu0
        %v610 = vpop.f32.mrb[0].mxu0
        %v611 = vadd.f32 0.0, %v610
        %v612 = vpop.f32.mrb[0].mxu0
        %613 = vmatprep.mubr.bf16.mxu0 0
        %614 = vmatmul.mubr.bf16.gmra.mrb[0].mxu0 %v482
        %v615 = vpop.f32.mrb[0].mxu0
        %v616 = vadd.f32 0.0, %v615
        %v617 = vpop.f32.mrb[0].mxu0
        %v618 = vpop.f32.mrb[0].mxu0
        %v619 = vadd.f32 0.0, %v618
        %v620 = vpop.f32.mrb[0].mxu0
        %621 = vmatprep.mubr.bf16.mxu0 0
        %622 = vmatmul.mubr.bf16.gmra.mrb[0].mxu0 %v483
        %v623 = vpop.f32.mrb[0].mxu0
        %v624 = vadd.f32 0.0, %v623
        %v625 = vpop.f32.mrb[0].mxu0
        %v626 = vpop.f32.mrb[0].mxu0
        %v627 = vadd.f32 0.0, %v626
        %v628 = vpop.f32.mrb[0].mxu0
        %629 = vmatprep.mubr.bf16.mxu0 0
        %630 = vmatmul.mubr.bf16.gmra.mrb[0].mxu0 %v484
        %v631 = vpop.f32.mrb[0].mxu0
        %v632 = vadd.f32 0.0, %v631
        %v633 = vpop.f32.mrb[0].mxu0
        %v634 = vpop.f32.mrb[0].mxu0
        %v635 = vadd.f32 0.0, %v634
        %v636 = vpop.f32.mrb[0].mxu0
        %637 = vdwg.mxu0
        %v638 = vmul.f32 %v576, 0.1
        %v639 = vmul.f32 %v579, 0.1
        %v640 = vmul.f32 %v584, 0.1
        %v641 = vmul.f32 %v587, 0.1
        %v642 = vmul.f32 %v592, 0.1
        %v643 = vmul.f32 %v595, 0.1
        %v644 = vmul.f32 %v600, 0.1
        %v645 = vmul.f32 %v603, 0.1
        %v646 = vmul.f32 %v608, 0.1
        %v647 = vmul.f32 %v611, 0.1
        %v648 = vmul.f32 %v616, 0.1
        %v649 = vmul.f32 %v619, 0.1
        %v650 = vmul.f32 %v624, 0.1
        %v651 = vmul.f32 %v627, 0.1
        %v652 = vmul.f32 %v632, 0.1
        %v653 = vmul.f32 %v635, 0.1
        %v654 = vadd.f32 %v367, %v401
        %v655 = vadd.f32 %v368, %v402
        %v656 = vadd.f32 %v654, %v638
        %v657 = vadd.f32 %v655, %v639
        %v658 = vadd.f32 %v654, %v640
        %v659 = vadd.f32 %v655, %v641
        %v660 = vadd.f32 %v654, %v642
        %v661 = vadd.f32 %v655, %v643
        %v662 = vadd.f32 %v654, %v644
        %v663 = vadd.f32 %v655, %v645
        %v664 = vadd.f32 %v654, %v646
        %v665 = vadd.f32 %v655, %v647
        %v666 = vadd.f32 %v654, %v648
        %v667 = vadd.f32 %v655, %v649
        %v668 = vadd.f32 %v654, %v650
        %v669 = vadd.f32 %v655, %v651
        %v670 = vadd.f32 %v654, %v652
        %v671 = vadd.f32 %v655, %v653
        %v672 = vmul.f32 %v656, %v656
        %v673 = vmul.f32 %v657, %v657
        %v674 = vmul.f32 %v658, %v658
        %v675 = vmul.f32 %v659, %v659
        %v676 = vmul.f32 %v660, %v660
        %v677 = vmul.f32 %v661, %v661
        %v678 = vmul.f32 %v662, %v662
        %v679 = vmul.f32 %v663, %v663
        %v680 = vmul.f32 %v664, %v664
        %v681 = vmul.f32 %v665, %v665
        %v682 = vmul.f32 %v666, %v666
        %v683 = vmul.f32 %v667, %v667
        %v684 = vmul.f32 %v668, %v668
        %v685 = vmul.f32 %v669, %v669
        %v686 = vmul.f32 %v670, %v670
        %v687 = vmul.f32 %v671, %v671
        %688 = vadd.xlane.f32.xlu0 %v672
        %v689 = vpop.xlane.xlu0 %688
        %690 = vadd.xlane.f32.xlu0 %v673
        %v691 = vpop.xlane.xlu0 %690
        %692 = vadd.xlane.f32.xlu0 %v674
        %v693 = vpop.xlane.xlu0 %692
        %694 = vadd.xlane.f32.xlu0 %v675
        %v695 = vpop.xlane.xlu0 %694
        %696 = vadd.xlane.f32.xlu0 %v676
        %v697 = vpop.xlane.xlu0 %696
        %698 = vadd.xlane.f32.xlu0 %v677
        %v699 = vpop.xlane.xlu0 %698
        %700 = vadd.xlane.f32.xlu0 %v678
        %v701 = vpop.xlane.xlu0 %700
        %702 = vadd.xlane.f32.xlu0 %v679
        %v703 = vpop.xlane.xlu0 %702
        %704 = vadd.xlane.f32.xlu0 %v680
        %v705 = vpop.xlane.xlu0 %704
        %706 = vadd.xlane.f32.xlu0 %v681
        %v707 = vpop.xlane.xlu0 %706
        %708 = vadd.xlane.f32.xlu0 %v682
        %v709 = vpop.xlane.xlu0 %708
        %710 = vadd.xlane.f32.xlu0 %v683
        %v711 = vpop.xlane.xlu0 %710
        %712 = vadd.xlane.f32.xlu0 %v684
        %v713 = vpop.xlane.xlu0 %712
        %714 = vadd.xlane.f32.xlu0 %v685
        %v715 = vpop.xlane.xlu0 %714
        %716 = vadd.xlane.f32.xlu0 %v686
        %v717 = vpop.xlane.xlu0 %716
        %718 = vadd.xlane.f32.xlu0 %v687
        %v719 = vpop.xlane.xlu0 %718
        %vm720 = vcmp.gt.f32.partialorder %v689, 1e-16
        %vm721 = vcmp.gt.f32.partialorder %v691, 1e-16
        %vm722 = vcmp.gt.f32.partialorder %v693, 1e-16
        %vm723 = vcmp.gt.f32.partialorder %v695, 1e-16
        %vm724 = vcmp.gt.f32.partialorder %v697, 1e-16
        %vm725 = vcmp.gt.f32.partialorder %v699, 1e-16
        %vm726 = vcmp.gt.f32.partialorder %v701, 1e-16
        %vm727 = vcmp.gt.f32.partialorder %v703, 1e-16
        %vm728 = vcmp.gt.f32.partialorder %v705, 1e-16
        %vm729 = vcmp.gt.f32.partialorder %v707, 1e-16
        %vm730 = vcmp.gt.f32.partialorder %v709, 1e-16
        %vm731 = vcmp.gt.f32.partialorder %v711, 1e-16
        %vm732 = vcmp.gt.f32.partialorder %v713, 1e-16
        %vm733 = vcmp.gt.f32.partialorder %v715, 1e-16
        %vm734 = vcmp.gt.f32.partialorder %v717, 1e-16
        %vm735 = vcmp.gt.f32.partialorder %v719, 1e-16
        %v736 = vrsqrt.pop %v689
        %v737 = vrsqrt.pop %v691
        %v738 = vrsqrt.pop %v693
        %v739 = vrsqrt.pop %v695
        %v740 = vrsqrt.pop %v697
        %v741 = vrsqrt.pop %v699
        %v742 = vrsqrt.pop %v701
        %v743 = vrsqrt.pop %v703
        %v744 = vrsqrt.pop %v705
        %v745 = vrsqrt.pop %v707
        %v746 = vrsqrt.pop %v709
        %v747 = vrsqrt.pop %v711
        %v748 = vrsqrt.pop %v713
        %v749 = vrsqrt.pop %v715
        %v750 = vrsqrt.pop %v717
        %v751 = vrsqrt.pop %v719
        %v752 = vsel %vm720, %v736, 1e+08
        %v753 = vsel %vm721, %v737, 1e+08
        %v754 = vsel %vm722, %v738, 1e+08
        %v755 = vsel %vm723, %v739, 1e+08
        %v756 = vsel %vm724, %v740, 1e+08
        %v757 = vsel %vm725, %v741, 1e+08
        %v758 = vsel %vm726, %v742, 1e+08
        %v759 = vsel %vm727, %v743, 1e+08
        %v760 = vsel %vm728, %v744, 1e+08
        %v761 = vsel %vm729, %v745, 1e+08
        %v762 = vsel %vm730, %v746, 1e+08
        %v763 = vsel %vm731, %v747, 1e+08
        %v764 = vsel %vm732, %v748, 1e+08
        %v765 = vsel %vm733, %v749, 1e+08
        %v766 = vsel %vm734, %v750, 1e+08
        %v767 = vsel %vm735, %v751, 1e+08
        %v768 = vmul.f32 %v656, %v752
        %v769 = vmul.f32 %v657, %v753
        %v770 = vmul.f32 %v658, %v754
        %v771 = vmul.f32 %v659, %v755
        %v772 = vmul.f32 %v660, %v756
        %v773 = vmul.f32 %v661, %v757
        %v774 = vmul.f32 %v662, %v758
        %v775 = vmul.f32 %v663, %v759
        %v776 = vmul.f32 %v664, %v760
        %v777 = vmul.f32 %v665, %v761
        %v778 = vmul.f32 %v666, %v762
        %v779 = vmul.f32 %v667, %v763
        %v780 = vmul.f32 %v668, %v764
        %v781 = vmul.f32 %v669, %v765
        %v782 = vmul.f32 %v670, %v766
        %v783 = vmul.f32 %v671, %v767
        %v784 = vld [vmem:[%s5] sm:$0x1]
        %v785 = vmax.f32 %v784, 0.0
        %v786 = vmul.f32 %v785, 3.1415927
        %v788 = vcombine.high %v412, %v412
        %v790 = vunpack.c.l.s4 1966171168
        %v791 = vunpack.c.0.s8 %v790
        %v792 = vlaneseq
        %v793 = vshrl.u32 %v792, 7
        %v794 = vsub.s32 %v791, %v793
        %v795 = vrot.slane %v412, %v794
        %v797 = vunpack.c.l.s4 1966171168
        %v798 = vunpack.c.0.s8 %v797
        %v799 = vlaneseq
        %v800 = vshrl.u32 %v799, 7
        %v801 = vsub.s32 %v798, %v800
        %v802 = vrot.slane %v788, %v801
        %v803 = vcombine.high %v795, %v795
        %v804 = vcombine.high %v802, %v802
        %v806 = vunpack.c.l.s4 1966171168
        %v807 = vunpack.c.0.s8 %v806
        %v808 = vlaneseq
        %v809 = vshrl.u32 %v808, 7
        %v810 = vsub.s32 %v807, %v809
        %v811 = vrot.slane %v795, %v810
        %v813 = vunpack.c.l.s4 1966171168
        %v814 = vunpack.c.0.s8 %v813
        %v815 = vlaneseq
        %v816 = vshrl.u32 %v815, 7
        %v817 = vsub.s32 %v814, %v816
        %v818 = vrot.slane %v802, %v817
        %v820 = vunpack.c.l.s4 1966171168
        %v821 = vunpack.c.0.s8 %v820
        %v822 = vlaneseq
        %v823 = vshrl.u32 %v822, 7
        %v824 = vsub.s32 %v821, %v823
        %v825 = vrot.slane %v803, %v824
        %v827 = vunpack.c.l.s4 1966171168
        %v828 = vunpack.c.0.s8 %v827
        %v829 = vlaneseq
        %v830 = vshrl.u32 %v829, 7
        %v831 = vsub.s32 %v828, %v830
        %v832 = vrot.slane %v804, %v831
        %v833 = vcombine.high %v811, %v811
        %v834 = vcombine.high %v818, %v818
        %v835 = vcombine.high %v825, %v825
        %v836 = vcombine.high %v832, %v832
        %v837 = vlaneseq
        %v838 = vshrl.u32 %v837, 7
        %v839 = vsub.s32 0, %v838
        %v840 = vrot.slane %v811, %v839
        %v841 = vlaneseq
        %v842 = vshrl.u32 %v841, 7
        %v843 = vsub.s32 0, %v842
        %v844 = vrot.slane %v825, %v843
        %v845 = vlaneseq
        %v846 = vshrl.u32 %v845, 7
        %v847 = vsub.s32 0, %v846
        %v848 = vrot.slane %v833, %v847
        %v849 = vlaneseq
        %v850 = vshrl.u32 %v849, 7
        %v851 = vsub.s32 0, %v850
        %v852 = vrot.slane %v835, %v851
        %v853 = vlaneseq
        %v854 = vshrl.u32 %v853, 7
        %v855 = vsub.s32 0, %v854
        %v856 = vrot.slane %v818, %v855
        %v857 = vlaneseq
        %v858 = vshrl.u32 %v857, 7
        %v859 = vsub.s32 0, %v858
        %v860 = vrot.slane %v832, %v859
        %v861 = vlaneseq
        %v862 = vshrl.u32 %v861, 7
        %v863 = vsub.s32 0, %v862
        %v864 = vrot.slane %v834, %v863
        %v865 = vlaneseq
        %v866 = vshrl.u32 %v865, 7
        %v867 = vsub.s32 0, %v866
        %v868 = vrot.slane %v836, %v867
        %v877 = vsub.f32 %v768, %v840
        %v878 = vsub.f32 %v769, %v840
        %v879 = vsub.f32 %v770, %v844
        %v880 = vsub.f32 %v771, %v844
        %v881 = vsub.f32 %v772, %v848
        %v882 = vsub.f32 %v773, %v848
        %v883 = vsub.f32 %v774, %v852
        %v884 = vsub.f32 %v775, %v852
        %v885 = vsub.f32 %v776, %v856
        %v886 = vsub.f32 %v777, %v856
        %v887 = vsub.f32 %v778, %v860
        %v888 = vsub.f32 %v779, %v860
        %v889 = vsub.f32 %v780, %v864
        %v890 = vsub.f32 %v781, %v864
        %v891 = vsub.f32 %v782, %v868
        %v892 = vsub.f32 %v783, %v868
        %v894 = vlaneseq
        %v895 = vshrl.u32 %v894, 7
        %v896 = vsub.s32 0, %v895
        %v897 = vrot.slane %v786, %v896
        %v899 = vmul.f32 %v897, %v877
        %v900 = vmul.f32 %v897, %v878
        %v901 = vmul.f32 %v897, %v879
        %v902 = vmul.f32 %v897, %v880
        %v903 = vmul.f32 %v897, %v881
        %v904 = vmul.f32 %v897, %v882
        %v905 = vmul.f32 %v897, %v883
        %v906 = vmul.f32 %v897, %v884
        %v907 = vmul.f32 %v897, %v885
        %v908 = vmul.f32 %v897, %v886
        %v909 = vmul.f32 %v897, %v887
        %v910 = vmul.f32 %v897, %v888
        %v911 = vmul.f32 %v897, %v889
        %v912 = vmul.f32 %v897, %v890
        %v913 = vmul.f32 %v897, %v891
        %v914 = vmul.f32 %v897, %v892
        %v915 = vand.u32 2147483647, %v899
        %vm916 = vcmp.le.f32.partialorder %v915, 0.7853982
        %vm917 = vcmp.lt.s32.totalorder %v899, 0
        %v918 = vand.u32 %v899, 2139095040
        %v919 = vshrl.u32 %v918, 23
        %v920 = vsub.s32 %v919, 127
        %v921 = vand.u32 2147483647, %v899
        %v922 = vand.u32 %v921, 8388607
        %v923 = vor.u32 %v922, 8388608
        %v924 = vsub.s32 0, %v923
        %v925 = vadd.s32 %v920, 1
        %vm926 = vcmp.gt.s32.totalorder %v925, 0
        %v927 = vsel %vm926, %v925, 0
        %v928 = vshrl.u32 %v927, 5
        %v929 = vand.u32 %v927, 31
        %v930 = vsub.s32 32, %v929
        %v931 = vshrl.u32 683565275, %v930
        %v932 = vshll.u32 683565275, %v929
        %v933 = vshrl.u32 2475754826, %v930
        %v934 = vor.u32 %v932, %v933
        %v935 = vshll.u32 2475754826, %v929
        %v936 = vshrl.u32 2131351028, %v930
        %v937 = vor.u32 %v935, %v936
        %v938 = vshll.u32 2131351028, %v929
        %v939 = vshrl.u32 2102212464, %v930
        %v940 = vor.u32 %v938, %v939
        %v941 = vshll.u32 2102212464, %v929
        %v942 = vshrl.u32 920167782, %v930
        %v943 = vor.u32 %v941, %v942
        %v944 = vshll.u32 920167782, %v929
        %v945 = vshrl.u32 1326507024, %v930
        %v946 = vor.u32 %v944, %v945
        %vm947 = vcmp.lt.s32.totalorder %v928, 1
        %vm948 = vcmp.lt.s32.totalorder %v928, 2
        %vm949 = vcmp.lt.s32.totalorder %v928, 3
        %vm950 = vcmp.lt.s32.totalorder %v928, 4
        %v951 = vsel %vm947, %v931, %v934
        %v952 = vsel %vm950, %v940, 2102212464
        %v953 = vsel %vm949, %v937, %v952
        %v954 = vsel %vm948, %v951, %v953
        %v955 = vsel %vm947, %v934, %v937
        %v956 = vsel %vm950, %v943, 920167782
        %v957 = vsel %vm949, %v940, %v956
        %v958 = vsel %vm948, %v955, %v957
        %v959 = vsel %vm947, %v937, %v940
        %v960 = vsel %vm950, %v946, 1326507024
        %v961 = vsel %vm949, %v943, %v960
        %v962 = vsel %vm948, %v959, %v961
        %v963 = vshll.u32 %v923, 8
        %v964 = vmul.u32.u64.compose %v963, %v962
        %v965 = vextract.low.u32 %v964
        %v966 = vextract.high.u32 %v964
        %v967 = vmul.u32.u64.compose %v963, %v958
        %v968 = vextract.low.u32 %v967
        %v969 = vextract.high.u32 %v967
        %v970 = vmul.u32 %v963, %v954
        %v971 = vadd.s32 %v966, %v968
        %vm972 = vc.u32 %v966, %v968
        %v973 = vadd.s32 %v969, 1
        %v974 = vsel %vm972, %v973, %v969
        %v975 = vadd.s32 %v970, %v974
        %v976 = vadd.s32 %v975, 536870912
        %v977 = vshrl.u32 %v976, 30
        %v978 = vshll.u32 %v977, 30
        %v979 = vsub.s32 %v975, %v978
        %vm980 = vcmp.lt.s32.totalorder %v979, 0
        %v981 = vsub.s32 0, %v979
        %v982 = vsel %vm980, %v981, %v979
        %v983 = vclz %v982
        %v984 = vsub.s32 %v983, 2
        %vm985 = vcmp.gt.s32.totalorder 0, %v984
        %v986 = vsel %vm985, 0, %v984
        %v987 = vsub.s32 32, %v986
        %v988 = vshll.u32 %v979, %v986
        %v989 = vshrl.u32 %v971, %v987
        %v990 = vor.u32 %v988, %v989
        %v991 = vsub.s32 4294967266, %v986
        %v992 = vadd.s32 %v991, 127
        %v993 = vshll.u32 %v992, 23
        %v994 = vor.u32 4788187, %v993
        %v995 = vand.u32 2147483647, %v994
        %v997 = vcvt.s32.f32 %v990
        %v998 = vmul.f32 %v997, %v995
        %v999 = vxor.u32 %v998, 2147483648
        %v1000 = vsel %vm917, %v999, %v998
        %v1001 = vsub.s32 4, %v977
        %v1002 = vsel %vm917, %v1001, %v977
        %v1003 = vsel %vm916, %v899, %v1000
        %v1004 = vsel %vm916, 0, %v1002
        %v1005 = vcosq.f32.pop %v1003
        %v1006 = vsinq.f32.pop %v1003
        %vm1007 = vweird.f32 %v899
        %v1008 = vand.u32 %v1004, 3
        %vm1009 = vcmp.lt.s32.totalorder %v1008, 2
        %vm1010 = vcmp.eq.s32.totalorder %v1008, 0
        %v1011 = vxor.u32 %v1006, 2147483648
        %v1012 = vsel %vm1010, %v1005, %v1011
        %vm1013 = vcmp.eq.s32.totalorder %v1008, 2
        %v1014 = vxor.u32 %v1005, 2147483648
        %v1015 = vsel %vm1013, %v1014, %v1006
        %v1016 = vsel %vm1009, %v1012, %v1015
        %v1017 = vsel %vm1007, nan, %v1016
        %v1018 = vand.u32 2147483647, %v900
        %vm1019 = vcmp.le.f32.partialorder %v1018, 0.7853982
        %vm1020 = vcmp.lt.s32.totalorder %v900, 0
        %v1021 = vand.u32 %v900, 2139095040
        %v1022 = vshrl.u32 %v1021, 23
        %v1023 = vsub.s32 %v1022, 127
        %v1024 = vand.u32 2147483647, %v900
        %v1025 = vand.u32 %v1024, 8388607
        %v1026 = vor.u32 %v1025, 8388608
        %v1027 = vsub.s32 0, %v1026
        %v1028 = vadd.s32 %v1023, 1
        %vm1029 = vcmp.gt.s32.totalorder %v1028, 0
        %v1030 = vsel %vm1029, %v1028, 0
        %v1031 = vshrl.u32 %v1030, 5
        %v1032 = vand.u32 %v1030, 31
        %v1033 = vsub.s32 32, %v1032
        %v1034 = vshrl.u32 683565275, %v1033
        %v1035 = vshll.u32 683565275, %v1032
        %v1036 = vshrl.u32 2475754826, %v1033
        %v1037 = vor.u32 %v1035, %v1036
        %v1038 = vshll.u32 2475754826, %v1032
        %v1039 = vshrl.u32 2131351028, %v1033
        %v1040 = vor.u32 %v1038, %v1039
        %v1041 = vshll.u32 2131351028, %v1032
        %v1042 = vshrl.u32 2102212464, %v1033
        %v1043 = vor.u32 %v1041, %v1042
        %v1044 = vshll.u32 2102212464, %v1032
        %v1045 = vshrl.u32 920167782, %v1033
        %v1046 = vor.u32 %v1044, %v1045
        %v1047 = vshll.u32 920167782, %v1032
        %v1048 = vshrl.u32 1326507024, %v1033
        %v1049 = vor.u32 %v1047, %v1048
        %vm1050 = vcmp.lt.s32.totalorder %v1031, 1
        %vm1051 = vcmp.lt.s32.totalorder %v1031, 2
        %vm1052 = vcmp.lt.s32.totalorder %v1031, 3
        %vm1053 = vcmp.lt.s32.totalorder %v1031, 4
        %v1054 = vsel %vm1050, %v1034, %v1037
        %v1055 = vsel %vm1053, %v1043, 2102212464
        %v1056 = vsel %vm1052, %v1040, %v1055
        %v1057 = vsel %vm1051, %v1054, %v1056
        %v1058 = vsel %vm1050, %v1037, %v1040
        %v1059 = vsel %vm1053, %v1046, 920167782
        %v1060 = vsel %vm1052, %v1043, %v1059
        %v1061 = vsel %vm1051, %v1058, %v1060
        %v1062 = vsel %vm1050, %v1040, %v1043
        %v1063 = vsel %vm1053, %v1049, 1326507024
        %v1064 = vsel %vm1052, %v1046, %v1063
        %v1065 = vsel %vm1051, %v1062, %v1064
        %v1066 = vshll.u32 %v1026, 8
        %v1067 = vmul.u32.u64.compose %v1066, %v1065
        %v1068 = vextract.low.u32 %v1067
        %v1069 = vextract.high.u32 %v1067
        %v1070 = vmul.u32.u64.compose %v1066, %v1061
        %v1071 = vextract.low.u32 %v1070
        %v1072 = vextract.high.u32 %v1070
        %v1073 = vmul.u32 %v1066, %v1057
        %v1074 = vadd.s32 %v1069, %v1071
        %vm1075 = vc.u32 %v1069, %v1071
        %v1076 = vadd.s32 %v1072, 1
        %v1077 = vsel %vm1075, %v1076, %v1072
        %v1078 = vadd.s32 %v1073, %v1077
        %v1079 = vadd.s32 %v1078, 536870912
        %v1080 = vshrl.u32 %v1079, 30
        %v1081 = vshll.u32 %v1080, 30
        %v1082 = vsub.s32 %v1078, %v1081
        %vm1083 = vcmp.lt.s32.totalorder %v1082, 0
        %v1084 = vsub.s32 0, %v1082
        %v1085 = vsel %vm1083, %v1084, %v1082
        %v1086 = vclz %v1085
        %v1087 = vsub.s32 %v1086, 2
        %vm1088 = vcmp.gt.s32.totalorder 0, %v1087
        %v1089 = vsel %vm1088, 0, %v1087
        %v1090 = vsub.s32 32, %v1089
        %v1091 = vshll.u32 %v1082, %v1089
        %v1092 = vshrl.u32 %v1074, %v1090
        %v1093 = vor.u32 %v1091, %v1092
        %v1094 = vsub.s32 4294967266, %v1089
        %v1095 = vadd.s32 %v1094, 127
        %v1096 = vshll.u32 %v1095, 23
        %v1097 = vor.u32 4788187, %v1096
        %v1098 = vand.u32 2147483647, %v1097
        %v1100 = vcvt.s32.f32 %v1093
        %v1101 = vmul.f32 %v1100, %v1098
        %v1102 = vxor.u32 %v1101, 2147483648
        %v1103 = vsel %vm1020, %v1102, %v1101
        %v1104 = vsub.s32 4, %v1080
        %v1105 = vsel %vm1020, %v1104, %v1080
        %v1106 = vsel %vm1019, %v900, %v1103
        %v1107 = vsel %vm1019, 0, %v1105
        %v1108 = vcosq.f32.pop %v1106
        %v1109 = vsinq.f32.pop %v1106
        %vm1110 = vweird.f32 %v900
        %v1111 = vand.u32 %v1107, 3
        %vm1112 = vcmp.lt.s32.totalorder %v1111, 2
        %vm1113 = vcmp.eq.s32.totalorder %v1111, 0
        %v1114 = vxor.u32 %v1109, 2147483648
        %v1115 = vsel %vm1113, %v1108, %v1114
        %vm1116 = vcmp.eq.s32.totalorder %v1111, 2
        %v1117 = vxor.u32 %v1108, 2147483648
        %v1118 = vsel %vm1116, %v1117, %v1109
        %v1119 = vsel %vm1112, %v1115, %v1118
        %v1120 = vsel %vm1110, nan, %v1119
        %v1121 = vand.u32 2147483647, %v901
        %vm1122 = vcmp.le.f32.partialorder %v1121, 0.7853982
        %vm1123 = vcmp.lt.s32.totalorder %v901, 0
        %v1124 = vand.u32 %v901, 2139095040
        %v1125 = vshrl.u32 %v1124, 23
        %v1126 = vsub.s32 %v1125, 127
        %v1127 = vand.u32 2147483647, %v901
        %v1128 = vand.u32 %v1127, 8388607
        %v1129 = vor.u32 %v1128, 8388608
        %v1130 = vsub.s32 0, %v1129
        %v1131 = vadd.s32 %v1126, 1
        %vm1132 = vcmp.gt.s32.totalorder %v1131, 0
        %v1133 = vsel %vm1132, %v1131, 0
        %v1134 = vshrl.u32 %v1133, 5
        %v1135 = vand.u32 %v1133, 31
        %v1136 = vsub.s32 32, %v1135
        %v1137 = vshrl.u32 683565275, %v1136
        %v1138 = vshll.u32 683565275, %v1135
        %v1139 = vshrl.u32 2475754826, %v1136
        %v1140 = vor.u32 %v1138, %v1139
        %v1141 = vshll.u32 2475754826, %v1135
        %v1142 = vshrl.u32 2131351028, %v1136
        %v1143 = vor.u32 %v1141, %v1142
        %v1144 = vshll.u32 2131351028, %v1135
        %v1145 = vshrl.u32 2102212464, %v1136
        %v1146 = vor.u32 %v1144, %v1145
        %v1147 = vshll.u32 2102212464, %v1135
        %v1148 = vshrl.u32 920167782, %v1136
        %v1149 = vor.u32 %v1147, %v1148
        %v1150 = vshll.u32 920167782, %v1135
        %v1151 = vshrl.u32 1326507024, %v1136
        %v1152 = vor.u32 %v1150, %v1151
        %vm1153 = vcmp.lt.s32.totalorder %v1134, 1
        %vm1154 = vcmp.lt.s32.totalorder %v1134, 2
        %vm1155 = vcmp.lt.s32.totalorder %v1134, 3
        %vm1156 = vcmp.lt.s32.totalorder %v1134, 4
        %v1157 = vsel %vm1153, %v1137, %v1140
        %v1158 = vsel %vm1156, %v1146, 2102212464
        %v1159 = vsel %vm1155, %v1143, %v1158
        %v1160 = vsel %vm1154, %v1157, %v1159
        %v1161 = vsel %vm1153, %v1140, %v1143
        %v1162 = vsel %vm1156, %v1149, 920167782
        %v1163 = vsel %vm1155, %v1146, %v1162
        %v1164 = vsel %vm1154, %v1161, %v1163
        %v1165 = vsel %vm1153, %v1143, %v1146
        %v1166 = vsel %vm1156, %v1152, 1326507024
        %v1167 = vsel %vm1155, %v1149, %v1166
        %v1168 = vsel %vm1154, %v1165, %v1167
        %v1169 = vshll.u32 %v1129, 8
        %v1170 = vmul.u32.u64.compose %v1169, %v1168
        %v1171 = vextract.low.u32 %v1170
        %v1172 = vextract.high.u32 %v1170
        %v1173 = vmul.u32.u64.compose %v1169, %v1164
        %v1174 = vextract.low.u32 %v1173
        %v1175 = vextract.high.u32 %v1173
        %v1176 = vmul.u32 %v1169, %v1160
        %v1177 = vadd.s32 %v1172, %v1174
        %vm1178 = vc.u32 %v1172, %v1174
        %v1179 = vadd.s32 %v1175, 1
        %v1180 = vsel %vm1178, %v1179, %v1175
        %v1181 = vadd.s32 %v1176, %v1180
        %v1182 = vadd.s32 %v1181, 536870912
        %v1183 = vshrl.u32 %v1182, 30
        %v1184 = vshll.u32 %v1183, 30
        %v1185 = vsub.s32 %v1181, %v1184
        %vm1186 = vcmp.lt.s32.totalorder %v1185, 0
        %v1187 = vsub.s32 0, %v1185
        %v1188 = vsel %vm1186, %v1187, %v1185
        %v1189 = vclz %v1188
        %v1190 = vsub.s32 %v1189, 2
        %vm1191 = vcmp.gt.s32.totalorder 0, %v1190
        %v1192 = vsel %vm1191, 0, %v1190
        %v1193 = vsub.s32 32, %v1192
        %v1194 = vshll.u32 %v1185, %v1192
        %v1195 = vshrl.u32 %v1177, %v1193
        %v1196 = vor.u32 %v1194, %v1195
        %v1197 = vsub.s32 4294967266, %v1192
        %v1198 = vadd.s32 %v1197, 127
        %v1199 = vshll.u32 %v1198, 23
        %v1200 = vor.u32 4788187, %v1199
        %v1201 = vand.u32 2147483647, %v1200
        %v1203 = vcvt.s32.f32 %v1196
        %v1204 = vmul.f32 %v1203, %v1201
        %v1205 = vxor.u32 %v1204, 2147483648
        %v1206 = vsel %vm1123, %v1205, %v1204
        %v1207 = vsub.s32 4, %v1183
        %v1208 = vsel %vm1123, %v1207, %v1183
        %v1209 = vsel %vm1122, %v901, %v1206
        %v1210 = vsel %vm1122, 0, %v1208
        %v1211 = vcosq.f32.pop %v1209
        %v1212 = vsinq.f32.pop %v1209
        %vm1213 = vweird.f32 %v901
        %v1214 = vand.u32 %v1210, 3
        %vm1215 = vcmp.lt.s32.totalorder %v1214, 2
        %vm1216 = vcmp.eq.s32.totalorder %v1214, 0
        %v1217 = vxor.u32 %v1212, 2147483648
        %v1218 = vsel %vm1216, %v1211, %v1217
        %vm1219 = vcmp.eq.s32.totalorder %v1214, 2
        %v1220 = vxor.u32 %v1211, 2147483648
        %v1221 = vsel %vm1219, %v1220, %v1212
        %v1222 = vsel %vm1215, %v1218, %v1221
        %v1223 = vsel %vm1213, nan, %v1222
        %v1224 = vand.u32 2147483647, %v902
        %vm1225 = vcmp.le.f32.partialorder %v1224, 0.7853982
        %vm1226 = vcmp.lt.s32.totalorder %v902, 0
        %v1227 = vand.u32 %v902, 2139095040
        %v1228 = vshrl.u32 %v1227, 23
        %v1229 = vsub.s32 %v1228, 127
        %v1230 = vand.u32 2147483647, %v902
        %v1231 = vand.u32 %v1230, 8388607
        %v1232 = vor.u32 %v1231, 8388608
        %v1233 = vsub.s32 0, %v1232
        %v1234 = vadd.s32 %v1229, 1
        %vm1235 = vcmp.gt.s32.totalorder %v1234, 0
        %v1236 = vsel %vm1235, %v1234, 0
        %v1237 = vshrl.u32 %v1236, 5
        %v1238 = vand.u32 %v1236, 31
        %v1239 = vsub.s32 32, %v1238
        %v1240 = vshrl.u32 683565275, %v1239
        %v1241 = vshll.u32 683565275, %v1238
        %v1242 = vshrl.u32 2475754826, %v1239
        %v1243 = vor.u32 %v1241, %v1242
        %v1244 = vshll.u32 2475754826, %v1238
        %v1245 = vshrl.u32 2131351028, %v1239
        %v1246 = vor.u32 %v1244, %v1245
        %v1247 = vshll.u32 2131351028, %v1238
        %v1248 = vshrl.u32 2102212464, %v1239
        %v1249 = vor.u32 %v1247, %v1248
        %v1250 = vshll.u32 2102212464, %v1238
        %v1251 = vshrl.u32 920167782, %v1239
        %v1252 = vor.u32 %v1250, %v1251
        %v1253 = vshll.u32 920167782, %v1238
        %v1254 = vshrl.u32 1326507024, %v1239
        %v1255 = vor.u32 %v1253, %v1254
        %vm1256 = vcmp.lt.s32.totalorder %v1237, 1
        %vm1257 = vcmp.lt.s32.totalorder %v1237, 2
        %vm1258 = vcmp.lt.s32.totalorder %v1237, 3
        %vm1259 = vcmp.lt.s32.totalorder %v1237, 4
        %v1260 = vsel %vm1256, %v1240, %v1243
        %v1261 = vsel %vm1259, %v1249, 2102212464
        %v1262 = vsel %vm1258, %v1246, %v1261
        %v1263 = vsel %vm1257, %v1260, %v1262
        %v1264 = vsel %vm1256, %v1243, %v1246
        %v1265 = vsel %vm1259, %v1252, 920167782
        %v1266 = vsel %vm1258, %v1249, %v1265
        %v1267 = vsel %vm1257, %v1264, %v1266
        %v1268 = vsel %vm1256, %v1246, %v1249
        %v1269 = vsel %vm1259, %v1255, 1326507024
        %v1270 = vsel %vm1258, %v1252, %v1269
        %v1271 = vsel %vm1257, %v1268, %v1270
        %v1272 = vshll.u32 %v1232, 8
        %v1273 = vmul.u32.u64.compose %v1272, %v1271
        %v1274 = vextract.low.u32 %v1273
        %v1275 = vextract.high.u32 %v1273
        %v1276 = vmul.u32.u64.compose %v1272, %v1267
        %v1277 = vextract.low.u32 %v1276
        %v1278 = vextract.high.u32 %v1276
        %v1279 = vmul.u32 %v1272, %v1263
        %v1280 = vadd.s32 %v1275, %v1277
        %vm1281 = vc.u32 %v1275, %v1277
        %v1282 = vadd.s32 %v1278, 1
        %v1283 = vsel %vm1281, %v1282, %v1278
        %v1284 = vadd.s32 %v1279, %v1283
        %v1285 = vadd.s32 %v1284, 536870912
        %v1286 = vshrl.u32 %v1285, 30
        %v1287 = vshll.u32 %v1286, 30
        %v1288 = vsub.s32 %v1284, %v1287
        %vm1289 = vcmp.lt.s32.totalorder %v1288, 0
        %v1290 = vsub.s32 0, %v1288
        %v1291 = vsel %vm1289, %v1290, %v1288
        %v1292 = vclz %v1291
        %v1293 = vsub.s32 %v1292, 2
        %vm1294 = vcmp.gt.s32.totalorder 0, %v1293
        %v1295 = vsel %vm1294, 0, %v1293
        %v1296 = vsub.s32 32, %v1295
        %v1297 = vshll.u32 %v1288, %v1295
        %v1298 = vshrl.u32 %v1280, %v1296
        %v1299 = vor.u32 %v1297, %v1298
        %v1300 = vsub.s32 4294967266, %v1295
        %v1301 = vadd.s32 %v1300, 127
        %v1302 = vshll.u32 %v1301, 23
        %v1303 = vor.u32 4788187, %v1302
        %v1304 = vand.u32 2147483647, %v1303
        %v1306 = vcvt.s32.f32 %v1299
        %v1307 = vmul.f32 %v1306, %v1304
        %v1308 = vxor.u32 %v1307, 2147483648
        %v1309 = vsel %vm1226, %v1308, %v1307
        %v1310 = vsub.s32 4, %v1286
        %v1311 = vsel %vm1226, %v1310, %v1286
        %v1312 = vsel %vm1225, %v902, %v1309
        %v1313 = vsel %vm1225, 0, %v1311
        %v1314 = vcosq.f32.pop %v1312
        %v1315 = vsinq.f32.pop %v1312
        %vm1316 = vweird.f32 %v902
        %v1317 = vand.u32 %v1313, 3
        %vm1318 = vcmp.lt.s32.totalorder %v1317, 2
        %vm1319 = vcmp.eq.s32.totalorder %v1317, 0
        %v1320 = vxor.u32 %v1315, 2147483648
        %v1321 = vsel %vm1319, %v1314, %v1320
        %vm1322 = vcmp.eq.s32.totalorder %v1317, 2
        %v1323 = vxor.u32 %v1314, 2147483648
        %v1324 = vsel %vm1322, %v1323, %v1315
        %v1325 = vsel %vm1318, %v1321, %v1324
        %v1326 = vsel %vm1316, nan, %v1325
        %v1327 = vand.u32 2147483647, %v903
        %vm1328 = vcmp.le.f32.partialorder %v1327, 0.7853982
        %vm1329 = vcmp.lt.s32.totalorder %v903, 0
        %v1330 = vand.u32 %v903, 2139095040
        %v1331 = vshrl.u32 %v1330, 23
        %v1332 = vsub.s32 %v1331, 127
        %v1333 = vand.u32 2147483647, %v903
        %v1334 = vand.u32 %v1333, 8388607
        %v1335 = vor.u32 %v1334, 8388608
        %v1336 = vsub.s32 0, %v1335
        %v1337 = vadd.s32 %v1332, 1
        %vm1338 = vcmp.gt.s32.totalorder %v1337, 0
        %v1339 = vsel %vm1338, %v1337, 0
        %v1340 = vshrl.u32 %v1339, 5
        %v1341 = vand.u32 %v1339, 31
        %v1342 = vsub.s32 32, %v1341
        %v1343 = vshrl.u32 683565275, %v1342
        %v1344 = vshll.u32 683565275, %v1341
        %v1345 = vshrl.u32 2475754826, %v1342
        %v1346 = vor.u32 %v1344, %v1345
        %v1347 = vshll.u32 2475754826, %v1341
        %v1348 = vshrl.u32 2131351028, %v1342
        %v1349 = vor.u32 %v1347, %v1348
        %v1350 = vshll.u32 2131351028, %v1341
        %v1351 = vshrl.u32 2102212464, %v1342
        %v1352 = vor.u32 %v1350, %v1351
        %v1353 = vshll.u32 2102212464, %v1341
        %v1354 = vshrl.u32 920167782, %v1342
        %v1355 = vor.u32 %v1353, %v1354
        %v1356 = vshll.u32 920167782, %v1341
        %v1357 = vshrl.u32 1326507024, %v1342
        %v1358 = vor.u32 %v1356, %v1357
        %vm1359 = vcmp.lt.s32.totalorder %v1340, 1
        %vm1360 = vcmp.lt.s32.totalorder %v1340, 2
        %vm1361 = vcmp.lt.s32.totalorder %v1340, 3
        %vm1362 = vcmp.lt.s32.totalorder %v1340, 4
        %v1363 = vsel %vm1359, %v1343, %v1346
        %v1364 = vsel %vm1362, %v1352, 2102212464
        %v1365 = vsel %vm1361, %v1349, %v1364
        %v1366 = vsel %vm1360, %v1363, %v1365
        %v1367 = vsel %vm1359, %v1346, %v1349
        %v1368 = vsel %vm1362, %v1355, 920167782
        %v1369 = vsel %vm1361, %v1352, %v1368
        %v1370 = vsel %vm1360, %v1367, %v1369
        %v1371 = vsel %vm1359, %v1349, %v1352
        %v1372 = vsel %vm1362, %v1358, 1326507024
        %v1373 = vsel %vm1361, %v1355, %v1372
        %v1374 = vsel %vm1360, %v1371, %v1373
        %v1375 = vshll.u32 %v1335, 8
        %v1376 = vmul.u32.u64.compose %v1375, %v1374
        %v1377 = vextract.low.u32 %v1376
        %v1378 = vextract.high.u32 %v1376
        %v1379 = vmul.u32.u64.compose %v1375, %v1370
        %v1380 = vextract.low.u32 %v1379
        %v1381 = vextract.high.u32 %v1379
        %v1382 = vmul.u32 %v1375, %v1366
        %v1383 = vadd.s32 %v1378, %v1380
        %vm1384 = vc.u32 %v1378, %v1380
        %v1385 = vadd.s32 %v1381, 1
        %v1386 = vsel %vm1384, %v1385, %v1381
        %v1387 = vadd.s32 %v1382, %v1386
        %v1388 = vadd.s32 %v1387, 536870912
        %v1389 = vshrl.u32 %v1388, 30
        %v1390 = vshll.u32 %v1389, 30
        %v1391 = vsub.s32 %v1387, %v1390
        %vm1392 = vcmp.lt.s32.totalorder %v1391, 0
        %v1393 = vsub.s32 0, %v1391
        %v1394 = vsel %vm1392, %v1393, %v1391
        %v1395 = vclz %v1394
        %v1396 = vsub.s32 %v1395, 2
        %vm1397 = vcmp.gt.s32.totalorder 0, %v1396
        %v1398 = vsel %vm1397, 0, %v1396
        %v1399 = vsub.s32 32, %v1398
        %v1400 = vshll.u32 %v1391, %v1398
        %v1401 = vshrl.u32 %v1383, %v1399
        %v1402 = vor.u32 %v1400, %v1401
        %v1403 = vsub.s32 4294967266, %v1398
        %v1404 = vadd.s32 %v1403, 127
        %v1405 = vshll.u32 %v1404, 23
        %v1406 = vor.u32 4788187, %v1405
        %v1407 = vand.u32 2147483647, %v1406
        %v1409 = vcvt.s32.f32 %v1402
        %v1410 = vmul.f32 %v1409, %v1407
        %v1411 = vxor.u32 %v1410, 2147483648
        %v1412 = vsel %vm1329, %v1411, %v1410
        %v1413 = vsub.s32 4, %v1389
        %v1414 = vsel %vm1329, %v1413, %v1389
        %v1415 = vsel %vm1328, %v903, %v1412
        %v1416 = vsel %vm1328, 0, %v1414
        %v1417 = vcosq.f32.pop %v1415
        %v1418 = vsinq.f32.pop %v1415
        %vm1419 = vweird.f32 %v903
        %v1420 = vand.u32 %v1416, 3
        %vm1421 = vcmp.lt.s32.totalorder %v1420, 2
        %vm1422 = vcmp.eq.s32.totalorder %v1420, 0
        %v1423 = vxor.u32 %v1418, 2147483648
        %v1424 = vsel %vm1422, %v1417, %v1423
        %vm1425 = vcmp.eq.s32.totalorder %v1420, 2
        %v1426 = vxor.u32 %v1417, 2147483648
        %v1427 = vsel %vm1425, %v1426, %v1418
        %v1428 = vsel %vm1421, %v1424, %v1427
        %v1429 = vsel %vm1419, nan, %v1428
        %v1430 = vand.u32 2147483647, %v904
        %vm1431 = vcmp.le.f32.partialorder %v1430, 0.7853982
        %vm1432 = vcmp.lt.s32.totalorder %v904, 0
        %v1433 = vand.u32 %v904, 2139095040
        %v1434 = vshrl.u32 %v1433, 23
        %v1435 = vsub.s32 %v1434, 127
        %v1436 = vand.u32 2147483647, %v904
        %v1437 = vand.u32 %v1436, 8388607
        %v1438 = vor.u32 %v1437, 8388608
        %v1439 = vsub.s32 0, %v1438
        %v1440 = vadd.s32 %v1435, 1
        %vm1441 = vcmp.gt.s32.totalorder %v1440, 0
        %v1442 = vsel %vm1441, %v1440, 0
        %v1443 = vshrl.u32 %v1442, 5
        %v1444 = vand.u32 %v1442, 31
        %v1445 = vsub.s32 32, %v1444
        %v1446 = vshrl.u32 683565275, %v1445
        %v1447 = vshll.u32 683565275, %v1444
        %v1448 = vshrl.u32 2475754826, %v1445
        %v1449 = vor.u32 %v1447, %v1448
        %v1450 = vshll.u32 2475754826, %v1444
        %v1451 = vshrl.u32 2131351028, %v1445
        %v1452 = vor.u32 %v1450, %v1451
        %v1453 = vshll.u32 2131351028, %v1444
        %v1454 = vshrl.u32 2102212464, %v1445
        %v1455 = vor.u32 %v1453, %v1454
        %v1456 = vshll.u32 2102212464, %v1444
        %v1457 = vshrl.u32 920167782, %v1445
        %v1458 = vor.u32 %v1456, %v1457
        %v1459 = vshll.u32 920167782, %v1444
        %v1460 = vshrl.u32 1326507024, %v1445
        %v1461 = vor.u32 %v1459, %v1460
        %vm1462 = vcmp.lt.s32.totalorder %v1443, 1
        %vm1463 = vcmp.lt.s32.totalorder %v1443, 2
        %vm1464 = vcmp.lt.s32.totalorder %v1443, 3
        %vm1465 = vcmp.lt.s32.totalorder %v1443, 4
        %v1466 = vsel %vm1462, %v1446, %v1449
        %v1467 = vsel %vm1465, %v1455, 2102212464
        %v1468 = vsel %vm1464, %v1452, %v1467
        %v1469 = vsel %vm1463, %v1466, %v1468
        %v1470 = vsel %vm1462, %v1449, %v1452
        %v1471 = vsel %vm1465, %v1458, 920167782
        %v1472 = vsel %vm1464, %v1455, %v1471
        %v1473 = vsel %vm1463, %v1470, %v1472
        %v1474 = vsel %vm1462, %v1452, %v1455
        %v1475 = vsel %vm1465, %v1461, 1326507024
        %v1476 = vsel %vm1464, %v1458, %v1475
        %v1477 = vsel %vm1463, %v1474, %v1476
        %v1478 = vshll.u32 %v1438, 8
        %v1479 = vmul.u32.u64.compose %v1478, %v1477
        %v1480 = vextract.low.u32 %v1479
        %v1481 = vextract.high.u32 %v1479
        %v1482 = vmul.u32.u64.compose %v1478, %v1473
        %v1483 = vextract.low.u32 %v1482
        %v1484 = vextract.high.u32 %v1482
        %v1485 = vmul.u32 %v1478, %v1469
        %v1486 = vadd.s32 %v1481, %v1483
        %vm1487 = vc.u32 %v1481, %v1483
        %v1488 = vadd.s32 %v1484, 1
        %v1489 = vsel %vm1487, %v1488, %v1484
        %v1490 = vadd.s32 %v1485, %v1489
        %v1491 = vadd.s32 %v1490, 536870912
        %v1492 = vshrl.u32 %v1491, 30
        %v1493 = vshll.u32 %v1492, 30
        %v1494 = vsub.s32 %v1490, %v1493
        %vm1495 = vcmp.lt.s32.totalorder %v1494, 0
        %v1496 = vsub.s32 0, %v1494
        %v1497 = vsel %vm1495, %v1496, %v1494
        %v1498 = vclz %v1497
        %v1499 = vsub.s32 %v1498, 2
        %vm1500 = vcmp.gt.s32.totalorder 0, %v1499
        %v1501 = vsel %vm1500, 0, %v1499
        %v1502 = vsub.s32 32, %v1501
        %v1503 = vshll.u32 %v1494, %v1501
        %v1504 = vshrl.u32 %v1486, %v1502
        %v1505 = vor.u32 %v1503, %v1504
        %v1506 = vsub.s32 4294967266, %v1501
        %v1507 = vadd.s32 %v1506, 127
        %v1508 = vshll.u32 %v1507, 23
        %v1509 = vor.u32 4788187, %v1508
        %v1510 = vand.u32 2147483647, %v1509
        %v1512 = vcvt.s32.f32 %v1505
        %v1513 = vmul.f32 %v1512, %v1510
        %v1514 = vxor.u32 %v1513, 2147483648
        %v1515 = vsel %vm1432, %v1514, %v1513
        %v1516 = vsub.s32 4, %v1492
        %v1517 = vsel %vm1432, %v1516, %v1492
        %v1518 = vsel %vm1431, %v904, %v1515
        %v1519 = vsel %vm1431, 0, %v1517
        %v1520 = vcosq.f32.pop %v1518
        %v1521 = vsinq.f32.pop %v1518
        %vm1522 = vweird.f32 %v904
        %v1523 = vand.u32 %v1519, 3
        %vm1524 = vcmp.lt.s32.totalorder %v1523, 2
        %vm1525 = vcmp.eq.s32.totalorder %v1523, 0
        %v1526 = vxor.u32 %v1521, 2147483648
        %v1527 = vsel %vm1525, %v1520, %v1526
        %vm1528 = vcmp.eq.s32.totalorder %v1523, 2
        %v1529 = vxor.u32 %v1520, 2147483648
        %v1530 = vsel %vm1528, %v1529, %v1521
        %v1531 = vsel %vm1524, %v1527, %v1530
        %v1532 = vsel %vm1522, nan, %v1531
        %v1533 = vand.u32 2147483647, %v905
        %vm1534 = vcmp.le.f32.partialorder %v1533, 0.7853982
        %vm1535 = vcmp.lt.s32.totalorder %v905, 0
        %v1536 = vand.u32 %v905, 2139095040
        %v1537 = vshrl.u32 %v1536, 23
        %v1538 = vsub.s32 %v1537, 127
        %v1539 = vand.u32 2147483647, %v905
        %v1540 = vand.u32 %v1539, 8388607
        %v1541 = vor.u32 %v1540, 8388608
        %v1542 = vsub.s32 0, %v1541
        %v1543 = vadd.s32 %v1538, 1
        %vm1544 = vcmp.gt.s32.totalorder %v1543, 0
        %v1545 = vsel %vm1544, %v1543, 0
        %v1546 = vshrl.u32 %v1545, 5
        %v1547 = vand.u32 %v1545, 31
        %v1548 = vsub.s32 32, %v1547
        %v1549 = vshrl.u32 683565275, %v1548
        %v1550 = vshll.u32 683565275, %v1547
        %v1551 = vshrl.u32 2475754826, %v1548
        %v1552 = vor.u32 %v1550, %v1551
        %v1553 = vshll.u32 2475754826, %v1547
        %v1554 = vshrl.u32 2131351028, %v1548
        %v1555 = vor.u32 %v1553, %v1554
        %v1556 = vshll.u32 2131351028, %v1547
        %v1557 = vshrl.u32 2102212464, %v1548
        %v1558 = vor.u32 %v1556, %v1557
        %v1559 = vshll.u32 2102212464, %v1547
        %v1560 = vshrl.u32 920167782, %v1548
        %v1561 = vor.u32 %v1559, %v1560
        %v1562 = vshll.u32 920167782, %v1547
        %v1563 = vshrl.u32 1326507024, %v1548
        %v1564 = vor.u32 %v1562, %v1563
        %vm1565 = vcmp.lt.s32.totalorder %v1546, 1
        %vm1566 = vcmp.lt.s32.totalorder %v1546, 2
        %vm1567 = vcmp.lt.s32.totalorder %v1546, 3
        %vm1568 = vcmp.lt.s32.totalorder %v1546, 4
        %v1569 = vsel %vm1565, %v1549, %v1552
        %v1570 = vsel %vm1568, %v1558, 2102212464
        %v1571 = vsel %vm1567, %v1555, %v1570
        %v1572 = vsel %vm1566, %v1569, %v1571
        %v1573 = vsel %vm1565, %v1552, %v1555
        %v1574 = vsel %vm1568, %v1561, 920167782
        %v1575 = vsel %vm1567, %v1558, %v1574
        %v1576 = vsel %vm1566, %v1573, %v1575
        %v1577 = vsel %vm1565, %v1555, %v1558
        %v1578 = vsel %vm1568, %v1564, 1326507024
        %v1579 = vsel %vm1567, %v1561, %v1578
        %v1580 = vsel %vm1566, %v1577, %v1579
        %v1581 = vshll.u32 %v1541, 8
        %v1582 = vmul.u32.u64.compose %v1581, %v1580
        %v1583 = vextract.low.u32 %v1582
        %v1584 = vextract.high.u32 %v1582
        %v1585 = vmul.u32.u64.compose %v1581, %v1576
        %v1586 = vextract.low.u32 %v1585
        %v1587 = vextract.high.u32 %v1585
        %v1588 = vmul.u32 %v1581, %v1572
        %v1589 = vadd.s32 %v1584, %v1586
        %vm1590 = vc.u32 %v1584, %v1586
        %v1591 = vadd.s32 %v1587, 1
        %v1592 = vsel %vm1590, %v1591, %v1587
        %v1593 = vadd.s32 %v1588, %v1592
        %v1594 = vadd.s32 %v1593, 536870912
        %v1595 = vshrl.u32 %v1594, 30
        %v1596 = vshll.u32 %v1595, 30
        %v1597 = vsub.s32 %v1593, %v1596
        %vm1598 = vcmp.lt.s32.totalorder %v1597, 0
        %v1599 = vsub.s32 0, %v1597
        %v1600 = vsel %vm1598, %v1599, %v1597
        %v1601 = vclz %v1600
        %v1602 = vsub.s32 %v1601, 2
        %vm1603 = vcmp.gt.s32.totalorder 0, %v1602
        %v1604 = vsel %vm1603, 0, %v1602
        %v1605 = vsub.s32 32, %v1604
        %v1606 = vshll.u32 %v1597, %v1604
        %v1607 = vshrl.u32 %v1589, %v1605
        %v1608 = vor.u32 %v1606, %v1607
        %v1609 = vsub.s32 4294967266, %v1604
        %v1610 = vadd.s32 %v1609, 127
        %v1611 = vshll.u32 %v1610, 23
        %v1612 = vor.u32 4788187, %v1611
        %v1613 = vand.u32 2147483647, %v1612
        %v1615 = vcvt.s32.f32 %v1608
        %v1616 = vmul.f32 %v1615, %v1613
        %v1617 = vxor.u32 %v1616, 2147483648
        %v1618 = vsel %vm1535, %v1617, %v1616
        %v1619 = vsub.s32 4, %v1595
        %v1620 = vsel %vm1535, %v1619, %v1595
        %v1621 = vsel %vm1534, %v905, %v1618
        %v1622 = vsel %vm1534, 0, %v1620
        %v1623 = vcosq.f32.pop %v1621
        %v1624 = vsinq.f32.pop %v1621
        %vm1625 = vweird.f32 %v905
        %v1626 = vand.u32 %v1622, 3
        %vm1627 = vcmp.lt.s32.totalorder %v1626, 2
        %vm1628 = vcmp.eq.s32.totalorder %v1626, 0
        %v1629 = vxor.u32 %v1624, 2147483648
        %v1630 = vsel %vm1628, %v1623, %v1629
        %vm1631 = vcmp.eq.s32.totalorder %v1626, 2
        %v1632 = vxor.u32 %v1623, 2147483648
        %v1633 = vsel %vm1631, %v1632, %v1624
        %v1634 = vsel %vm1627, %v1630, %v1633
        %v1635 = vsel %vm1625, nan, %v1634
        %v1636 = vand.u32 2147483647, %v906
        %vm1637 = vcmp.le.f32.partialorder %v1636, 0.7853982
        %vm1638 = vcmp.lt.s32.totalorder %v906, 0
        %v1639 = vand.u32 %v906, 2139095040
        %v1640 = vshrl.u32 %v1639, 23
        %v1641 = vsub.s32 %v1640, 127
        %v1642 = vand.u32 2147483647, %v906
        %v1643 = vand.u32 %v1642, 8388607
        %v1644 = vor.u32 %v1643, 8388608
        %v1645 = vsub.s32 0, %v1644
        %v1646 = vadd.s32 %v1641, 1
        %vm1647 = vcmp.gt.s32.totalorder %v1646, 0
        %v1648 = vsel %vm1647, %v1646, 0
        %v1649 = vshrl.u32 %v1648, 5
        %v1650 = vand.u32 %v1648, 31
        %v1651 = vsub.s32 32, %v1650
        %v1652 = vshrl.u32 683565275, %v1651
        %v1653 = vshll.u32 683565275, %v1650
        %v1654 = vshrl.u32 2475754826, %v1651
        %v1655 = vor.u32 %v1653, %v1654
        %v1656 = vshll.u32 2475754826, %v1650
        %v1657 = vshrl.u32 2131351028, %v1651
        %v1658 = vor.u32 %v1656, %v1657
        %v1659 = vshll.u32 2131351028, %v1650
        %v1660 = vshrl.u32 2102212464, %v1651
        %v1661 = vor.u32 %v1659, %v1660
        %v1662 = vshll.u32 2102212464, %v1650
        %v1663 = vshrl.u32 920167782, %v1651
        %v1664 = vor.u32 %v1662, %v1663
        %v1665 = vshll.u32 920167782, %v1650
        %v1666 = vshrl.u32 1326507024, %v1651
        %v1667 = vor.u32 %v1665, %v1666
        %vm1668 = vcmp.lt.s32.totalorder %v1649, 1
        %vm1669 = vcmp.lt.s32.totalorder %v1649, 2
        %vm1670 = vcmp.lt.s32.totalorder %v1649, 3
        %vm1671 = vcmp.lt.s32.totalorder %v1649, 4
        %v1672 = vsel %vm1668, %v1652, %v1655
        %v1673 = vsel %vm1671, %v1661, 2102212464
        %v1674 = vsel %vm1670, %v1658, %v1673
        %v1675 = vsel %vm1669, %v1672, %v1674
        %v1676 = vsel %vm1668, %v1655, %v1658
        %v1677 = vsel %vm1671, %v1664, 920167782
        %v1678 = vsel %vm1670, %v1661, %v1677
        %v1679 = vsel %vm1669, %v1676, %v1678
        %v1680 = vsel %vm1668, %v1658, %v1661
        %v1681 = vsel %vm1671, %v1667, 1326507024
        %v1682 = vsel %vm1670, %v1664, %v1681
        %v1683 = vsel %vm1669, %v1680, %v1682
        %v1684 = vshll.u32 %v1644, 8
        %v1685 = vmul.u32.u64.compose %v1684, %v1683
        %v1686 = vextract.low.u32 %v1685
        %v1687 = vextract.high.u32 %v1685
        %v1688 = vmul.u32.u64.compose %v1684, %v1679
        %v1689 = vextract.low.u32 %v1688
        %v1690 = vextract.high.u32 %v1688
        %v1691 = vmul.u32 %v1684, %v1675
        %v1692 = vadd.s32 %v1687, %v1689
        %vm1693 = vc.u32 %v1687, %v1689
        %v1694 = vadd.s32 %v1690, 1
        %v1695 = vsel %vm1693, %v1694, %v1690
        %v1696 = vadd.s32 %v1691, %v1695
        %v1697 = vadd.s32 %v1696, 536870912
        %v1698 = vshrl.u32 %v1697, 30
        %v1699 = vshll.u32 %v1698, 30
        %v1700 = vsub.s32 %v1696, %v1699
        %vm1701 = vcmp.lt.s32.totalorder %v1700, 0
        %v1702 = vsub.s32 0, %v1700
        %v1703 = vsel %vm1701, %v1702, %v1700
        %v1704 = vclz %v1703
        %v1705 = vsub.s32 %v1704, 2
        %vm1706 = vcmp.gt.s32.totalorder 0, %v1705
        %v1707 = vsel %vm1706, 0, %v1705
        %v1708 = vsub.s32 32, %v1707
        %v1709 = vshll.u32 %v1700, %v1707
        %v1710 = vshrl.u32 %v1692, %v1708
        %v1711 = vor.u32 %v1709, %v1710
        %v1712 = vsub.s32 4294967266, %v1707
        %v1713 = vadd.s32 %v1712, 127
        %v1714 = vshll.u32 %v1713, 23
        %v1715 = vor.u32 4788187, %v1714
        %v1716 = vand.u32 2147483647, %v1715
        %v1718 = vcvt.s32.f32 %v1711
        %v1719 = vmul.f32 %v1718, %v1716
        %v1720 = vxor.u32 %v1719, 2147483648
        %v1721 = vsel %vm1638, %v1720, %v1719
        %v1722 = vsub.s32 4, %v1698
        %v1723 = vsel %vm1638, %v1722, %v1698
        %v1724 = vsel %vm1637, %v906, %v1721
        %v1725 = vsel %vm1637, 0, %v1723
        %v1726 = vcosq.f32.pop %v1724
        %v1727 = vsinq.f32.pop %v1724
        %vm1728 = vweird.f32 %v906
        %v1729 = vand.u32 %v1725, 3
        %vm1730 = vcmp.lt.s32.totalorder %v1729, 2
        %vm1731 = vcmp.eq.s32.totalorder %v1729, 0
        %v1732 = vxor.u32 %v1727, 2147483648
        %v1733 = vsel %vm1731, %v1726, %v1732
        %vm1734 = vcmp.eq.s32.totalorder %v1729, 2
        %v1735 = vxor.u32 %v1726, 2147483648
        %v1736 = vsel %vm1734, %v1735, %v1727
        %v1737 = vsel %vm1730, %v1733, %v1736
        %v1738 = vsel %vm1728, nan, %v1737
        %v1739 = vand.u32 2147483647, %v907
        %vm1740 = vcmp.le.f32.partialorder %v1739, 0.7853982
        %vm1741 = vcmp.lt.s32.totalorder %v907, 0
        %v1742 = vand.u32 %v907, 2139095040
        %v1743 = vshrl.u32 %v1742, 23
        %v1744 = vsub.s32 %v1743, 127
        %v1745 = vand.u32 2147483647, %v907
        %v1746 = vand.u32 %v1745, 8388607
        %v1747 = vor.u32 %v1746, 8388608
        %v1748 = vsub.s32 0, %v1747
        %v1749 = vadd.s32 %v1744, 1
        %vm1750 = vcmp.gt.s32.totalorder %v1749, 0
        %v1751 = vsel %vm1750, %v1749, 0
        %v1752 = vshrl.u32 %v1751, 5
        %v1753 = vand.u32 %v1751, 31
        %v1754 = vsub.s32 32, %v1753
        %v1755 = vshrl.u32 683565275, %v1754
        %v1756 = vshll.u32 683565275, %v1753
        %v1757 = vshrl.u32 2475754826, %v1754
        %v1758 = vor.u32 %v1756, %v1757
        %v1759 = vshll.u32 2475754826, %v1753
        %v1760 = vshrl.u32 2131351028, %v1754
        %v1761 = vor.u32 %v1759, %v1760
        %v1762 = vshll.u32 2131351028, %v1753
        %v1763 = vshrl.u32 2102212464, %v1754
        %v1764 = vor.u32 %v1762, %v1763
        %v1765 = vshll.u32 2102212464, %v1753
        %v1766 = vshrl.u32 920167782, %v1754
        %v1767 = vor.u32 %v1765, %v1766
        %v1768 = vshll.u32 920167782, %v1753
        %v1769 = vshrl.u32 1326507024, %v1754
        %v1770 = vor.u32 %v1768, %v1769
        %vm1771 = vcmp.lt.s32.totalorder %v1752, 1
        %vm1772 = vcmp.lt.s32.totalorder %v1752, 2
        %vm1773 = vcmp.lt.s32.totalorder %v1752, 3
        %vm1774 = vcmp.lt.s32.totalorder %v1752, 4
        %v1775 = vsel %vm1771, %v1755, %v1758
        %v1776 = vsel %vm1774, %v1764, 2102212464
        %v1777 = vsel %vm1773, %v1761, %v1776
        %v1778 = vsel %vm1772, %v1775, %v1777
        %v1779 = vsel %vm1771, %v1758, %v1761
        %v1780 = vsel %vm1774, %v1767, 920167782
        %v1781 = vsel %vm1773, %v1764, %v1780
        %v1782 = vsel %vm1772, %v1779, %v1781
        %v1783 = vsel %vm1771, %v1761, %v1764
        %v1784 = vsel %vm1774, %v1770, 1326507024
        %v1785 = vsel %vm1773, %v1767, %v1784
        %v1786 = vsel %vm1772, %v1783, %v1785
        %v1787 = vshll.u32 %v1747, 8
        %v1788 = vmul.u32.u64.compose %v1787, %v1786
        %v1789 = vextract.low.u32 %v1788
        %v1790 = vextract.high.u32 %v1788
        %v1791 = vmul.u32.u64.compose %v1787, %v1782
        %v1792 = vextract.low.u32 %v1791
        %v1793 = vextract.high.u32 %v1791
        %v1794 = vmul.u32 %v1787, %v1778
        %v1795 = vadd.s32 %v1790, %v1792
        %vm1796 = vc.u32 %v1790, %v1792
        %v1797 = vadd.s32 %v1793, 1
        %v1798 = vsel %vm1796, %v1797, %v1793
        %v1799 = vadd.s32 %v1794, %v1798
        %v1800 = vadd.s32 %v1799, 536870912
        %v1801 = vshrl.u32 %v1800, 30
        %v1802 = vshll.u32 %v1801, 30
        %v1803 = vsub.s32 %v1799, %v1802
        %vm1804 = vcmp.lt.s32.totalorder %v1803, 0
        %v1805 = vsub.s32 0, %v1803
        %v1806 = vsel %vm1804, %v1805, %v1803
        %v1807 = vclz %v1806
        %v1808 = vsub.s32 %v1807, 2
        %vm1809 = vcmp.gt.s32.totalorder 0, %v1808
        %v1810 = vsel %vm1809, 0, %v1808
        %v1811 = vsub.s32 32, %v1810
        %v1812 = vshll.u32 %v1803, %v1810
        %v1813 = vshrl.u32 %v1795, %v1811
        %v1814 = vor.u32 %v1812, %v1813
        %v1815 = vsub.s32 4294967266, %v1810
        %v1816 = vadd.s32 %v1815, 127
        %v1817 = vshll.u32 %v1816, 23
        %v1818 = vor.u32 4788187, %v1817
        %v1819 = vand.u32 2147483647, %v1818
        %v1821 = vcvt.s32.f32 %v1814
        %v1822 = vmul.f32 %v1821, %v1819
        %v1823 = vxor.u32 %v1822, 2147483648
        %v1824 = vsel %vm1741, %v1823, %v1822
        %v1825 = vsub.s32 4, %v1801
        %v1826 = vsel %vm1741, %v1825, %v1801
        %v1827 = vsel %vm1740, %v907, %v1824
        %v1828 = vsel %vm1740, 0, %v1826
        %v1829 = vcosq.f32.pop %v1827
        %v1830 = vsinq.f32.pop %v1827
        %vm1831 = vweird.f32 %v907
        %v1832 = vand.u32 %v1828, 3
        %vm1833 = vcmp.lt.s32.totalorder %v1832, 2
        %vm1834 = vcmp.eq.s32.totalorder %v1832, 0
        %v1835 = vxor.u32 %v1830, 2147483648
        %v1836 = vsel %vm1834, %v1829, %v1835
        %vm1837 = vcmp.eq.s32.totalorder %v1832, 2
        %v1838 = vxor.u32 %v1829, 2147483648
        %v1839 = vsel %vm1837, %v1838, %v1830
        %v1840 = vsel %vm1833, %v1836, %v1839
        %v1841 = vsel %vm1831, nan, %v1840
        %v1842 = vand.u32 2147483647, %v908
        %vm1843 = vcmp.le.f32.partialorder %v1842, 0.7853982
        %vm1844 = vcmp.lt.s32.totalorder %v908, 0
        %v1845 = vand.u32 %v908, 2139095040
        %v1846 = vshrl.u32 %v1845, 23
        %v1847 = vsub.s32 %v1846, 127
        %v1848 = vand.u32 2147483647, %v908
        %v1849 = vand.u32 %v1848, 8388607
        %v1850 = vor.u32 %v1849, 8388608
        %v1851 = vsub.s32 0, %v1850
        %v1852 = vadd.s32 %v1847, 1
        %vm1853 = vcmp.gt.s32.totalorder %v1852, 0
        %v1854 = vsel %vm1853, %v1852, 0
        %v1855 = vshrl.u32 %v1854, 5
        %v1856 = vand.u32 %v1854, 31
        %v1857 = vsub.s32 32, %v1856
        %v1858 = vshrl.u32 683565275, %v1857
        %v1859 = vshll.u32 683565275, %v1856
        %v1860 = vshrl.u32 2475754826, %v1857
        %v1861 = vor.u32 %v1859, %v1860
        %v1862 = vshll.u32 2475754826, %v1856
        %v1863 = vshrl.u32 2131351028, %v1857
        %v1864 = vor.u32 %v1862, %v1863
        %v1865 = vshll.u32 2131351028, %v1856
        %v1866 = vshrl.u32 2102212464, %v1857
        %v1867 = vor.u32 %v1865, %v1866
        %v1868 = vshll.u32 2102212464, %v1856
        %v1869 = vshrl.u32 920167782, %v1857
        %v1870 = vor.u32 %v1868, %v1869
        %v1871 = vshll.u32 920167782, %v1856
        %v1872 = vshrl.u32 1326507024, %v1857
        %v1873 = vor.u32 %v1871, %v1872
        %vm1874 = vcmp.lt.s32.totalorder %v1855, 1
        %vm1875 = vcmp.lt.s32.totalorder %v1855, 2
        %vm1876 = vcmp.lt.s32.totalorder %v1855, 3
        %vm1877 = vcmp.lt.s32.totalorder %v1855, 4
        %v1878 = vsel %vm1874, %v1858, %v1861
        %v1879 = vsel %vm1877, %v1867, 2102212464
        %v1880 = vsel %vm1876, %v1864, %v1879
        %v1881 = vsel %vm1875, %v1878, %v1880
        %v1882 = vsel %vm1874, %v1861, %v1864
        %v1883 = vsel %vm1877, %v1870, 920167782
        %v1884 = vsel %vm1876, %v1867, %v1883
        %v1885 = vsel %vm1875, %v1882, %v1884
        %v1886 = vsel %vm1874, %v1864, %v1867
        %v1887 = vsel %vm1877, %v1873, 1326507024
        %v1888 = vsel %vm1876, %v1870, %v1887
        %v1889 = vsel %vm1875, %v1886, %v1888
        %v1890 = vshll.u32 %v1850, 8
        %v1891 = vmul.u32.u64.compose %v1890, %v1889
        %v1892 = vextract.low.u32 %v1891
        %v1893 = vextract.high.u32 %v1891
        %v1894 = vmul.u32.u64.compose %v1890, %v1885
        %v1895 = vextract.low.u32 %v1894
        %v1896 = vextract.high.u32 %v1894
        %v1897 = vmul.u32 %v1890, %v1881
        %v1898 = vadd.s32 %v1893, %v1895
        %vm1899 = vc.u32 %v1893, %v1895
        %v1900 = vadd.s32 %v1896, 1
        %v1901 = vsel %vm1899, %v1900, %v1896
        %v1902 = vadd.s32 %v1897, %v1901
        %v1903 = vadd.s32 %v1902, 536870912
        %v1904 = vshrl.u32 %v1903, 30
        %v1905 = vshll.u32 %v1904, 30
        %v1906 = vsub.s32 %v1902, %v1905
        %vm1907 = vcmp.lt.s32.totalorder %v1906, 0
        %v1908 = vsub.s32 0, %v1906
        %v1909 = vsel %vm1907, %v1908, %v1906
        %v1910 = vclz %v1909
        %v1911 = vsub.s32 %v1910, 2
        %vm1912 = vcmp.gt.s32.totalorder 0, %v1911
        %v1913 = vsel %vm1912, 0, %v1911
        %v1914 = vsub.s32 32, %v1913
        %v1915 = vshll.u32 %v1906, %v1913
        %v1916 = vshrl.u32 %v1898, %v1914
        %v1917 = vor.u32 %v1915, %v1916
        %v1918 = vsub.s32 4294967266, %v1913
        %v1919 = vadd.s32 %v1918, 127
        %v1920 = vshll.u32 %v1919, 23
        %v1921 = vor.u32 4788187, %v1920
        %v1922 = vand.u32 2147483647, %v1921
        %v1924 = vcvt.s32.f32 %v1917
        %v1925 = vmul.f32 %v1924, %v1922
        %v1926 = vxor.u32 %v1925, 2147483648
        %v1927 = vsel %vm1844, %v1926, %v1925
        %v1928 = vsub.s32 4, %v1904
        %v1929 = vsel %vm1844, %v1928, %v1904
        %v1930 = vsel %vm1843, %v908, %v1927
        %v1931 = vsel %vm1843, 0, %v1929
        %v1932 = vcosq.f32.pop %v1930
        %v1933 = vsinq.f32.pop %v1930
        %vm1934 = vweird.f32 %v908
        %v1935 = vand.u32 %v1931, 3
        %vm1936 = vcmp.lt.s32.totalorder %v1935, 2
        %vm1937 = vcmp.eq.s32.totalorder %v1935, 0
        %v1938 = vxor.u32 %v1933, 2147483648
        %v1939 = vsel %vm1937, %v1932, %v1938
        %vm1940 = vcmp.eq.s32.totalorder %v1935, 2
        %v1941 = vxor.u32 %v1932, 2147483648
        %v1942 = vsel %vm1940, %v1941, %v1933
        %v1943 = vsel %vm1936, %v1939, %v1942
        %v1944 = vsel %vm1934, nan, %v1943
        %v1945 = vand.u32 2147483647, %v909
        %vm1946 = vcmp.le.f32.partialorder %v1945, 0.7853982
        %vm1947 = vcmp.lt.s32.totalorder %v909, 0
        %v1948 = vand.u32 %v909, 2139095040
        %v1949 = vshrl.u32 %v1948, 23
        %v1950 = vsub.s32 %v1949, 127
        %v1951 = vand.u32 2147483647, %v909
        %v1952 = vand.u32 %v1951, 8388607
        %v1953 = vor.u32 %v1952, 8388608
        %v1954 = vsub.s32 0, %v1953
        %v1955 = vadd.s32 %v1950, 1
        %vm1956 = vcmp.gt.s32.totalorder %v1955, 0
        %v1957 = vsel %vm1956, %v1955, 0
        %v1958 = vshrl.u32 %v1957, 5
        %v1959 = vand.u32 %v1957, 31
        %v1960 = vsub.s32 32, %v1959
        %v1961 = vshrl.u32 683565275, %v1960
        %v1962 = vshll.u32 683565275, %v1959
        %v1963 = vshrl.u32 2475754826, %v1960
        %v1964 = vor.u32 %v1962, %v1963
        %v1965 = vshll.u32 2475754826, %v1959
        %v1966 = vshrl.u32 2131351028, %v1960
        %v1967 = vor.u32 %v1965, %v1966
        %v1968 = vshll.u32 2131351028, %v1959
        %v1969 = vshrl.u32 2102212464, %v1960
        %v1970 = vor.u32 %v1968, %v1969
        %v1971 = vshll.u32 2102212464, %v1959
        %v1972 = vshrl.u32 920167782, %v1960
        %v1973 = vor.u32 %v1971, %v1972
        %v1974 = vshll.u32 920167782, %v1959
        %v1975 = vshrl.u32 1326507024, %v1960
        %v1976 = vor.u32 %v1974, %v1975
        %vm1977 = vcmp.lt.s32.totalorder %v1958, 1
        %vm1978 = vcmp.lt.s32.totalorder %v1958, 2
        %vm1979 = vcmp.lt.s32.totalorder %v1958, 3
        %vm1980 = vcmp.lt.s32.totalorder %v1958, 4
        %v1981 = vsel %vm1977, %v1961, %v1964
        %v1982 = vsel %vm1980, %v1970, 2102212464
        %v1983 = vsel %vm1979, %v1967, %v1982
        %v1984 = vsel %vm1978, %v1981, %v1983
        %v1985 = vsel %vm1977, %v1964, %v1967
        %v1986 = vsel %vm1980, %v1973, 920167782
        %v1987 = vsel %vm1979, %v1970, %v1986
        %v1988 = vsel %vm1978, %v1985, %v1987
        %v1989 = vsel %vm1977, %v1967, %v1970
        %v1990 = vsel %vm1980, %v1976, 1326507024
        %v1991 = vsel %vm1979, %v1973, %v1990
        %v1992 = vsel %vm1978, %v1989, %v1991
        %v1993 = vshll.u32 %v1953, 8
        %v1994 = vmul.u32.u64.compose %v1993, %v1992
        %v1995 = vextract.low.u32 %v1994
        %v1996 = vextract.high.u32 %v1994
        %v1997 = vmul.u32.u64.compose %v1993, %v1988
        %v1998 = vextract.low.u32 %v1997
        %v1999 = vextract.high.u32 %v1997
        %v2000 = vmul.u32 %v1993, %v1984
        %v2001 = vadd.s32 %v1996, %v1998
        %vm2002 = vc.u32 %v1996, %v1998
        %v2003 = vadd.s32 %v1999, 1
        %v2004 = vsel %vm2002, %v2003, %v1999
        %v2005 = vadd.s32 %v2000, %v2004
        %v2006 = vadd.s32 %v2005, 536870912
        %v2007 = vshrl.u32 %v2006, 30
        %v2008 = vshll.u32 %v2007, 30
        %v2009 = vsub.s32 %v2005, %v2008
        %vm2010 = vcmp.lt.s32.totalorder %v2009, 0
        %v2011 = vsub.s32 0, %v2009
        %v2012 = vsel %vm2010, %v2011, %v2009
        %v2013 = vclz %v2012
        %v2014 = vsub.s32 %v2013, 2
        %vm2015 = vcmp.gt.s32.totalorder 0, %v2014
        %v2016 = vsel %vm2015, 0, %v2014
        %v2017 = vsub.s32 32, %v2016
        %v2018 = vshll.u32 %v2009, %v2016
        %v2019 = vshrl.u32 %v2001, %v2017
        %v2020 = vor.u32 %v2018, %v2019
        %v2021 = vsub.s32 4294967266, %v2016
        %v2022 = vadd.s32 %v2021, 127
        %v2023 = vshll.u32 %v2022, 23
        %v2024 = vor.u32 4788187, %v2023
        %v2025 = vand.u32 2147483647, %v2024
        %v2027 = vcvt.s32.f32 %v2020
        %v2028 = vmul.f32 %v2027, %v2025
        %v2029 = vxor.u32 %v2028, 2147483648
        %v2030 = vsel %vm1947, %v2029, %v2028
        %v2031 = vsub.s32 4, %v2007
        %v2032 = vsel %vm1947, %v2031, %v2007
        %v2033 = vsel %vm1946, %v909, %v2030
        %v2034 = vsel %vm1946, 0, %v2032
        %v2035 = vcosq.f32.pop %v2033
        %v2036 = vsinq.f32.pop %v2033
        %vm2037 = vweird.f32 %v909
        %v2038 = vand.u32 %v2034, 3
        %vm2039 = vcmp.lt.s32.totalorder %v2038, 2
        %vm2040 = vcmp.eq.s32.totalorder %v2038, 0
        %v2041 = vxor.u32 %v2036, 2147483648
        %v2042 = vsel %vm2040, %v2035, %v2041
        %vm2043 = vcmp.eq.s32.totalorder %v2038, 2
        %v2044 = vxor.u32 %v2035, 2147483648
        %v2045 = vsel %vm2043, %v2044, %v2036
        %v2046 = vsel %vm2039, %v2042, %v2045
        %v2047 = vsel %vm2037, nan, %v2046
        %v2048 = vand.u32 2147483647, %v910
        %vm2049 = vcmp.le.f32.partialorder %v2048, 0.7853982
        %vm2050 = vcmp.lt.s32.totalorder %v910, 0
        %v2051 = vand.u32 %v910, 2139095040
        %v2052 = vshrl.u32 %v2051, 23
        %v2053 = vsub.s32 %v2052, 127
        %v2054 = vand.u32 2147483647, %v910
        %v2055 = vand.u32 %v2054, 8388607
        %v2056 = vor.u32 %v2055, 8388608
        %v2057 = vsub.s32 0, %v2056
        %v2058 = vadd.s32 %v2053, 1
        %vm2059 = vcmp.gt.s32.totalorder %v2058, 0
        %v2060 = vsel %vm2059, %v2058, 0
        %v2061 = vshrl.u32 %v2060, 5
        %v2062 = vand.u32 %v2060, 31
        %v2063 = vsub.s32 32, %v2062
        %v2064 = vshrl.u32 683565275, %v2063
        %v2065 = vshll.u32 683565275, %v2062
        %v2066 = vshrl.u32 2475754826, %v2063
        %v2067 = vor.u32 %v2065, %v2066
        %v2068 = vshll.u32 2475754826, %v2062
        %v2069 = vshrl.u32 2131351028, %v2063
        %v2070 = vor.u32 %v2068, %v2069
        %v2071 = vshll.u32 2131351028, %v2062
        %v2072 = vshrl.u32 2102212464, %v2063
        %v2073 = vor.u32 %v2071, %v2072
        %v2074 = vshll.u32 2102212464, %v2062
        %v2075 = vshrl.u32 920167782, %v2063
        %v2076 = vor.u32 %v2074, %v2075
        %v2077 = vshll.u32 920167782, %v2062
        %v2078 = vshrl.u32 1326507024, %v2063
        %v2079 = vor.u32 %v2077, %v2078
        %vm2080 = vcmp.lt.s32.totalorder %v2061, 1
        %vm2081 = vcmp.lt.s32.totalorder %v2061, 2
        %vm2082 = vcmp.lt.s32.totalorder %v2061, 3
        %vm2083 = vcmp.lt.s32.totalorder %v2061, 4
        %v2084 = vsel %vm2080, %v2064, %v2067
        %v2085 = vsel %vm2083, %v2073, 2102212464
        %v2086 = vsel %vm2082, %v2070, %v2085
        %v2087 = vsel %vm2081, %v2084, %v2086
        %v2088 = vsel %vm2080, %v2067, %v2070
        %v2089 = vsel %vm2083, %v2076, 920167782
        %v2090 = vsel %vm2082, %v2073, %v2089
        %v2091 = vsel %vm2081, %v2088, %v2090
        %v2092 = vsel %vm2080, %v2070, %v2073
        %v2093 = vsel %vm2083, %v2079, 1326507024
        %v2094 = vsel %vm2082, %v2076, %v2093
        %v2095 = vsel %vm2081, %v2092, %v2094
        %v2096 = vshll.u32 %v2056, 8
        %v2097 = vmul.u32.u64.compose %v2096, %v2095
        %v2098 = vextract.low.u32 %v2097
        %v2099 = vextract.high.u32 %v2097
        %v2100 = vmul.u32.u64.compose %v2096, %v2091
        %v2101 = vextract.low.u32 %v2100
        %v2102 = vextract.high.u32 %v2100
        %v2103 = vmul.u32 %v2096, %v2087
        %v2104 = vadd.s32 %v2099, %v2101
        %vm2105 = vc.u32 %v2099, %v2101
        %v2106 = vadd.s32 %v2102, 1
        %v2107 = vsel %vm2105, %v2106, %v2102
        %v2108 = vadd.s32 %v2103, %v2107
        %v2109 = vadd.s32 %v2108, 536870912
        %v2110 = vshrl.u32 %v2109, 30
        %v2111 = vshll.u32 %v2110, 30
        %v2112 = vsub.s32 %v2108, %v2111
        %vm2113 = vcmp.lt.s32.totalorder %v2112, 0
        %v2114 = vsub.s32 0, %v2112
        %v2115 = vsel %vm2113, %v2114, %v2112
        %v2116 = vclz %v2115
        %v2117 = vsub.s32 %v2116, 2
        %vm2118 = vcmp.gt.s32.totalorder 0, %v2117
        %v2119 = vsel %vm2118, 0, %v2117
        %v2120 = vsub.s32 32, %v2119
        %v2121 = vshll.u32 %v2112, %v2119
        %v2122 = vshrl.u32 %v2104, %v2120
        %v2123 = vor.u32 %v2121, %v2122
        %v2124 = vsub.s32 4294967266, %v2119
        %v2125 = vadd.s32 %v2124, 127
        %v2126 = vshll.u32 %v2125, 23
        %v2127 = vor.u32 4788187, %v2126
        %v2128 = vand.u32 2147483647, %v2127
        %v2130 = vcvt.s32.f32 %v2123
        %v2131 = vmul.f32 %v2130, %v2128
        %v2132 = vxor.u32 %v2131, 2147483648
        %v2133 = vsel %vm2050, %v2132, %v2131
        %v2134 = vsub.s32 4, %v2110
        %v2135 = vsel %vm2050, %v2134, %v2110
        %v2136 = vsel %vm2049, %v910, %v2133
        %v2137 = vsel %vm2049, 0, %v2135
        %v2138 = vcosq.f32.pop %v2136
        %v2139 = vsinq.f32.pop %v2136
        %vm2140 = vweird.f32 %v910
        %v2141 = vand.u32 %v2137, 3
        %vm2142 = vcmp.lt.s32.totalorder %v2141, 2
        %vm2143 = vcmp.eq.s32.totalorder %v2141, 0
        %v2144 = vxor.u32 %v2139, 2147483648
        %v2145 = vsel %vm2143, %v2138, %v2144
        %vm2146 = vcmp.eq.s32.totalorder %v2141, 2
        %v2147 = vxor.u32 %v2138, 2147483648
        %v2148 = vsel %vm2146, %v2147, %v2139
        %v2149 = vsel %vm2142, %v2145, %v2148
        %v2150 = vsel %vm2140, nan, %v2149
        %v2151 = vand.u32 2147483647, %v911
        %vm2152 = vcmp.le.f32.partialorder %v2151, 0.7853982
        %vm2153 = vcmp.lt.s32.totalorder %v911, 0
        %v2154 = vand.u32 %v911, 2139095040
        %v2155 = vshrl.u32 %v2154, 23
        %v2156 = vsub.s32 %v2155, 127
        %v2157 = vand.u32 2147483647, %v911
        %v2158 = vand.u32 %v2157, 8388607
        %v2159 = vor.u32 %v2158, 8388608
        %v2160 = vsub.s32 0, %v2159
        %v2161 = vadd.s32 %v2156, 1
        %vm2162 = vcmp.gt.s32.totalorder %v2161, 0
        %v2163 = vsel %vm2162, %v2161, 0
        %v2164 = vshrl.u32 %v2163, 5
        %v2165 = vand.u32 %v2163, 31
        %v2166 = vsub.s32 32, %v2165
        %v2167 = vshrl.u32 683565275, %v2166
        %v2168 = vshll.u32 683565275, %v2165
        %v2169 = vshrl.u32 2475754826, %v2166
        %v2170 = vor.u32 %v2168, %v2169
        %v2171 = vshll.u32 2475754826, %v2165
        %v2172 = vshrl.u32 2131351028, %v2166
        %v2173 = vor.u32 %v2171, %v2172
        %v2174 = vshll.u32 2131351028, %v2165
        %v2175 = vshrl.u32 2102212464, %v2166
        %v2176 = vor.u32 %v2174, %v2175
        %v2177 = vshll.u32 2102212464, %v2165
        %v2178 = vshrl.u32 920167782, %v2166
        %v2179 = vor.u32 %v2177, %v2178
        %v2180 = vshll.u32 920167782, %v2165
        %v2181 = vshrl.u32 1326507024, %v2166
        %v2182 = vor.u32 %v2180, %v2181
        %vm2183 = vcmp.lt.s32.totalorder %v2164, 1
        %vm2184 = vcmp.lt.s32.totalorder %v2164, 2
        %vm2185 = vcmp.lt.s32.totalorder %v2164, 3
        %vm2186 = vcmp.lt.s32.totalorder %v2164, 4
        %v2187 = vsel %vm2183, %v2167, %v2170
        %v2188 = vsel %vm2186, %v2176, 2102212464
        %v2189 = vsel %vm2185, %v2173, %v2188
        %v2190 = vsel %vm2184, %v2187, %v2189
        %v2191 = vsel %vm2183, %v2170, %v2173
        %v2192 = vsel %vm2186, %v2179, 920167782
        %v2193 = vsel %vm2185, %v2176, %v2192
        %v2194 = vsel %vm2184, %v2191, %v2193
        %v2195 = vsel %vm2183, %v2173, %v2176
        %v2196 = vsel %vm2186, %v2182, 1326507024
        %v2197 = vsel %vm2185, %v2179, %v2196
        %v2198 = vsel %vm2184, %v2195, %v2197
        %v2199 = vshll.u32 %v2159, 8
        %v2200 = vmul.u32.u64.compose %v2199, %v2198
        %v2201 = vextract.low.u32 %v2200
        %v2202 = vextract.high.u32 %v2200
        %v2203 = vmul.u32.u64.compose %v2199, %v2194
        %v2204 = vextract.low.u32 %v2203
        %v2205 = vextract.high.u32 %v2203
        %v2206 = vmul.u32 %v2199, %v2190
        %v2207 = vadd.s32 %v2202, %v2204
        %vm2208 = vc.u32 %v2202, %v2204
        %v2209 = vadd.s32 %v2205, 1
        %v2210 = vsel %vm2208, %v2209, %v2205
        %v2211 = vadd.s32 %v2206, %v2210
        %v2212 = vadd.s32 %v2211, 536870912
        %v2213 = vshrl.u32 %v2212, 30
        %v2214 = vshll.u32 %v2213, 30
        %v2215 = vsub.s32 %v2211, %v2214
        %vm2216 = vcmp.lt.s32.totalorder %v2215, 0
        %v2217 = vsub.s32 0, %v2215
        %v2218 = vsel %vm2216, %v2217, %v2215
        %v2219 = vclz %v2218
        %v2220 = vsub.s32 %v2219, 2
        %vm2221 = vcmp.gt.s32.totalorder 0, %v2220
        %v2222 = vsel %vm2221, 0, %v2220
        %v2223 = vsub.s32 32, %v2222
        %v2224 = vshll.u32 %v2215, %v2222
        %v2225 = vshrl.u32 %v2207, %v2223
        %v2226 = vor.u32 %v2224, %v2225
        %v2227 = vsub.s32 4294967266, %v2222
        %v2228 = vadd.s32 %v2227, 127
        %v2229 = vshll.u32 %v2228, 23
        %v2230 = vor.u32 4788187, %v2229
        %v2231 = vand.u32 2147483647, %v2230
        %v2233 = vcvt.s32.f32 %v2226
        %v2234 = vmul.f32 %v2233, %v2231
        %v2235 = vxor.u32 %v2234, 2147483648
        %v2236 = vsel %vm2153, %v2235, %v2234
        %v2237 = vsub.s32 4, %v2213
        %v2238 = vsel %vm2153, %v2237, %v2213
        %v2239 = vsel %vm2152, %v911, %v2236
        %v2240 = vsel %vm2152, 0, %v2238
        %v2241 = vcosq.f32.pop %v2239
        %v2242 = vsinq.f32.pop %v2239
        %vm2243 = vweird.f32 %v911
        %v2244 = vand.u32 %v2240, 3
        %vm2245 = vcmp.lt.s32.totalorder %v2244, 2
        %vm2246 = vcmp.eq.s32.totalorder %v2244, 0
        %v2247 = vxor.u32 %v2242, 2147483648
        %v2248 = vsel %vm2246, %v2241, %v2247
        %vm2249 = vcmp.eq.s32.totalorder %v2244, 2
        %v2250 = vxor.u32 %v2241, 2147483648
        %v2251 = vsel %vm2249, %v2250, %v2242
        %v2252 = vsel %vm2245, %v2248, %v2251
        %v2253 = vsel %vm2243, nan, %v2252
        %v2254 = vand.u32 2147483647, %v912
        %vm2255 = vcmp.le.f32.partialorder %v2254, 0.7853982
        %vm2256 = vcmp.lt.s32.totalorder %v912, 0
        %v2257 = vand.u32 %v912, 2139095040
        %v2258 = vshrl.u32 %v2257, 23
        %v2259 = vsub.s32 %v2258, 127
        %v2260 = vand.u32 2147483647, %v912
        %v2261 = vand.u32 %v2260, 8388607
        %v2262 = vor.u32 %v2261, 8388608
        %v2263 = vsub.s32 0, %v2262
        %v2264 = vadd.s32 %v2259, 1
        %vm2265 = vcmp.gt.s32.totalorder %v2264, 0
        %v2266 = vsel %vm2265, %v2264, 0
        %v2267 = vshrl.u32 %v2266, 5
        %v2268 = vand.u32 %v2266, 31
        %v2269 = vsub.s32 32, %v2268
        %v2270 = vshrl.u32 683565275, %v2269
        %v2271 = vshll.u32 683565275, %v2268
        %v2272 = vshrl.u32 2475754826, %v2269
        %v2273 = vor.u32 %v2271, %v2272
        %v2274 = vshll.u32 2475754826, %v2268
        %v2275 = vshrl.u32 2131351028, %v2269
        %v2276 = vor.u32 %v2274, %v2275
        %v2277 = vshll.u32 2131351028, %v2268
        %v2278 = vshrl.u32 2102212464, %v2269
        %v2279 = vor.u32 %v2277, %v2278
        %v2280 = vshll.u32 2102212464, %v2268
        %v2281 = vshrl.u32 920167782, %v2269
        %v2282 = vor.u32 %v2280, %v2281
        %v2283 = vshll.u32 920167782, %v2268
        %v2284 = vshrl.u32 1326507024, %v2269
        %v2285 = vor.u32 %v2283, %v2284
        %vm2286 = vcmp.lt.s32.totalorder %v2267, 1
        %vm2287 = vcmp.lt.s32.totalorder %v2267, 2
        %vm2288 = vcmp.lt.s32.totalorder %v2267, 3
        %vm2289 = vcmp.lt.s32.totalorder %v2267, 4
        %v2290 = vsel %vm2286, %v2270, %v2273
        %v2291 = vsel %vm2289, %v2279, 2102212464
        %v2292 = vsel %vm2288, %v2276, %v2291
        %v2293 = vsel %vm2287, %v2290, %v2292
        %v2294 = vsel %vm2286, %v2273, %v2276
        %v2295 = vsel %vm2289, %v2282, 920167782
        %v2296 = vsel %vm2288, %v2279, %v2295
        %v2297 = vsel %vm2287, %v2294, %v2296
        %v2298 = vsel %vm2286, %v2276, %v2279
        %v2299 = vsel %vm2289, %v2285, 1326507024
        %v2300 = vsel %vm2288, %v2282, %v2299
        %v2301 = vsel %vm2287, %v2298, %v2300
        %v2302 = vshll.u32 %v2262, 8
        %v2303 = vmul.u32.u64.compose %v2302, %v2301
        %v2304 = vextract.low.u32 %v2303
        %v2305 = vextract.high.u32 %v2303
        %v2306 = vmul.u32.u64.compose %v2302, %v2297
        %v2307 = vextract.low.u32 %v2306
        %v2308 = vextract.high.u32 %v2306
        %v2309 = vmul.u32 %v2302, %v2293
        %v2310 = vadd.s32 %v2305, %v2307
        %vm2311 = vc.u32 %v2305, %v2307
        %v2312 = vadd.s32 %v2308, 1
        %v2313 = vsel %vm2311, %v2312, %v2308
        %v2314 = vadd.s32 %v2309, %v2313
        %v2315 = vadd.s32 %v2314, 536870912
        %v2316 = vshrl.u32 %v2315, 30
        %v2317 = vshll.u32 %v2316, 30
        %v2318 = vsub.s32 %v2314, %v2317
        %vm2319 = vcmp.lt.s32.totalorder %v2318, 0
        %v2320 = vsub.s32 0, %v2318
        %v2321 = vsel %vm2319, %v2320, %v2318
        %v2322 = vclz %v2321
        %v2323 = vsub.s32 %v2322, 2
        %vm2324 = vcmp.gt.s32.totalorder 0, %v2323
        %v2325 = vsel %vm2324, 0, %v2323
        %v2326 = vsub.s32 32, %v2325
        %v2327 = vshll.u32 %v2318, %v2325
        %v2328 = vshrl.u32 %v2310, %v2326
        %v2329 = vor.u32 %v2327, %v2328
        %v2330 = vsub.s32 4294967266, %v2325
        %v2331 = vadd.s32 %v2330, 127
        %v2332 = vshll.u32 %v2331, 23
        %v2333 = vor.u32 4788187, %v2332
        %v2334 = vand.u32 2147483647, %v2333
        %v2336 = vcvt.s32.f32 %v2329
        %v2337 = vmul.f32 %v2336, %v2334
        %v2338 = vxor.u32 %v2337, 2147483648
        %v2339 = vsel %vm2256, %v2338, %v2337
        %v2340 = vsub.s32 4, %v2316
        %v2341 = vsel %vm2256, %v2340, %v2316
        %v2342 = vsel %vm2255, %v912, %v2339
        %v2343 = vsel %vm2255, 0, %v2341
        %v2344 = vcosq.f32.pop %v2342
        %v2345 = vsinq.f32.pop %v2342
        %vm2346 = vweird.f32 %v912
        %v2347 = vand.u32 %v2343, 3
        %vm2348 = vcmp.lt.s32.totalorder %v2347, 2
        %vm2349 = vcmp.eq.s32.totalorder %v2347, 0
        %v2350 = vxor.u32 %v2345, 2147483648
        %v2351 = vsel %vm2349, %v2344, %v2350
        %vm2352 = vcmp.eq.s32.totalorder %v2347, 2
        %v2353 = vxor.u32 %v2344, 2147483648
        %v2354 = vsel %vm2352, %v2353, %v2345
        %v2355 = vsel %vm2348, %v2351, %v2354
        %v2356 = vsel %vm2346, nan, %v2355
        %v2357 = vand.u32 2147483647, %v913
        %vm2358 = vcmp.le.f32.partialorder %v2357, 0.7853982
        %vm2359 = vcmp.lt.s32.totalorder %v913, 0
        %v2360 = vand.u32 %v913, 2139095040
        %v2361 = vshrl.u32 %v2360, 23
        %v2362 = vsub.s32 %v2361, 127
        %v2363 = vand.u32 2147483647, %v913
        %v2364 = vand.u32 %v2363, 8388607
        %v2365 = vor.u32 %v2364, 8388608
        %v2366 = vsub.s32 0, %v2365
        %v2367 = vadd.s32 %v2362, 1
        %vm2368 = vcmp.gt.s32.totalorder %v2367, 0
        %v2369 = vsel %vm2368, %v2367, 0
        %v2370 = vshrl.u32 %v2369, 5
        %v2371 = vand.u32 %v2369, 31
        %v2372 = vsub.s32 32, %v2371
        %v2373 = vshrl.u32 683565275, %v2372
        %v2374 = vshll.u32 683565275, %v2371
        %v2375 = vshrl.u32 2475754826, %v2372
        %v2376 = vor.u32 %v2374, %v2375
        %v2377 = vshll.u32 2475754826, %v2371
        %v2378 = vshrl.u32 2131351028, %v2372
        %v2379 = vor.u32 %v2377, %v2378
        %v2380 = vshll.u32 2131351028, %v2371
        %v2381 = vshrl.u32 2102212464, %v2372
        %v2382 = vor.u32 %v2380, %v2381
        %v2383 = vshll.u32 2102212464, %v2371
        %v2384 = vshrl.u32 920167782, %v2372
        %v2385 = vor.u32 %v2383, %v2384
        %v2386 = vshll.u32 920167782, %v2371
        %v2387 = vshrl.u32 1326507024, %v2372
        %v2388 = vor.u32 %v2386, %v2387
        %vm2389 = vcmp.lt.s32.totalorder %v2370, 1
        %vm2390 = vcmp.lt.s32.totalorder %v2370, 2
        %vm2391 = vcmp.lt.s32.totalorder %v2370, 3
        %vm2392 = vcmp.lt.s32.totalorder %v2370, 4
        %v2393 = vsel %vm2389, %v2373, %v2376
        %v2394 = vsel %vm2392, %v2382, 2102212464
        %v2395 = vsel %vm2391, %v2379, %v2394
        %v2396 = vsel %vm2390, %v2393, %v2395
        %v2397 = vsel %vm2389, %v2376, %v2379
        %v2398 = vsel %vm2392, %v2385, 920167782
        %v2399 = vsel %vm2391, %v2382, %v2398
        %v2400 = vsel %vm2390, %v2397, %v2399
        %v2401 = vsel %vm2389, %v2379, %v2382
        %v2402 = vsel %vm2392, %v2388, 1326507024
        %v2403 = vsel %vm2391, %v2385, %v2402
        %v2404 = vsel %vm2390, %v2401, %v2403
        %v2405 = vshll.u32 %v2365, 8
        %v2406 = vmul.u32.u64.compose %v2405, %v2404
        %v2407 = vextract.low.u32 %v2406
        %v2408 = vextract.high.u32 %v2406
        %v2409 = vmul.u32.u64.compose %v2405, %v2400
        %v2410 = vextract.low.u32 %v2409
        %v2411 = vextract.high.u32 %v2409
        %v2412 = vmul.u32 %v2405, %v2396
        %v2413 = vadd.s32 %v2408, %v2410
        %vm2414 = vc.u32 %v2408, %v2410
        %v2415 = vadd.s32 %v2411, 1
        %v2416 = vsel %vm2414, %v2415, %v2411
        %v2417 = vadd.s32 %v2412, %v2416
        %v2418 = vadd.s32 %v2417, 536870912
        %v2419 = vshrl.u32 %v2418, 30
        %v2420 = vshll.u32 %v2419, 30
        %v2421 = vsub.s32 %v2417, %v2420
        %vm2422 = vcmp.lt.s32.totalorder %v2421, 0
        %v2423 = vsub.s32 0, %v2421
        %v2424 = vsel %vm2422, %v2423, %v2421
        %v2425 = vclz %v2424
        %v2426 = vsub.s32 %v2425, 2
        %vm2427 = vcmp.gt.s32.totalorder 0, %v2426
        %v2428 = vsel %vm2427, 0, %v2426
        %v2429 = vsub.s32 32, %v2428
        %v2430 = vshll.u32 %v2421, %v2428
        %v2431 = vshrl.u32 %v2413, %v2429
        %v2432 = vor.u32 %v2430, %v2431
        %v2433 = vsub.s32 4294967266, %v2428
        %v2434 = vadd.s32 %v2433, 127
        %v2435 = vshll.u32 %v2434, 23
        %v2436 = vor.u32 4788187, %v2435
        %v2437 = vand.u32 2147483647, %v2436
        %v2439 = vcvt.s32.f32 %v2432
        %v2440 = vmul.f32 %v2439, %v2437
        %v2441 = vxor.u32 %v2440, 2147483648
        %v2442 = vsel %vm2359, %v2441, %v2440
        %v2443 = vsub.s32 4, %v2419
        %v2444 = vsel %vm2359, %v2443, %v2419
        %v2445 = vsel %vm2358, %v913, %v2442
        %v2446 = vsel %vm2358, 0, %v2444
        %v2447 = vcosq.f32.pop %v2445
        %v2448 = vsinq.f32.pop %v2445
        %vm2449 = vweird.f32 %v913
        %v2450 = vand.u32 %v2446, 3
        %vm2451 = vcmp.lt.s32.totalorder %v2450, 2
        %vm2452 = vcmp.eq.s32.totalorder %v2450, 0
        %v2453 = vxor.u32 %v2448, 2147483648
        %v2454 = vsel %vm2452, %v2447, %v2453
        %vm2455 = vcmp.eq.s32.totalorder %v2450, 2
        %v2456 = vxor.u32 %v2447, 2147483648
        %v2457 = vsel %vm2455, %v2456, %v2448
        %v2458 = vsel %vm2451, %v2454, %v2457
        %v2459 = vsel %vm2449, nan, %v2458
        %v2460 = vand.u32 2147483647, %v914
        %vm2461 = vcmp.le.f32.partialorder %v2460, 0.7853982
        %vm2462 = vcmp.lt.s32.totalorder %v914, 0
        %v2463 = vand.u32 %v914, 2139095040
        %v2464 = vshrl.u32 %v2463, 23
        %v2465 = vsub.s32 %v2464, 127
        %v2466 = vand.u32 2147483647, %v914
        %v2467 = vand.u32 %v2466, 8388607
        %v2468 = vor.u32 %v2467, 8388608
        %v2469 = vsub.s32 0, %v2468
        %v2470 = vadd.s32 %v2465, 1
        %vm2471 = vcmp.gt.s32.totalorder %v2470, 0
        %v2472 = vsel %vm2471, %v2470, 0
        %v2473 = vshrl.u32 %v2472, 5
        %v2474 = vand.u32 %v2472, 31
        %v2475 = vsub.s32 32, %v2474
        %v2476 = vshrl.u32 683565275, %v2475
        %v2477 = vshll.u32 683565275, %v2474
        %v2478 = vshrl.u32 2475754826, %v2475
        %v2479 = vor.u32 %v2477, %v2478
        %v2480 = vshll.u32 2475754826, %v2474
        %v2481 = vshrl.u32 2131351028, %v2475
        %v2482 = vor.u32 %v2480, %v2481
        %v2483 = vshll.u32 2131351028, %v2474
        %v2484 = vshrl.u32 2102212464, %v2475
        %v2485 = vor.u32 %v2483, %v2484
        %v2486 = vshll.u32 2102212464, %v2474
        %v2487 = vshrl.u32 920167782, %v2475
        %v2488 = vor.u32 %v2486, %v2487
        %v2489 = vshll.u32 920167782, %v2474
        %v2490 = vshrl.u32 1326507024, %v2475
        %v2491 = vor.u32 %v2489, %v2490
        %vm2492 = vcmp.lt.s32.totalorder %v2473, 1
        %vm2493 = vcmp.lt.s32.totalorder %v2473, 2
        %vm2494 = vcmp.lt.s32.totalorder %v2473, 3
        %vm2495 = vcmp.lt.s32.totalorder %v2473, 4
        %v2496 = vsel %vm2492, %v2476, %v2479
        %v2497 = vsel %vm2495, %v2485, 2102212464
        %v2498 = vsel %vm2494, %v2482, %v2497
        %v2499 = vsel %vm2493, %v2496, %v2498
        %v2500 = vsel %vm2492, %v2479, %v2482
        %v2501 = vsel %vm2495, %v2488, 920167782
        %v2502 = vsel %vm2494, %v2485, %v2501
        %v2503 = vsel %vm2493, %v2500, %v2502
        %v2504 = vsel %vm2492, %v2482, %v2485
        %v2505 = vsel %vm2495, %v2491, 1326507024
        %v2506 = vsel %vm2494, %v2488, %v2505
        %v2507 = vsel %vm2493, %v2504, %v2506
        %v2508 = vshll.u32 %v2468, 8
        %v2509 = vmul.u32.u64.compose %v2508, %v2507
        %v2510 = vextract.low.u32 %v2509
        %v2511 = vextract.high.u32 %v2509
        %v2512 = vmul.u32.u64.compose %v2508, %v2503
        %v2513 = vextract.low.u32 %v2512
        %v2514 = vextract.high.u32 %v2512
        %v2515 = vmul.u32 %v2508, %v2499
        %v2516 = vadd.s32 %v2511, %v2513
        %vm2517 = vc.u32 %v2511, %v2513
        %v2518 = vadd.s32 %v2514, 1
        %v2519 = vsel %vm2517, %v2518, %v2514
        %v2520 = vadd.s32 %v2515, %v2519
        %v2521 = vadd.s32 %v2520, 536870912
        %v2522 = vshrl.u32 %v2521, 30
        %v2523 = vshll.u32 %v2522, 30
        %v2524 = vsub.s32 %v2520, %v2523
        %vm2525 = vcmp.lt.s32.totalorder %v2524, 0
        %v2526 = vsub.s32 0, %v2524
        %v2527 = vsel %vm2525, %v2526, %v2524
        %v2528 = vclz %v2527
        %v2529 = vsub.s32 %v2528, 2
        %vm2530 = vcmp.gt.s32.totalorder 0, %v2529
        %v2531 = vsel %vm2530, 0, %v2529
        %v2532 = vsub.s32 32, %v2531
        %v2533 = vshll.u32 %v2524, %v2531
        %v2534 = vshrl.u32 %v2516, %v2532
        %v2535 = vor.u32 %v2533, %v2534
        %v2536 = vsub.s32 4294967266, %v2531
        %v2537 = vadd.s32 %v2536, 127
        %v2538 = vshll.u32 %v2537, 23
        %v2539 = vor.u32 4788187, %v2538
        %v2540 = vand.u32 2147483647, %v2539
        %v2542 = vcvt.s32.f32 %v2535
        %v2543 = vmul.f32 %v2542, %v2540
        %v2544 = vxor.u32 %v2543, 2147483648
        %v2545 = vsel %vm2462, %v2544, %v2543
        %v2546 = vsub.s32 4, %v2522
        %v2547 = vsel %vm2462, %v2546, %v2522
        %v2548 = vsel %vm2461, %v914, %v2545
        %v2549 = vsel %vm2461, 0, %v2547
        %v2550 = vcosq.f32.pop %v2548
        %v2551 = vsinq.f32.pop %v2548
        %vm2552 = vweird.f32 %v914
        %v2553 = vand.u32 %v2549, 3
        %vm2554 = vcmp.lt.s32.totalorder %v2553, 2
        %vm2555 = vcmp.eq.s32.totalorder %v2553, 0
        %v2556 = vxor.u32 %v2551, 2147483648
        %v2557 = vsel %vm2555, %v2550, %v2556
        %vm2558 = vcmp.eq.s32.totalorder %v2553, 2
        %v2559 = vxor.u32 %v2550, 2147483648
        %v2560 = vsel %vm2558, %v2559, %v2551
        %v2561 = vsel %vm2554, %v2557, %v2560
        %v2562 = vsel %vm2552, nan, %v2561
        %2563 = vadd.xlane.f32.xlu0 %v1017
        %v2564 = vpop.xlane.xlu0 %2563
        %2565 = vadd.xlane.f32.xlu0 %v1120
        %v2566 = vpop.xlane.xlu0 %2565
        %2567 = vadd.xlane.f32.xlu0 %v1223
        %v2568 = vpop.xlane.xlu0 %2567
        %2569 = vadd.xlane.f32.xlu0 %v1326
        %v2570 = vpop.xlane.xlu0 %2569
        %2571 = vadd.xlane.f32.xlu0 %v1429
        %v2572 = vpop.xlane.xlu0 %2571
        %2573 = vadd.xlane.f32.xlu0 %v1532
        %v2574 = vpop.xlane.xlu0 %2573
        %2575 = vadd.xlane.f32.xlu0 %v1635
        %v2576 = vpop.xlane.xlu0 %2575
        %2577 = vadd.xlane.f32.xlu0 %v1738
        %v2578 = vpop.xlane.xlu0 %2577
        %2579 = vadd.xlane.f32.xlu0 %v1841
        %v2580 = vpop.xlane.xlu0 %2579
        %2581 = vadd.xlane.f32.xlu0 %v1944
        %v2582 = vpop.xlane.xlu0 %2581
        %2583 = vadd.xlane.f32.xlu0 %v2047
        %v2584 = vpop.xlane.xlu0 %2583
        %2585 = vadd.xlane.f32.xlu0 %v2150
        %v2586 = vpop.xlane.xlu0 %2585
        %2587 = vadd.xlane.f32.xlu0 %v2253
        %v2588 = vpop.xlane.xlu0 %2587
        %2589 = vadd.xlane.f32.xlu0 %v2356
        %v2590 = vpop.xlane.xlu0 %2589
        %2591 = vadd.xlane.f32.xlu0 %v2459
        %v2592 = vpop.xlane.xlu0 %2591
        %2593 = vadd.xlane.f32.xlu0 %v2562
        %v2594 = vpop.xlane.xlu0 %2593
        %v2595 = vand.u32 2147483647, %v899
        %vm2596 = vcmp.le.f32.partialorder %v2595, 0.7853982
        %vm2597 = vcmp.lt.s32.totalorder %v899, 0
        %v2598 = vand.u32 %v899, 2139095040
        %v2599 = vshrl.u32 %v2598, 23
        %v2600 = vsub.s32 %v2599, 127
        %v2601 = vand.u32 2147483647, %v899
        %v2602 = vand.u32 %v2601, 8388607
        %v2603 = vor.u32 %v2602, 8388608
        %v2604 = vsub.s32 0, %v2603
        %v2605 = vadd.s32 %v2600, 1
        %vm2606 = vcmp.gt.s32.totalorder %v2605, 0
        %v2607 = vsel %vm2606, %v2605, 0
        %v2608 = vshrl.u32 %v2607, 5
        %v2609 = vand.u32 %v2607, 31
        %v2610 = vsub.s32 32, %v2609
        %v2611 = vshrl.u32 683565275, %v2610
        %v2612 = vshll.u32 683565275, %v2609
        %v2613 = vshrl.u32 2475754826, %v2610
        %v2614 = vor.u32 %v2612, %v2613
        %v2615 = vshll.u32 2475754826, %v2609
        %v2616 = vshrl.u32 2131351028, %v2610
        %v2617 = vor.u32 %v2615, %v2616
        %v2618 = vshll.u32 2131351028, %v2609
        %v2619 = vshrl.u32 2102212464, %v2610
        %v2620 = vor.u32 %v2618, %v2619
        %v2621 = vshll.u32 2102212464, %v2609
        %v2622 = vshrl.u32 920167782, %v2610
        %v2623 = vor.u32 %v2621, %v2622
        %v2624 = vshll.u32 920167782, %v2609
        %v2625 = vshrl.u32 1326507024, %v2610
        %v2626 = vor.u32 %v2624, %v2625
        %vm2627 = vcmp.lt.s32.totalorder %v2608, 1
        %vm2628 = vcmp.lt.s32.totalorder %v2608, 2
        %vm2629 = vcmp.lt.s32.totalorder %v2608, 3
        %vm2630 = vcmp.lt.s32.totalorder %v2608, 4
        %v2631 = vsel %vm2627, %v2611, %v2614
        %v2632 = vsel %vm2630, %v2620, 2102212464
        %v2633 = vsel %vm2629, %v2617, %v2632
        %v2634 = vsel %vm2628, %v2631, %v2633
        %v2635 = vsel %vm2627, %v2614, %v2617
        %v2636 = vsel %vm2630, %v2623, 920167782
        %v2637 = vsel %vm2629, %v2620, %v2636
        %v2638 = vsel %vm2628, %v2635, %v2637
        %v2639 = vsel %vm2627, %v2617, %v2620
        %v2640 = vsel %vm2630, %v2626, 1326507024
        %v2641 = vsel %vm2629, %v2623, %v2640
        %v2642 = vsel %vm2628, %v2639, %v2641
        %v2643 = vshll.u32 %v2603, 8
        %v2644 = vmul.u32.u64.compose %v2643, %v2642
        %v2645 = vextract.low.u32 %v2644
        %v2646 = vextract.high.u32 %v2644
        %v2647 = vmul.u32.u64.compose %v2643, %v2638
        %v2648 = vextract.low.u32 %v2647
        %v2649 = vextract.high.u32 %v2647
        %v2650 = vmul.u32 %v2643, %v2634
        %v2651 = vadd.s32 %v2646, %v2648
        %vm2652 = vc.u32 %v2646, %v2648
        %v2653 = vadd.s32 %v2649, 1
        %v2654 = vsel %vm2652, %v2653, %v2649
        %v2655 = vadd.s32 %v2650, %v2654
        %v2656 = vadd.s32 %v2655, 536870912
        %v2657 = vshrl.u32 %v2656, 30
        %v2658 = vshll.u32 %v2657, 30
        %v2659 = vsub.s32 %v2655, %v2658
        %vm2660 = vcmp.lt.s32.totalorder %v2659, 0
        %v2661 = vsub.s32 0, %v2659
        %v2662 = vsel %vm2660, %v2661, %v2659
        %v2663 = vclz %v2662
        %v2664 = vsub.s32 %v2663, 2
        %vm2665 = vcmp.gt.s32.totalorder 0, %v2664
        %v2666 = vsel %vm2665, 0, %v2664
        %v2667 = vsub.s32 32, %v2666
        %v2668 = vshll.u32 %v2659, %v2666
        %v2669 = vshrl.u32 %v2651, %v2667
        %v2670 = vor.u32 %v2668, %v2669
        %v2671 = vsub.s32 4294967266, %v2666
        %v2672 = vadd.s32 %v2671, 127
        %v2673 = vshll.u32 %v2672, 23
        %v2674 = vor.u32 4788187, %v2673
        %v2675 = vand.u32 2147483647, %v2674
        %v2677 = vcvt.s32.f32 %v2670
        %v2678 = vmul.f32 %v2677, %v2675
        %v2679 = vxor.u32 %v2678, 2147483648
        %v2680 = vsel %vm2597, %v2679, %v2678
        %v2681 = vsub.s32 4, %v2657
        %v2682 = vsel %vm2597, %v2681, %v2657
        %v2683 = vsel %vm2596, %v899, %v2680
        %v2684 = vsel %vm2596, 0, %v2682
        %v2685 = vcosq.f32.pop %v2683
        %v2686 = vsinq.f32.pop %v2683
        %vm2687 = vweird.f32 %v899
        %v2688 = vadd.s32 %v2684, 3
        %v2689 = vand.u32 %v2688, 3
        %vm2690 = vcmp.lt.s32.totalorder %v2689, 2
        %vm2691 = vcmp.eq.s32.totalorder %v2689, 0
        %v2692 = vxor.u32 %v2686, 2147483648
        %v2693 = vsel %vm2691, %v2685, %v2692
        %vm2694 = vcmp.eq.s32.totalorder %v2689, 2
        %v2695 = vxor.u32 %v2685, 2147483648
        %v2696 = vsel %vm2694, %v2695, %v2686
        %v2697 = vsel %vm2690, %v2693, %v2696
        %v2698 = vsel %vm2687, nan, %v2697
        %v2699 = vand.u32 2147483647, %v900
        %vm2700 = vcmp.le.f32.partialorder %v2699, 0.7853982
        %vm2701 = vcmp.lt.s32.totalorder %v900, 0
        %v2702 = vand.u32 %v900, 2139095040
        %v2703 = vshrl.u32 %v2702, 23
        %v2704 = vsub.s32 %v2703, 127
        %v2705 = vand.u32 2147483647, %v900
        %v2706 = vand.u32 %v2705, 8388607
        %v2707 = vor.u32 %v2706, 8388608
        %v2708 = vsub.s32 0, %v2707
        %v2709 = vadd.s32 %v2704, 1
        %vm2710 = vcmp.gt.s32.totalorder %v2709, 0
        %v2711 = vsel %vm2710, %v2709, 0
        %v2712 = vshrl.u32 %v2711, 5
        %v2713 = vand.u32 %v2711, 31
        %v2714 = vsub.s32 32, %v2713
        %v2715 = vshrl.u32 683565275, %v2714
        %v2716 = vshll.u32 683565275, %v2713
        %v2717 = vshrl.u32 2475754826, %v2714
        %v2718 = vor.u32 %v2716, %v2717
        %v2719 = vshll.u32 2475754826, %v2713
        %v2720 = vshrl.u32 2131351028, %v2714
        %v2721 = vor.u32 %v2719, %v2720
        %v2722 = vshll.u32 2131351028, %v2713
        %v2723 = vshrl.u32 2102212464, %v2714
        %v2724 = vor.u32 %v2722, %v2723
        %v2725 = vshll.u32 2102212464, %v2713
        %v2726 = vshrl.u32 920167782, %v2714
        %v2727 = vor.u32 %v2725, %v2726
        %v2728 = vshll.u32 920167782, %v2713
        %v2729 = vshrl.u32 1326507024, %v2714
        %v2730 = vor.u32 %v2728, %v2729
        %vm2731 = vcmp.lt.s32.totalorder %v2712, 1
        %vm2732 = vcmp.lt.s32.totalorder %v2712, 2
        %vm2733 = vcmp.lt.s32.totalorder %v2712, 3
        %vm2734 = vcmp.lt.s32.totalorder %v2712, 4
        %v2735 = vsel %vm2731, %v2715, %v2718
        %v2736 = vsel %vm2734, %v2724, 2102212464
        %v2737 = vsel %vm2733, %v2721, %v2736
        %v2738 = vsel %vm2732, %v2735, %v2737
        %v2739 = vsel %vm2731, %v2718, %v2721
        %v2740 = vsel %vm2734, %v2727, 920167782
        %v2741 = vsel %vm2733, %v2724, %v2740
        %v2742 = vsel %vm2732, %v2739, %v2741
        %v2743 = vsel %vm2731, %v2721, %v2724
        %v2744 = vsel %vm2734, %v2730, 1326507024
        %v2745 = vsel %vm2733, %v2727, %v2744
        %v2746 = vsel %vm2732, %v2743, %v2745
        %v2747 = vshll.u32 %v2707, 8
        %v2748 = vmul.u32.u64.compose %v2747, %v2746
        %v2749 = vextract.low.u32 %v2748
        %v2750 = vextract.high.u32 %v2748
        %v2751 = vmul.u32.u64.compose %v2747, %v2742
        %v2752 = vextract.low.u32 %v2751
        %v2753 = vextract.high.u32 %v2751
        %v2754 = vmul.u32 %v2747, %v2738
        %v2755 = vadd.s32 %v2750, %v2752
        %vm2756 = vc.u32 %v2750, %v2752
        %v2757 = vadd.s32 %v2753, 1
        %v2758 = vsel %vm2756, %v2757, %v2753
        %v2759 = vadd.s32 %v2754, %v2758
        %v2760 = vadd.s32 %v2759, 536870912
        %v2761 = vshrl.u32 %v2760, 30
        %v2762 = vshll.u32 %v2761, 30
        %v2763 = vsub.s32 %v2759, %v2762
        %vm2764 = vcmp.lt.s32.totalorder %v2763, 0
        %v2765 = vsub.s32 0, %v2763
        %v2766 = vsel %vm2764, %v2765, %v2763
        %v2767 = vclz %v2766
        %v2768 = vsub.s32 %v2767, 2
        %vm2769 = vcmp.gt.s32.totalorder 0, %v2768
        %v2770 = vsel %vm2769, 0, %v2768
        %v2771 = vsub.s32 32, %v2770
        %v2772 = vshll.u32 %v2763, %v2770
        %v2773 = vshrl.u32 %v2755, %v2771
        %v2774 = vor.u32 %v2772, %v2773
        %v2775 = vsub.s32 4294967266, %v2770
        %v2776 = vadd.s32 %v2775, 127
        %v2777 = vshll.u32 %v2776, 23
        %v2778 = vor.u32 4788187, %v2777
        %v2779 = vand.u32 2147483647, %v2778
        %v2781 = vcvt.s32.f32 %v2774
        %v2782 = vmul.f32 %v2781, %v2779
        %v2783 = vxor.u32 %v2782, 2147483648
        %v2784 = vsel %vm2701, %v2783, %v2782
        %v2785 = vsub.s32 4, %v2761
        %v2786 = vsel %vm2701, %v2785, %v2761
        %v2787 = vsel %vm2700, %v900, %v2784
        %v2788 = vsel %vm2700, 0, %v2786
        %v2789 = vcosq.f32.pop %v2787
        %v2790 = vsinq.f32.pop %v2787
        %vm2791 = vweird.f32 %v900
        %v2792 = vadd.s32 %v2788, 3
        %v2793 = vand.u32 %v2792, 3
        %vm2794 = vcmp.lt.s32.totalorder %v2793, 2
        %vm2795 = vcmp.eq.s32.totalorder %v2793, 0
        %v2796 = vxor.u32 %v2790, 2147483648
        %v2797 = vsel %vm2795, %v2789, %v2796
        %vm2798 = vcmp.eq.s32.totalorder %v2793, 2
        %v2799 = vxor.u32 %v2789, 2147483648
        %v2800 = vsel %vm2798, %v2799, %v2790
        %v2801 = vsel %vm2794, %v2797, %v2800
        %v2802 = vsel %vm2791, nan, %v2801
        %v2803 = vand.u32 2147483647, %v901
        %vm2804 = vcmp.le.f32.partialorder %v2803, 0.7853982
        %vm2805 = vcmp.lt.s32.totalorder %v901, 0
        %v2806 = vand.u32 %v901, 2139095040
        %v2807 = vshrl.u32 %v2806, 23
        %v2808 = vsub.s32 %v2807, 127
        %v2809 = vand.u32 2147483647, %v901
        %v2810 = vand.u32 %v2809, 8388607
        %v2811 = vor.u32 %v2810, 8388608
        %v2812 = vsub.s32 0, %v2811
        %v2813 = vadd.s32 %v2808, 1
        %vm2814 = vcmp.gt.s32.totalorder %v2813, 0
        %v2815 = vsel %vm2814, %v2813, 0
        %v2816 = vshrl.u32 %v2815, 5
        %v2817 = vand.u32 %v2815, 31
        %v2818 = vsub.s32 32, %v2817
        %v2819 = vshrl.u32 683565275, %v2818
        %v2820 = vshll.u32 683565275, %v2817
        %v2821 = vshrl.u32 2475754826, %v2818
        %v2822 = vor.u32 %v2820, %v2821
        %v2823 = vshll.u32 2475754826, %v2817
        %v2824 = vshrl.u32 2131351028, %v2818
        %v2825 = vor.u32 %v2823, %v2824
        %v2826 = vshll.u32 2131351028, %v2817
        %v2827 = vshrl.u32 2102212464, %v2818
        %v2828 = vor.u32 %v2826, %v2827
        %v2829 = vshll.u32 2102212464, %v2817
        %v2830 = vshrl.u32 920167782, %v2818
        %v2831 = vor.u32 %v2829, %v2830
        %v2832 = vshll.u32 920167782, %v2817
        %v2833 = vshrl.u32 1326507024, %v2818
        %v2834 = vor.u32 %v2832, %v2833
        %vm2835 = vcmp.lt.s32.totalorder %v2816, 1
        %vm2836 = vcmp.lt.s32.totalorder %v2816, 2
        %vm2837 = vcmp.lt.s32.totalorder %v2816, 3
        %vm2838 = vcmp.lt.s32.totalorder %v2816, 4
        %v2839 = vsel %vm2835, %v2819, %v2822
        %v2840 = vsel %vm2838, %v2828, 2102212464
        %v2841 = vsel %vm2837, %v2825, %v2840
        %v2842 = vsel %vm2836, %v2839, %v2841
        %v2843 = vsel %vm2835, %v2822, %v2825
        %v2844 = vsel %vm2838, %v2831, 920167782
        %v2845 = vsel %vm2837, %v2828, %v2844
        %v2846 = vsel %vm2836, %v2843, %v2845
        %v2847 = vsel %vm2835, %v2825, %v2828
        %v2848 = vsel %vm2838, %v2834, 1326507024
        %v2849 = vsel %vm2837, %v2831, %v2848
        %v2850 = vsel %vm2836, %v2847, %v2849
        %v2851 = vshll.u32 %v2811, 8
        %v2852 = vmul.u32.u64.compose %v2851, %v2850
        %v2853 = vextract.low.u32 %v2852
        %v2854 = vextract.high.u32 %v2852
        %v2855 = vmul.u32.u64.compose %v2851, %v2846
        %v2856 = vextract.low.u32 %v2855
        %v2857 = vextract.high.u32 %v2855
        %v2858 = vmul.u32 %v2851, %v2842
        %v2859 = vadd.s32 %v2854, %v2856
        %vm2860 = vc.u32 %v2854, %v2856
        %v2861 = vadd.s32 %v2857, 1
        %v2862 = vsel %vm2860, %v2861, %v2857
        %v2863 = vadd.s32 %v2858, %v2862
        %v2864 = vadd.s32 %v2863, 536870912
        %v2865 = vshrl.u32 %v2864, 30
        %v2866 = vshll.u32 %v2865, 30
        %v2867 = vsub.s32 %v2863, %v2866
        %vm2868 = vcmp.lt.s32.totalorder %v2867, 0
        %v2869 = vsub.s32 0, %v2867
        %v2870 = vsel %vm2868, %v2869, %v2867
        %v2871 = vclz %v2870
        %v2872 = vsub.s32 %v2871, 2
        %vm2873 = vcmp.gt.s32.totalorder 0, %v2872
        %v2874 = vsel %vm2873, 0, %v2872
        %v2875 = vsub.s32 32, %v2874
        %v2876 = vshll.u32 %v2867, %v2874
        %v2877 = vshrl.u32 %v2859, %v2875
        %v2878 = vor.u32 %v2876, %v2877
        %v2879 = vsub.s32 4294967266, %v2874
        %v2880 = vadd.s32 %v2879, 127
        %v2881 = vshll.u32 %v2880, 23
        %v2882 = vor.u32 4788187, %v2881
        %v2883 = vand.u32 2147483647, %v2882
        %v2885 = vcvt.s32.f32 %v2878
        %v2886 = vmul.f32 %v2885, %v2883
        %v2887 = vxor.u32 %v2886, 2147483648
        %v2888 = vsel %vm2805, %v2887, %v2886
        %v2889 = vsub.s32 4, %v2865
        %v2890 = vsel %vm2805, %v2889, %v2865
        %v2891 = vsel %vm2804, %v901, %v2888
        %v2892 = vsel %vm2804, 0, %v2890
        %v2893 = vcosq.f32.pop %v2891
        %v2894 = vsinq.f32.pop %v2891
        %vm2895 = vweird.f32 %v901
        %v2896 = vadd.s32 %v2892, 3
        %v2897 = vand.u32 %v2896, 3
        %vm2898 = vcmp.lt.s32.totalorder %v2897, 2
        %vm2899 = vcmp.eq.s32.totalorder %v2897, 0
        %v2900 = vxor.u32 %v2894, 2147483648
        %v2901 = vsel %vm2899, %v2893, %v2900
        %vm2902 = vcmp.eq.s32.totalorder %v2897, 2
        %v2903 = vxor.u32 %v2893, 2147483648
        %v2904 = vsel %vm2902, %v2903, %v2894
        %v2905 = vsel %vm2898, %v2901, %v2904
        %v2906 = vsel %vm2895, nan, %v2905
        %v2907 = vand.u32 2147483647, %v902
        %vm2908 = vcmp.le.f32.partialorder %v2907, 0.7853982
        %vm2909 = vcmp.lt.s32.totalorder %v902, 0
        %v2910 = vand.u32 %v902, 2139095040
        %v2911 = vshrl.u32 %v2910, 23
        %v2912 = vsub.s32 %v2911, 127
        %v2913 = vand.u32 2147483647, %v902
        %v2914 = vand.u32 %v2913, 8388607
        %v2915 = vor.u32 %v2914, 8388608
        %v2916 = vsub.s32 0, %v2915
        %v2917 = vadd.s32 %v2912, 1
        %vm2918 = vcmp.gt.s32.totalorder %v2917, 0
        %v2919 = vsel %vm2918, %v2917, 0
        %v2920 = vshrl.u32 %v2919, 5
        %v2921 = vand.u32 %v2919, 31
        %v2922 = vsub.s32 32, %v2921
        %v2923 = vshrl.u32 683565275, %v2922
        %v2924 = vshll.u32 683565275, %v2921
        %v2925 = vshrl.u32 2475754826, %v2922
        %v2926 = vor.u32 %v2924, %v2925
        %v2927 = vshll.u32 2475754826, %v2921
        %v2928 = vshrl.u32 2131351028, %v2922
        %v2929 = vor.u32 %v2927, %v2928
        %v2930 = vshll.u32 2131351028, %v2921
        %v2931 = vshrl.u32 2102212464, %v2922
        %v2932 = vor.u32 %v2930, %v2931
        %v2933 = vshll.u32 2102212464, %v2921
        %v2934 = vshrl.u32 920167782, %v2922
        %v2935 = vor.u32 %v2933, %v2934
        %v2936 = vshll.u32 920167782, %v2921
        %v2937 = vshrl.u32 1326507024, %v2922
        %v2938 = vor.u32 %v2936, %v2937
        %vm2939 = vcmp.lt.s32.totalorder %v2920, 1
        %vm2940 = vcmp.lt.s32.totalorder %v2920, 2
        %vm2941 = vcmp.lt.s32.totalorder %v2920, 3
        %vm2942 = vcmp.lt.s32.totalorder %v2920, 4
        %v2943 = vsel %vm2939, %v2923, %v2926
        %v2944 = vsel %vm2942, %v2932, 2102212464
        %v2945 = vsel %vm2941, %v2929, %v2944
        %v2946 = vsel %vm2940, %v2943, %v2945
        %v2947 = vsel %vm2939, %v2926, %v2929
        %v2948 = vsel %vm2942, %v2935, 920167782
        %v2949 = vsel %vm2941, %v2932, %v2948
        %v2950 = vsel %vm2940, %v2947, %v2949
        %v2951 = vsel %vm2939, %v2929, %v2932
        %v2952 = vsel %vm2942, %v2938, 1326507024
        %v2953 = vsel %vm2941, %v2935, %v2952
        %v2954 = vsel %vm2940, %v2951, %v2953
        %v2955 = vshll.u32 %v2915, 8
        %v2956 = vmul.u32.u64.compose %v2955, %v2954
        %v2957 = vextract.low.u32 %v2956
        %v2958 = vextract.high.u32 %v2956
        %v2959 = vmul.u32.u64.compose %v2955, %v2950
        %v2960 = vextract.low.u32 %v2959
        %v2961 = vextract.high.u32 %v2959
        %v2962 = vmul.u32 %v2955, %v2946
        %v2963 = vadd.s32 %v2958, %v2960
        %vm2964 = vc.u32 %v2958, %v2960
        %v2965 = vadd.s32 %v2961, 1
        %v2966 = vsel %vm2964, %v2965, %v2961
        %v2967 = vadd.s32 %v2962, %v2966
        %v2968 = vadd.s32 %v2967, 536870912
        %v2969 = vshrl.u32 %v2968, 30
        %v2970 = vshll.u32 %v2969, 30
        %v2971 = vsub.s32 %v2967, %v2970
        %vm2972 = vcmp.lt.s32.totalorder %v2971, 0
        %v2973 = vsub.s32 0, %v2971
        %v2974 = vsel %vm2972, %v2973, %v2971
        %v2975 = vclz %v2974
        %v2976 = vsub.s32 %v2975, 2
        %vm2977 = vcmp.gt.s32.totalorder 0, %v2976
        %v2978 = vsel %vm2977, 0, %v2976
        %v2979 = vsub.s32 32, %v2978
        %v2980 = vshll.u32 %v2971, %v2978
        %v2981 = vshrl.u32 %v2963, %v2979
        %v2982 = vor.u32 %v2980, %v2981
        %v2983 = vsub.s32 4294967266, %v2978
        %v2984 = vadd.s32 %v2983, 127
        %v2985 = vshll.u32 %v2984, 23
        %v2986 = vor.u32 4788187, %v2985
        %v2987 = vand.u32 2147483647, %v2986
        %v2989 = vcvt.s32.f32 %v2982
        %v2990 = vmul.f32 %v2989, %v2987
        %v2991 = vxor.u32 %v2990, 2147483648
        %v2992 = vsel %vm2909, %v2991, %v2990
        %v2993 = vsub.s32 4, %v2969
        %v2994 = vsel %vm2909, %v2993, %v2969
        %v2995 = vsel %vm2908, %v902, %v2992
        %v2996 = vsel %vm2908, 0, %v2994
        %v2997 = vcosq.f32.pop %v2995
        %v2998 = vsinq.f32.pop %v2995
        %vm2999 = vweird.f32 %v902
        %v3000 = vadd.s32 %v2996, 3
        %v3001 = vand.u32 %v3000, 3
        %vm3002 = vcmp.lt.s32.totalorder %v3001, 2
        %vm3003 = vcmp.eq.s32.totalorder %v3001, 0
        %v3004 = vxor.u32 %v2998, 2147483648
        %v3005 = vsel %vm3003, %v2997, %v3004
        %vm3006 = vcmp.eq.s32.totalorder %v3001, 2
        %v3007 = vxor.u32 %v2997, 2147483648
        %v3008 = vsel %vm3006, %v3007, %v2998
        %v3009 = vsel %vm3002, %v3005, %v3008
        %v3010 = vsel %vm2999, nan, %v3009
        %v3011 = vand.u32 2147483647, %v903
        %vm3012 = vcmp.le.f32.partialorder %v3011, 0.7853982
        %vm3013 = vcmp.lt.s32.totalorder %v903, 0
        %v3014 = vand.u32 %v903, 2139095040
        %v3015 = vshrl.u32 %v3014, 23
        %v3016 = vsub.s32 %v3015, 127
        %v3017 = vand.u32 2147483647, %v903
        %v3018 = vand.u32 %v3017, 8388607
        %v3019 = vor.u32 %v3018, 8388608
        %v3020 = vsub.s32 0, %v3019
        %v3021 = vadd.s32 %v3016, 1
        %vm3022 = vcmp.gt.s32.totalorder %v3021, 0
        %v3023 = vsel %vm3022, %v3021, 0
        %v3024 = vshrl.u32 %v3023, 5
        %v3025 = vand.u32 %v3023, 31
        %v3026 = vsub.s32 32, %v3025
        %v3027 = vshrl.u32 683565275, %v3026
        %v3028 = vshll.u32 683565275, %v3025
        %v3029 = vshrl.u32 2475754826, %v3026
        %v3030 = vor.u32 %v3028, %v3029
        %v3031 = vshll.u32 2475754826, %v3025
        %v3032 = vshrl.u32 2131351028, %v3026
        %v3033 = vor.u32 %v3031, %v3032
        %v3034 = vshll.u32 2131351028, %v3025
        %v3035 = vshrl.u32 2102212464, %v3026
        %v3036 = vor.u32 %v3034, %v3035
        %v3037 = vshll.u32 2102212464, %v3025
        %v3038 = vshrl.u32 920167782, %v3026
        %v3039 = vor.u32 %v3037, %v3038
        %v3040 = vshll.u32 920167782, %v3025
        %v3041 = vshrl.u32 1326507024, %v3026
        %v3042 = vor.u32 %v3040, %v3041
        %vm3043 = vcmp.lt.s32.totalorder %v3024, 1
        %vm3044 = vcmp.lt.s32.totalorder %v3024, 2
        %vm3045 = vcmp.lt.s32.totalorder %v3024, 3
        %vm3046 = vcmp.lt.s32.totalorder %v3024, 4
        %v3047 = vsel %vm3043, %v3027, %v3030
        %v3048 = vsel %vm3046, %v3036, 2102212464
        %v3049 = vsel %vm3045, %v3033, %v3048
        %v3050 = vsel %vm3044, %v3047, %v3049
        %v3051 = vsel %vm3043, %v3030, %v3033
        %v3052 = vsel %vm3046, %v3039, 920167782
        %v3053 = vsel %vm3045, %v3036, %v3052
        %v3054 = vsel %vm3044, %v3051, %v3053
        %v3055 = vsel %vm3043, %v3033, %v3036
        %v3056 = vsel %vm3046, %v3042, 1326507024
        %v3057 = vsel %vm3045, %v3039, %v3056
        %v3058 = vsel %vm3044, %v3055, %v3057
        %v3059 = vshll.u32 %v3019, 8
        %v3060 = vmul.u32.u64.compose %v3059, %v3058
        %v3061 = vextract.low.u32 %v3060
        %v3062 = vextract.high.u32 %v3060
        %v3063 = vmul.u32.u64.compose %v3059, %v3054
        %v3064 = vextract.low.u32 %v3063
        %v3065 = vextract.high.u32 %v3063
        %v3066 = vmul.u32 %v3059, %v3050
        %v3067 = vadd.s32 %v3062, %v3064
        %vm3068 = vc.u32 %v3062, %v3064
        %v3069 = vadd.s32 %v3065, 1
        %v3070 = vsel %vm3068, %v3069, %v3065
        %v3071 = vadd.s32 %v3066, %v3070
        %v3072 = vadd.s32 %v3071, 536870912
        %v3073 = vshrl.u32 %v3072, 30
        %v3074 = vshll.u32 %v3073, 30
        %v3075 = vsub.s32 %v3071, %v3074
        %vm3076 = vcmp.lt.s32.totalorder %v3075, 0
        %v3077 = vsub.s32 0, %v3075
        %v3078 = vsel %vm3076, %v3077, %v3075
        %v3079 = vclz %v3078
        %v3080 = vsub.s32 %v3079, 2
        %vm3081 = vcmp.gt.s32.totalorder 0, %v3080
        %v3082 = vsel %vm3081, 0, %v3080
        %v3083 = vsub.s32 32, %v3082
        %v3084 = vshll.u32 %v3075, %v3082
        %v3085 = vshrl.u32 %v3067, %v3083
        %v3086 = vor.u32 %v3084, %v3085
        %v3087 = vsub.s32 4294967266, %v3082
        %v3088 = vadd.s32 %v3087, 127
        %v3089 = vshll.u32 %v3088, 23
        %v3090 = vor.u32 4788187, %v3089
        %v3091 = vand.u32 2147483647, %v3090
        %v3093 = vcvt.s32.f32 %v3086
        %v3094 = vmul.f32 %v3093, %v3091
        %v3095 = vxor.u32 %v3094, 2147483648
        %v3096 = vsel %vm3013, %v3095, %v3094
        %v3097 = vsub.s32 4, %v3073
        %v3098 = vsel %vm3013, %v3097, %v3073
        %v3099 = vsel %vm3012, %v903, %v3096
        %v3100 = vsel %vm3012, 0, %v3098
        %v3101 = vcosq.f32.pop %v3099
        %v3102 = vsinq.f32.pop %v3099
        %vm3103 = vweird.f32 %v903
        %v3104 = vadd.s32 %v3100, 3
        %v3105 = vand.u32 %v3104, 3
        %vm3106 = vcmp.lt.s32.totalorder %v3105, 2
        %vm3107 = vcmp.eq.s32.totalorder %v3105, 0
        %v3108 = vxor.u32 %v3102, 2147483648
        %v3109 = vsel %vm3107, %v3101, %v3108
        %vm3110 = vcmp.eq.s32.totalorder %v3105, 2
        %v3111 = vxor.u32 %v3101, 2147483648
        %v3112 = vsel %vm3110, %v3111, %v3102
        %v3113 = vsel %vm3106, %v3109, %v3112
        %v3114 = vsel %vm3103, nan, %v3113
        %v3115 = vand.u32 2147483647, %v904
        %vm3116 = vcmp.le.f32.partialorder %v3115, 0.7853982
        %vm3117 = vcmp.lt.s32.totalorder %v904, 0
        %v3118 = vand.u32 %v904, 2139095040
        %v3119 = vshrl.u32 %v3118, 23
        %v3120 = vsub.s32 %v3119, 127
        %v3121 = vand.u32 2147483647, %v904
        %v3122 = vand.u32 %v3121, 8388607
        %v3123 = vor.u32 %v3122, 8388608
        %v3124 = vsub.s32 0, %v3123
        %v3125 = vadd.s32 %v3120, 1
        %vm3126 = vcmp.gt.s32.totalorder %v3125, 0
        %v3127 = vsel %vm3126, %v3125, 0
        %v3128 = vshrl.u32 %v3127, 5
        %v3129 = vand.u32 %v3127, 31
        %v3130 = vsub.s32 32, %v3129
        %v3131 = vshrl.u32 683565275, %v3130
        %v3132 = vshll.u32 683565275, %v3129
        %v3133 = vshrl.u32 2475754826, %v3130
        %v3134 = vor.u32 %v3132, %v3133
        %v3135 = vshll.u32 2475754826, %v3129
        %v3136 = vshrl.u32 2131351028, %v3130
        %v3137 = vor.u32 %v3135, %v3136
        %v3138 = vshll.u32 2131351028, %v3129
        %v3139 = vshrl.u32 2102212464, %v3130
        %v3140 = vor.u32 %v3138, %v3139
        %v3141 = vshll.u32 2102212464, %v3129
        %v3142 = vshrl.u32 920167782, %v3130
        %v3143 = vor.u32 %v3141, %v3142
        %v3144 = vshll.u32 920167782, %v3129
        %v3145 = vshrl.u32 1326507024, %v3130
        %v3146 = vor.u32 %v3144, %v3145
        %vm3147 = vcmp.lt.s32.totalorder %v3128, 1
        %vm3148 = vcmp.lt.s32.totalorder %v3128, 2
        %vm3149 = vcmp.lt.s32.totalorder %v3128, 3
        %vm3150 = vcmp.lt.s32.totalorder %v3128, 4
        %v3151 = vsel %vm3147, %v3131, %v3134
        %v3152 = vsel %vm3150, %v3140, 2102212464
        %v3153 = vsel %vm3149, %v3137, %v3152
        %v3154 = vsel %vm3148, %v3151, %v3153
        %v3155 = vsel %vm3147, %v3134, %v3137
        %v3156 = vsel %vm3150, %v3143, 920167782
        %v3157 = vsel %vm3149, %v3140, %v3156
        %v3158 = vsel %vm3148, %v3155, %v3157
        %v3159 = vsel %vm3147, %v3137, %v3140
        %v3160 = vsel %vm3150, %v3146, 1326507024
        %v3161 = vsel %vm3149, %v3143, %v3160
        %v3162 = vsel %vm3148, %v3159, %v3161
        %v3163 = vshll.u32 %v3123, 8
        %v3164 = vmul.u32.u64.compose %v3163, %v3162
        %v3165 = vextract.low.u32 %v3164
        %v3166 = vextract.high.u32 %v3164
        %v3167 = vmul.u32.u64.compose %v3163, %v3158
        %v3168 = vextract.low.u32 %v3167
        %v3169 = vextract.high.u32 %v3167
        %v3170 = vmul.u32 %v3163, %v3154
        %v3171 = vadd.s32 %v3166, %v3168
        %vm3172 = vc.u32 %v3166, %v3168
        %v3173 = vadd.s32 %v3169, 1
        %v3174 = vsel %vm3172, %v3173, %v3169
        %v3175 = vadd.s32 %v3170, %v3174
        %v3176 = vadd.s32 %v3175, 536870912
        %v3177 = vshrl.u32 %v3176, 30
        %v3178 = vshll.u32 %v3177, 30
        %v3179 = vsub.s32 %v3175, %v3178
        %vm3180 = vcmp.lt.s32.totalorder %v3179, 0
        %v3181 = vsub.s32 0, %v3179
        %v3182 = vsel %vm3180, %v3181, %v3179
        %v3183 = vclz %v3182
        %v3184 = vsub.s32 %v3183, 2
        %vm3185 = vcmp.gt.s32.totalorder 0, %v3184
        %v3186 = vsel %vm3185, 0, %v3184
        %v3187 = vsub.s32 32, %v3186
        %v3188 = vshll.u32 %v3179, %v3186
        %v3189 = vshrl.u32 %v3171, %v3187
        %v3190 = vor.u32 %v3188, %v3189
        %v3191 = vsub.s32 4294967266, %v3186
        %v3192 = vadd.s32 %v3191, 127
        %v3193 = vshll.u32 %v3192, 23
        %v3194 = vor.u32 4788187, %v3193
        %v3195 = vand.u32 2147483647, %v3194
        %v3197 = vcvt.s32.f32 %v3190
        %v3198 = vmul.f32 %v3197, %v3195
        %v3199 = vxor.u32 %v3198, 2147483648
        %v3200 = vsel %vm3117, %v3199, %v3198
        %v3201 = vsub.s32 4, %v3177
        %v3202 = vsel %vm3117, %v3201, %v3177
        %v3203 = vsel %vm3116, %v904, %v3200
        %v3204 = vsel %vm3116, 0, %v3202
        %v3205 = vcosq.f32.pop %v3203
        %v3206 = vsinq.f32.pop %v3203
        %vm3207 = vweird.f32 %v904
        %v3208 = vadd.s32 %v3204, 3
        %v3209 = vand.u32 %v3208, 3
        %vm3210 = vcmp.lt.s32.totalorder %v3209, 2
        %vm3211 = vcmp.eq.s32.totalorder %v3209, 0
        %v3212 = vxor.u32 %v3206, 2147483648
        %v3213 = vsel %vm3211, %v3205, %v3212
        %vm3214 = vcmp.eq.s32.totalorder %v3209, 2
        %v3215 = vxor.u32 %v3205, 2147483648
        %v3216 = vsel %vm3214, %v3215, %v3206
        %v3217 = vsel %vm3210, %v3213, %v3216
        %v3218 = vsel %vm3207, nan, %v3217
        %v3219 = vand.u32 2147483647, %v905
        %vm3220 = vcmp.le.f32.partialorder %v3219, 0.7853982
        %vm3221 = vcmp.lt.s32.totalorder %v905, 0
        %v3222 = vand.u32 %v905, 2139095040
        %v3223 = vshrl.u32 %v3222, 23
        %v3224 = vsub.s32 %v3223, 127
        %v3225 = vand.u32 2147483647, %v905
        %v3226 = vand.u32 %v3225, 8388607
        %v3227 = vor.u32 %v3226, 8388608
        %v3228 = vsub.s32 0, %v3227
        %v3229 = vadd.s32 %v3224, 1
        %vm3230 = vcmp.gt.s32.totalorder %v3229, 0
        %v3231 = vsel %vm3230, %v3229, 0
        %v3232 = vshrl.u32 %v3231, 5
        %v3233 = vand.u32 %v3231, 31
        %v3234 = vsub.s32 32, %v3233
        %v3235 = vshrl.u32 683565275, %v3234
        %v3236 = vshll.u32 683565275, %v3233
        %v3237 = vshrl.u32 2475754826, %v3234
        %v3238 = vor.u32 %v3236, %v3237
        %v3239 = vshll.u32 2475754826, %v3233
        %v3240 = vshrl.u32 2131351028, %v3234
        %v3241 = vor.u32 %v3239, %v3240
        %v3242 = vshll.u32 2131351028, %v3233
        %v3243 = vshrl.u32 2102212464, %v3234
        %v3244 = vor.u32 %v3242, %v3243
        %v3245 = vshll.u32 2102212464, %v3233
        %v3246 = vshrl.u32 920167782, %v3234
        %v3247 = vor.u32 %v3245, %v3246
        %v3248 = vshll.u32 920167782, %v3233
        %v3249 = vshrl.u32 1326507024, %v3234
        %v3250 = vor.u32 %v3248, %v3249
        %vm3251 = vcmp.lt.s32.totalorder %v3232, 1
        %vm3252 = vcmp.lt.s32.totalorder %v3232, 2
        %vm3253 = vcmp.lt.s32.totalorder %v3232, 3
        %vm3254 = vcmp.lt.s32.totalorder %v3232, 4
        %v3255 = vsel %vm3251, %v3235, %v3238
        %v3256 = vsel %vm3254, %v3244, 2102212464
        %v3257 = vsel %vm3253, %v3241, %v3256
        %v3258 = vsel %vm3252, %v3255, %v3257
        %v3259 = vsel %vm3251, %v3238, %v3241
        %v3260 = vsel %vm3254, %v3247, 920167782
        %v3261 = vsel %vm3253, %v3244, %v3260
        %v3262 = vsel %vm3252, %v3259, %v3261
        %v3263 = vsel %vm3251, %v3241, %v3244
        %v3264 = vsel %vm3254, %v3250, 1326507024
        %v3265 = vsel %vm3253, %v3247, %v3264
        %v3266 = vsel %vm3252, %v3263, %v3265
        %v3267 = vshll.u32 %v3227, 8
        %v3268 = vmul.u32.u64.compose %v3267, %v3266
        %v3269 = vextract.low.u32 %v3268
        %v3270 = vextract.high.u32 %v3268
        %v3271 = vmul.u32.u64.compose %v3267, %v3262
        %v3272 = vextract.low.u32 %v3271
        %v3273 = vextract.high.u32 %v3271
        %v3274 = vmul.u32 %v3267, %v3258
        %v3275 = vadd.s32 %v3270, %v3272
        %vm3276 = vc.u32 %v3270, %v3272
        %v3277 = vadd.s32 %v3273, 1
        %v3278 = vsel %vm3276, %v3277, %v3273
        %v3279 = vadd.s32 %v3274, %v3278
        %v3280 = vadd.s32 %v3279, 536870912
        %v3281 = vshrl.u32 %v3280, 30
        %v3282 = vshll.u32 %v3281, 30
        %v3283 = vsub.s32 %v3279, %v3282
        %vm3284 = vcmp.lt.s32.totalorder %v3283, 0
        %v3285 = vsub.s32 0, %v3283
        %v3286 = vsel %vm3284, %v3285, %v3283
        %v3287 = vclz %v3286
        %v3288 = vsub.s32 %v3287, 2
        %vm3289 = vcmp.gt.s32.totalorder 0, %v3288
        %v3290 = vsel %vm3289, 0, %v3288
        %v3291 = vsub.s32 32, %v3290
        %v3292 = vshll.u32 %v3283, %v3290
        %v3293 = vshrl.u32 %v3275, %v3291
        %v3294 = vor.u32 %v3292, %v3293
        %v3295 = vsub.s32 4294967266, %v3290
        %v3296 = vadd.s32 %v3295, 127
        %v3297 = vshll.u32 %v3296, 23
        %v3298 = vor.u32 4788187, %v3297
        %v3299 = vand.u32 2147483647, %v3298
        %v3301 = vcvt.s32.f32 %v3294
        %v3302 = vmul.f32 %v3301, %v3299
        %v3303 = vxor.u32 %v3302, 2147483648
        %v3304 = vsel %vm3221, %v3303, %v3302
        %v3305 = vsub.s32 4, %v3281
        %v3306 = vsel %vm3221, %v3305, %v3281
        %v3307 = vsel %vm3220, %v905, %v3304
        %v3308 = vsel %vm3220, 0, %v3306
        %v3309 = vcosq.f32.pop %v3307
        %v3310 = vsinq.f32.pop %v3307
        %vm3311 = vweird.f32 %v905
        %v3312 = vadd.s32 %v3308, 3
        %v3313 = vand.u32 %v3312, 3
        %vm3314 = vcmp.lt.s32.totalorder %v3313, 2
        %vm3315 = vcmp.eq.s32.totalorder %v3313, 0
        %v3316 = vxor.u32 %v3310, 2147483648
        %v3317 = vsel %vm3315, %v3309, %v3316
        %vm3318 = vcmp.eq.s32.totalorder %v3313, 2
        %v3319 = vxor.u32 %v3309, 2147483648
        %v3320 = vsel %vm3318, %v3319, %v3310
        %v3321 = vsel %vm3314, %v3317, %v3320
        %v3322 = vsel %vm3311, nan, %v3321
        %v3323 = vand.u32 2147483647, %v906
        %vm3324 = vcmp.le.f32.partialorder %v3323, 0.7853982
        %vm3325 = vcmp.lt.s32.totalorder %v906, 0
        %v3326 = vand.u32 %v906, 2139095040
        %v3327 = vshrl.u32 %v3326, 23
        %v3328 = vsub.s32 %v3327, 127
        %v3329 = vand.u32 2147483647, %v906
        %v3330 = vand.u32 %v3329, 8388607
        %v3331 = vor.u32 %v3330, 8388608
        %v3332 = vsub.s32 0, %v3331
        %v3333 = vadd.s32 %v3328, 1
        %vm3334 = vcmp.gt.s32.totalorder %v3333, 0
        %v3335 = vsel %vm3334, %v3333, 0
        %v3336 = vshrl.u32 %v3335, 5
        %v3337 = vand.u32 %v3335, 31
        %v3338 = vsub.s32 32, %v3337
        %v3339 = vshrl.u32 683565275, %v3338
        %v3340 = vshll.u32 683565275, %v3337
        %v3341 = vshrl.u32 2475754826, %v3338
        %v3342 = vor.u32 %v3340, %v3341
        %v3343 = vshll.u32 2475754826, %v3337
        %v3344 = vshrl.u32 2131351028, %v3338
        %v3345 = vor.u32 %v3343, %v3344
        %v3346 = vshll.u32 2131351028, %v3337
        %v3347 = vshrl.u32 2102212464, %v3338
        %v3348 = vor.u32 %v3346, %v3347
        %v3349 = vshll.u32 2102212464, %v3337
        %v3350 = vshrl.u32 920167782, %v3338
        %v3351 = vor.u32 %v3349, %v3350
        %v3352 = vshll.u32 920167782, %v3337
        %v3353 = vshrl.u32 1326507024, %v3338
        %v3354 = vor.u32 %v3352, %v3353
        %vm3355 = vcmp.lt.s32.totalorder %v3336, 1
        %vm3356 = vcmp.lt.s32.totalorder %v3336, 2
        %vm3357 = vcmp.lt.s32.totalorder %v3336, 3
        %vm3358 = vcmp.lt.s32.totalorder %v3336, 4
        %v3359 = vsel %vm3355, %v3339, %v3342
        %v3360 = vsel %vm3358, %v3348, 2102212464
        %v3361 = vsel %vm3357, %v3345, %v3360
        %v3362 = vsel %vm3356, %v3359, %v3361
        %v3363 = vsel %vm3355, %v3342, %v3345
        %v3364 = vsel %vm3358, %v3351, 920167782
        %v3365 = vsel %vm3357, %v3348, %v3364
        %v3366 = vsel %vm3356, %v3363, %v3365
        %v3367 = vsel %vm3355, %v3345, %v3348
        %v3368 = vsel %vm3358, %v3354, 1326507024
        %v3369 = vsel %vm3357, %v3351, %v3368
        %v3370 = vsel %vm3356, %v3367, %v3369
        %v3371 = vshll.u32 %v3331, 8
        %v3372 = vmul.u32.u64.compose %v3371, %v3370
        %v3373 = vextract.low.u32 %v3372
        %v3374 = vextract.high.u32 %v3372
        %v3375 = vmul.u32.u64.compose %v3371, %v3366
        %v3376 = vextract.low.u32 %v3375
        %v3377 = vextract.high.u32 %v3375
        %v3378 = vmul.u32 %v3371, %v3362
        %v3379 = vadd.s32 %v3374, %v3376
        %vm3380 = vc.u32 %v3374, %v3376
        %v3381 = vadd.s32 %v3377, 1
        %v3382 = vsel %vm3380, %v3381, %v3377
        %v3383 = vadd.s32 %v3378, %v3382
        %v3384 = vadd.s32 %v3383, 536870912
        %v3385 = vshrl.u32 %v3384, 30
        %v3386 = vshll.u32 %v3385, 30
        %v3387 = vsub.s32 %v3383, %v3386
        %vm3388 = vcmp.lt.s32.totalorder %v3387, 0
        %v3389 = vsub.s32 0, %v3387
        %v3390 = vsel %vm3388, %v3389, %v3387
        %v3391 = vclz %v3390
        %v3392 = vsub.s32 %v3391, 2
        %vm3393 = vcmp.gt.s32.totalorder 0, %v3392
        %v3394 = vsel %vm3393, 0, %v3392
        %v3395 = vsub.s32 32, %v3394
        %v3396 = vshll.u32 %v3387, %v3394
        %v3397 = vshrl.u32 %v3379, %v3395
        %v3398 = vor.u32 %v3396, %v3397
        %v3399 = vsub.s32 4294967266, %v3394
        %v3400 = vadd.s32 %v3399, 127
        %v3401 = vshll.u32 %v3400, 23
        %v3402 = vor.u32 4788187, %v3401
        %v3403 = vand.u32 2147483647, %v3402
        %v3405 = vcvt.s32.f32 %v3398
        %v3406 = vmul.f32 %v3405, %v3403
        %v3407 = vxor.u32 %v3406, 2147483648
        %v3408 = vsel %vm3325, %v3407, %v3406
        %v3409 = vsub.s32 4, %v3385
        %v3410 = vsel %vm3325, %v3409, %v3385
        %v3411 = vsel %vm3324, %v906, %v3408
        %v3412 = vsel %vm3324, 0, %v3410
        %v3413 = vcosq.f32.pop %v3411
        %v3414 = vsinq.f32.pop %v3411
        %vm3415 = vweird.f32 %v906
        %v3416 = vadd.s32 %v3412, 3
        %v3417 = vand.u32 %v3416, 3
        %vm3418 = vcmp.lt.s32.totalorder %v3417, 2
        %vm3419 = vcmp.eq.s32.totalorder %v3417, 0
        %v3420 = vxor.u32 %v3414, 2147483648
        %v3421 = vsel %vm3419, %v3413, %v3420
        %vm3422 = vcmp.eq.s32.totalorder %v3417, 2
        %v3423 = vxor.u32 %v3413, 2147483648
        %v3424 = vsel %vm3422, %v3423, %v3414
        %v3425 = vsel %vm3418, %v3421, %v3424
        %v3426 = vsel %vm3415, nan, %v3425
        %v3427 = vand.u32 2147483647, %v907
        %vm3428 = vcmp.le.f32.partialorder %v3427, 0.7853982
        %vm3429 = vcmp.lt.s32.totalorder %v907, 0
        %v3430 = vand.u32 %v907, 2139095040
        %v3431 = vshrl.u32 %v3430, 23
        %v3432 = vsub.s32 %v3431, 127
        %v3433 = vand.u32 2147483647, %v907
        %v3434 = vand.u32 %v3433, 8388607
        %v3435 = vor.u32 %v3434, 8388608
        %v3436 = vsub.s32 0, %v3435
        %v3437 = vadd.s32 %v3432, 1
        %vm3438 = vcmp.gt.s32.totalorder %v3437, 0
        %v3439 = vsel %vm3438, %v3437, 0
        %v3440 = vshrl.u32 %v3439, 5
        %v3441 = vand.u32 %v3439, 31
        %v3442 = vsub.s32 32, %v3441
        %v3443 = vshrl.u32 683565275, %v3442
        %v3444 = vshll.u32 683565275, %v3441
        %v3445 = vshrl.u32 2475754826, %v3442
        %v3446 = vor.u32 %v3444, %v3445
        %v3447 = vshll.u32 2475754826, %v3441
        %v3448 = vshrl.u32 2131351028, %v3442
        %v3449 = vor.u32 %v3447, %v3448
        %v3450 = vshll.u32 2131351028, %v3441
        %v3451 = vshrl.u32 2102212464, %v3442
        %v3452 = vor.u32 %v3450, %v3451
        %v3453 = vshll.u32 2102212464, %v3441
        %v3454 = vshrl.u32 920167782, %v3442
        %v3455 = vor.u32 %v3453, %v3454
        %v3456 = vshll.u32 920167782, %v3441
        %v3457 = vshrl.u32 1326507024, %v3442
        %v3458 = vor.u32 %v3456, %v3457
        %vm3459 = vcmp.lt.s32.totalorder %v3440, 1
        %vm3460 = vcmp.lt.s32.totalorder %v3440, 2
        %vm3461 = vcmp.lt.s32.totalorder %v3440, 3
        %vm3462 = vcmp.lt.s32.totalorder %v3440, 4
        %v3463 = vsel %vm3459, %v3443, %v3446
        %v3464 = vsel %vm3462, %v3452, 2102212464
        %v3465 = vsel %vm3461, %v3449, %v3464
        %v3466 = vsel %vm3460, %v3463, %v3465
        %v3467 = vsel %vm3459, %v3446, %v3449
        %v3468 = vsel %vm3462, %v3455, 920167782
        %v3469 = vsel %vm3461, %v3452, %v3468
        %v3470 = vsel %vm3460, %v3467, %v3469
        %v3471 = vsel %vm3459, %v3449, %v3452
        %v3472 = vsel %vm3462, %v3458, 1326507024
        %v3473 = vsel %vm3461, %v3455, %v3472
        %v3474 = vsel %vm3460, %v3471, %v3473
        %v3475 = vshll.u32 %v3435, 8
        %v3476 = vmul.u32.u64.compose %v3475, %v3474
        %v3477 = vextract.low.u32 %v3476
        %v3478 = vextract.high.u32 %v3476
        %v3479 = vmul.u32.u64.compose %v3475, %v3470
        %v3480 = vextract.low.u32 %v3479
        %v3481 = vextract.high.u32 %v3479
        %v3482 = vmul.u32 %v3475, %v3466
        %v3483 = vadd.s32 %v3478, %v3480
        %vm3484 = vc.u32 %v3478, %v3480
        %v3485 = vadd.s32 %v3481, 1
        %v3486 = vsel %vm3484, %v3485, %v3481
        %v3487 = vadd.s32 %v3482, %v3486
        %v3488 = vadd.s32 %v3487, 536870912
        %v3489 = vshrl.u32 %v3488, 30
        %v3490 = vshll.u32 %v3489, 30
        %v3491 = vsub.s32 %v3487, %v3490
        %vm3492 = vcmp.lt.s32.totalorder %v3491, 0
        %v3493 = vsub.s32 0, %v3491
        %v3494 = vsel %vm3492, %v3493, %v3491
        %v3495 = vclz %v3494
        %v3496 = vsub.s32 %v3495, 2
        %vm3497 = vcmp.gt.s32.totalorder 0, %v3496
        %v3498 = vsel %vm3497, 0, %v3496
        %v3499 = vsub.s32 32, %v3498
        %v3500 = vshll.u32 %v3491, %v3498
        %v3501 = vshrl.u32 %v3483, %v3499
        %v3502 = vor.u32 %v3500, %v3501
        %v3503 = vsub.s32 4294967266, %v3498
        %v3504 = vadd.s32 %v3503, 127
        %v3505 = vshll.u32 %v3504, 23
        %v3506 = vor.u32 4788187, %v3505
        %v3507 = vand.u32 2147483647, %v3506
        %v3509 = vcvt.s32.f32 %v3502
        %v3510 = vmul.f32 %v3509, %v3507
        %v3511 = vxor.u32 %v3510, 2147483648
        %v3512 = vsel %vm3429, %v3511, %v3510
        %v3513 = vsub.s32 4, %v3489
        %v3514 = vsel %vm3429, %v3513, %v3489
        %v3515 = vsel %vm3428, %v907, %v3512
        %v3516 = vsel %vm3428, 0, %v3514
        %v3517 = vcosq.f32.pop %v3515
        %v3518 = vsinq.f32.pop %v3515
        %vm3519 = vweird.f32 %v907
        %v3520 = vadd.s32 %v3516, 3
        %v3521 = vand.u32 %v3520, 3
        %vm3522 = vcmp.lt.s32.totalorder %v3521, 2
        %vm3523 = vcmp.eq.s32.totalorder %v3521, 0
        %v3524 = vxor.u32 %v3518, 2147483648
        %v3525 = vsel %vm3523, %v3517, %v3524
        %vm3526 = vcmp.eq.s32.totalorder %v3521, 2
        %v3527 = vxor.u32 %v3517, 2147483648
        %v3528 = vsel %vm3526, %v3527, %v3518
        %v3529 = vsel %vm3522, %v3525, %v3528
        %v3530 = vsel %vm3519, nan, %v3529
        %v3531 = vand.u32 2147483647, %v908
        %vm3532 = vcmp.le.f32.partialorder %v3531, 0.7853982
        %vm3533 = vcmp.lt.s32.totalorder %v908, 0
        %v3534 = vand.u32 %v908, 2139095040
        %v3535 = vshrl.u32 %v3534, 23
        %v3536 = vsub.s32 %v3535, 127
        %v3537 = vand.u32 2147483647, %v908
        %v3538 = vand.u32 %v3537, 8388607
        %v3539 = vor.u32 %v3538, 8388608
        %v3540 = vsub.s32 0, %v3539
        %v3541 = vadd.s32 %v3536, 1
        %vm3542 = vcmp.gt.s32.totalorder %v3541, 0
        %v3543 = vsel %vm3542, %v3541, 0
        %v3544 = vshrl.u32 %v3543, 5
        %v3545 = vand.u32 %v3543, 31
        %v3546 = vsub.s32 32, %v3545
        %v3547 = vshrl.u32 683565275, %v3546
        %v3548 = vshll.u32 683565275, %v3545
        %v3549 = vshrl.u32 2475754826, %v3546
        %v3550 = vor.u32 %v3548, %v3549
        %v3551 = vshll.u32 2475754826, %v3545
        %v3552 = vshrl.u32 2131351028, %v3546
        %v3553 = vor.u32 %v3551, %v3552
        %v3554 = vshll.u32 2131351028, %v3545
        %v3555 = vshrl.u32 2102212464, %v3546
        %v3556 = vor.u32 %v3554, %v3555
        %v3557 = vshll.u32 2102212464, %v3545
        %v3558 = vshrl.u32 920167782, %v3546
        %v3559 = vor.u32 %v3557, %v3558
        %v3560 = vshll.u32 920167782, %v3545
        %v3561 = vshrl.u32 1326507024, %v3546
        %v3562 = vor.u32 %v3560, %v3561
        %vm3563 = vcmp.lt.s32.totalorder %v3544, 1
        %vm3564 = vcmp.lt.s32.totalorder %v3544, 2
        %vm3565 = vcmp.lt.s32.totalorder %v3544, 3
        %vm3566 = vcmp.lt.s32.totalorder %v3544, 4
        %v3567 = vsel %vm3563, %v3547, %v3550
        %v3568 = vsel %vm3566, %v3556, 2102212464
        %v3569 = vsel %vm3565, %v3553, %v3568
        %v3570 = vsel %vm3564, %v3567, %v3569
        %v3571 = vsel %vm3563, %v3550, %v3553
        %v3572 = vsel %vm3566, %v3559, 920167782
        %v3573 = vsel %vm3565, %v3556, %v3572
        %v3574 = vsel %vm3564, %v3571, %v3573
        %v3575 = vsel %vm3563, %v3553, %v3556
        %v3576 = vsel %vm3566, %v3562, 1326507024
        %v3577 = vsel %vm3565, %v3559, %v3576
        %v3578 = vsel %vm3564, %v3575, %v3577
        %v3579 = vshll.u32 %v3539, 8
        %v3580 = vmul.u32.u64.compose %v3579, %v3578
        %v3581 = vextract.low.u32 %v3580
        %v3582 = vextract.high.u32 %v3580
        %v3583 = vmul.u32.u64.compose %v3579, %v3574
        %v3584 = vextract.low.u32 %v3583
        %v3585 = vextract.high.u32 %v3583
        %v3586 = vmul.u32 %v3579, %v3570
        %v3587 = vadd.s32 %v3582, %v3584
        %vm3588 = vc.u32 %v3582, %v3584
        %v3589 = vadd.s32 %v3585, 1
        %v3590 = vsel %vm3588, %v3589, %v3585
        %v3591 = vadd.s32 %v3586, %v3590
        %v3592 = vadd.s32 %v3591, 536870912
        %v3593 = vshrl.u32 %v3592, 30
        %v3594 = vshll.u32 %v3593, 30
        %v3595 = vsub.s32 %v3591, %v3594
        %vm3596 = vcmp.lt.s32.totalorder %v3595, 0
        %v3597 = vsub.s32 0, %v3595
        %v3598 = vsel %vm3596, %v3597, %v3595
        %v3599 = vclz %v3598
        %v3600 = vsub.s32 %v3599, 2
        %vm3601 = vcmp.gt.s32.totalorder 0, %v3600
        %v3602 = vsel %vm3601, 0, %v3600
        %v3603 = vsub.s32 32, %v3602
        %v3604 = vshll.u32 %v3595, %v3602
        %v3605 = vshrl.u32 %v3587, %v3603
        %v3606 = vor.u32 %v3604, %v3605
        %v3607 = vsub.s32 4294967266, %v3602
        %v3608 = vadd.s32 %v3607, 127
        %v3609 = vshll.u32 %v3608, 23
        %v3610 = vor.u32 4788187, %v3609
        %v3611 = vand.u32 2147483647, %v3610
        %v3613 = vcvt.s32.f32 %v3606
        %v3614 = vmul.f32 %v3613, %v3611
        %v3615 = vxor.u32 %v3614, 2147483648
        %v3616 = vsel %vm3533, %v3615, %v3614
        %v3617 = vsub.s32 4, %v3593
        %v3618 = vsel %vm3533, %v3617, %v3593
        %v3619 = vsel %vm3532, %v908, %v3616
        %v3620 = vsel %vm3532, 0, %v3618
        %v3621 = vcosq.f32.pop %v3619
        %v3622 = vsinq.f32.pop %v3619
        %vm3623 = vweird.f32 %v908
        %v3624 = vadd.s32 %v3620, 3
        %v3625 = vand.u32 %v3624, 3
        %vm3626 = vcmp.lt.s32.totalorder %v3625, 2
        %vm3627 = vcmp.eq.s32.totalorder %v3625, 0
        %v3628 = vxor.u32 %v3622, 2147483648
        %v3629 = vsel %vm3627, %v3621, %v3628
        %vm3630 = vcmp.eq.s32.totalorder %v3625, 2
        %v3631 = vxor.u32 %v3621, 2147483648
        %v3632 = vsel %vm3630, %v3631, %v3622
        %v3633 = vsel %vm3626, %v3629, %v3632
        %v3634 = vsel %vm3623, nan, %v3633
        %v3635 = vand.u32 2147483647, %v909
        %vm3636 = vcmp.le.f32.partialorder %v3635, 0.7853982
        %vm3637 = vcmp.lt.s32.totalorder %v909, 0
        %v3638 = vand.u32 %v909, 2139095040
        %v3639 = vshrl.u32 %v3638, 23
        %v3640 = vsub.s32 %v3639, 127
        %v3641 = vand.u32 2147483647, %v909
        %v3642 = vand.u32 %v3641, 8388607
        %v3643 = vor.u32 %v3642, 8388608
        %v3644 = vsub.s32 0, %v3643
        %v3645 = vadd.s32 %v3640, 1
        %vm3646 = vcmp.gt.s32.totalorder %v3645, 0
        %v3647 = vsel %vm3646, %v3645, 0
        %v3648 = vshrl.u32 %v3647, 5
        %v3649 = vand.u32 %v3647, 31
        %v3650 = vsub.s32 32, %v3649
        %v3651 = vshrl.u32 683565275, %v3650
        %v3652 = vshll.u32 683565275, %v3649
        %v3653 = vshrl.u32 2475754826, %v3650
        %v3654 = vor.u32 %v3652, %v3653
        %v3655 = vshll.u32 2475754826, %v3649
        %v3656 = vshrl.u32 2131351028, %v3650
        %v3657 = vor.u32 %v3655, %v3656
        %v3658 = vshll.u32 2131351028, %v3649
        %v3659 = vshrl.u32 2102212464, %v3650
        %v3660 = vor.u32 %v3658, %v3659
        %v3661 = vshll.u32 2102212464, %v3649
        %v3662 = vshrl.u32 920167782, %v3650
        %v3663 = vor.u32 %v3661, %v3662
        %v3664 = vshll.u32 920167782, %v3649
        %v3665 = vshrl.u32 1326507024, %v3650
        %v3666 = vor.u32 %v3664, %v3665
        %vm3667 = vcmp.lt.s32.totalorder %v3648, 1
        %vm3668 = vcmp.lt.s32.totalorder %v3648, 2
        %vm3669 = vcmp.lt.s32.totalorder %v3648, 3
        %vm3670 = vcmp.lt.s32.totalorder %v3648, 4
        %v3671 = vsel %vm3667, %v3651, %v3654
        %v3672 = vsel %vm3670, %v3660, 2102212464
        %v3673 = vsel %vm3669, %v3657, %v3672
        %v3674 = vsel %vm3668, %v3671, %v3673
        %v3675 = vsel %vm3667, %v3654, %v3657
        %v3676 = vsel %vm3670, %v3663, 920167782
        %v3677 = vsel %vm3669, %v3660, %v3676
        %v3678 = vsel %vm3668, %v3675, %v3677
        %v3679 = vsel %vm3667, %v3657, %v3660
        %v3680 = vsel %vm3670, %v3666, 1326507024
        %v3681 = vsel %vm3669, %v3663, %v3680
        %v3682 = vsel %vm3668, %v3679, %v3681
        %v3683 = vshll.u32 %v3643, 8
        %v3684 = vmul.u32.u64.compose %v3683, %v3682
        %v3685 = vextract.low.u32 %v3684
        %v3686 = vextract.high.u32 %v3684
        %v3687 = vmul.u32.u64.compose %v3683, %v3678
        %v3688 = vextract.low.u32 %v3687
        %v3689 = vextract.high.u32 %v3687
        %v3690 = vmul.u32 %v3683, %v3674
        %v3691 = vadd.s32 %v3686, %v3688
        %vm3692 = vc.u32 %v3686, %v3688
        %v3693 = vadd.s32 %v3689, 1
        %v3694 = vsel %vm3692, %v3693, %v3689
        %v3695 = vadd.s32 %v3690, %v3694
        %v3696 = vadd.s32 %v3695, 536870912
        %v3697 = vshrl.u32 %v3696, 30
        %v3698 = vshll.u32 %v3697, 30
        %v3699 = vsub.s32 %v3695, %v3698
        %vm3700 = vcmp.lt.s32.totalorder %v3699, 0
        %v3701 = vsub.s32 0, %v3699
        %v3702 = vsel %vm3700, %v3701, %v3699
        %v3703 = vclz %v3702
        %v3704 = vsub.s32 %v3703, 2
        %vm3705 = vcmp.gt.s32.totalorder 0, %v3704
        %v3706 = vsel %vm3705, 0, %v3704
        %v3707 = vsub.s32 32, %v3706
        %v3708 = vshll.u32 %v3699, %v3706
        %v3709 = vshrl.u32 %v3691, %v3707
        %v3710 = vor.u32 %v3708, %v3709
        %v3711 = vsub.s32 4294967266, %v3706
        %v3712 = vadd.s32 %v3711, 127
        %v3713 = vshll.u32 %v3712, 23
        %v3714 = vor.u32 4788187, %v3713
        %v3715 = vand.u32 2147483647, %v3714
        %v3717 = vcvt.s32.f32 %v3710
        %v3718 = vmul.f32 %v3717, %v3715
        %v3719 = vxor.u32 %v3718, 2147483648
        %v3720 = vsel %vm3637, %v3719, %v3718
        %v3721 = vsub.s32 4, %v3697
        %v3722 = vsel %vm3637, %v3721, %v3697
        %v3723 = vsel %vm3636, %v909, %v3720
        %v3724 = vsel %vm3636, 0, %v3722
        %v3725 = vcosq.f32.pop %v3723
        %v3726 = vsinq.f32.pop %v3723
        %vm3727 = vweird.f32 %v909
        %v3728 = vadd.s32 %v3724, 3
        %v3729 = vand.u32 %v3728, 3
        %vm3730 = vcmp.lt.s32.totalorder %v3729, 2
        %vm3731 = vcmp.eq.s32.totalorder %v3729, 0
        %v3732 = vxor.u32 %v3726, 2147483648
        %v3733 = vsel %vm3731, %v3725, %v3732
        %vm3734 = vcmp.eq.s32.totalorder %v3729, 2
        %v3735 = vxor.u32 %v3725, 2147483648
        %v3736 = vsel %vm3734, %v3735, %v3726
        %v3737 = vsel %vm3730, %v3733, %v3736
        %v3738 = vsel %vm3727, nan, %v3737
        %v3739 = vand.u32 2147483647, %v910
        %vm3740 = vcmp.le.f32.partialorder %v3739, 0.7853982
        %vm3741 = vcmp.lt.s32.totalorder %v910, 0
        %v3742 = vand.u32 %v910, 2139095040
        %v3743 = vshrl.u32 %v3742, 23
        %v3744 = vsub.s32 %v3743, 127
        %v3745 = vand.u32 2147483647, %v910
        %v3746 = vand.u32 %v3745, 8388607
        %v3747 = vor.u32 %v3746, 8388608
        %v3748 = vsub.s32 0, %v3747
        %v3749 = vadd.s32 %v3744, 1
        %vm3750 = vcmp.gt.s32.totalorder %v3749, 0
        %v3751 = vsel %vm3750, %v3749, 0
        %v3752 = vshrl.u32 %v3751, 5
        %v3753 = vand.u32 %v3751, 31
        %v3754 = vsub.s32 32, %v3753
        %v3755 = vshrl.u32 683565275, %v3754
        %v3756 = vshll.u32 683565275, %v3753
        %v3757 = vshrl.u32 2475754826, %v3754
        %v3758 = vor.u32 %v3756, %v3757
        %v3759 = vshll.u32 2475754826, %v3753
        %v3760 = vshrl.u32 2131351028, %v3754
        %v3761 = vor.u32 %v3759, %v3760
        %v3762 = vshll.u32 2131351028, %v3753
        %v3763 = vshrl.u32 2102212464, %v3754
        %v3764 = vor.u32 %v3762, %v3763
        %v3765 = vshll.u32 2102212464, %v3753
        %v3766 = vshrl.u32 920167782, %v3754
        %v3767 = vor.u32 %v3765, %v3766
        %v3768 = vshll.u32 920167782, %v3753
        %v3769 = vshrl.u32 1326507024, %v3754
        %v3770 = vor.u32 %v3768, %v3769
        %vm3771 = vcmp.lt.s32.totalorder %v3752, 1
        %vm3772 = vcmp.lt.s32.totalorder %v3752, 2
        %vm3773 = vcmp.lt.s32.totalorder %v3752, 3
        %vm3774 = vcmp.lt.s32.totalorder %v3752, 4
        %v3775 = vsel %vm3771, %v3755, %v3758
        %v3776 = vsel %vm3774, %v3764, 2102212464
        %v3777 = vsel %vm3773, %v3761, %v3776
        %v3778 = vsel %vm3772, %v3775, %v3777
        %v3779 = vsel %vm3771, %v3758, %v3761
        %v3780 = vsel %vm3774, %v3767, 920167782
        %v3781 = vsel %vm3773, %v3764, %v3780
        %v3782 = vsel %vm3772, %v3779, %v3781
        %v3783 = vsel %vm3771, %v3761, %v3764
        %v3784 = vsel %vm3774, %v3770, 1326507024
        %v3785 = vsel %vm3773, %v3767, %v3784
        %v3786 = vsel %vm3772, %v3783, %v3785
        %v3787 = vshll.u32 %v3747, 8
        %v3788 = vmul.u32.u64.compose %v3787, %v3786
        %v3789 = vextract.low.u32 %v3788
        %v3790 = vextract.high.u32 %v3788
        %v3791 = vmul.u32.u64.compose %v3787, %v3782
        %v3792 = vextract.low.u32 %v3791
        %v3793 = vextract.high.u32 %v3791
        %v3794 = vmul.u32 %v3787, %v3778
        %v3795 = vadd.s32 %v3790, %v3792
        %vm3796 = vc.u32 %v3790, %v3792
        %v3797 = vadd.s32 %v3793, 1
        %v3798 = vsel %vm3796, %v3797, %v3793
        %v3799 = vadd.s32 %v3794, %v3798
        %v3800 = vadd.s32 %v3799, 536870912
        %v3801 = vshrl.u32 %v3800, 30
        %v3802 = vshll.u32 %v3801, 30
        %v3803 = vsub.s32 %v3799, %v3802
        %vm3804 = vcmp.lt.s32.totalorder %v3803, 0
        %v3805 = vsub.s32 0, %v3803
        %v3806 = vsel %vm3804, %v3805, %v3803
        %v3807 = vclz %v3806
        %v3808 = vsub.s32 %v3807, 2
        %vm3809 = vcmp.gt.s32.totalorder 0, %v3808
        %v3810 = vsel %vm3809, 0, %v3808
        %v3811 = vsub.s32 32, %v3810
        %v3812 = vshll.u32 %v3803, %v3810
        %v3813 = vshrl.u32 %v3795, %v3811
        %v3814 = vor.u32 %v3812, %v3813
        %v3815 = vsub.s32 4294967266, %v3810
        %v3816 = vadd.s32 %v3815, 127
        %v3817 = vshll.u32 %v3816, 23
        %v3818 = vor.u32 4788187, %v3817
        %v3819 = vand.u32 2147483647, %v3818
        %v3821 = vcvt.s32.f32 %v3814
        %v3822 = vmul.f32 %v3821, %v3819
        %v3823 = vxor.u32 %v3822, 2147483648
        %v3824 = vsel %vm3741, %v3823, %v3822
        %v3825 = vsub.s32 4, %v3801
        %v3826 = vsel %vm3741, %v3825, %v3801
        %v3827 = vsel %vm3740, %v910, %v3824
        %v3828 = vsel %vm3740, 0, %v3826
        %v3829 = vcosq.f32.pop %v3827
        %v3830 = vsinq.f32.pop %v3827
        %vm3831 = vweird.f32 %v910
        %v3832 = vadd.s32 %v3828, 3
        %v3833 = vand.u32 %v3832, 3
        %vm3834 = vcmp.lt.s32.totalorder %v3833, 2
        %vm3835 = vcmp.eq.s32.totalorder %v3833, 0
        %v3836 = vxor.u32 %v3830, 2147483648
        %v3837 = vsel %vm3835, %v3829, %v3836
        %vm3838 = vcmp.eq.s32.totalorder %v3833, 2
        %v3839 = vxor.u32 %v3829, 2147483648
        %v3840 = vsel %vm3838, %v3839, %v3830
        %v3841 = vsel %vm3834, %v3837, %v3840
        %v3842 = vsel %vm3831, nan, %v3841
        %v3843 = vand.u32 2147483647, %v911
        %vm3844 = vcmp.le.f32.partialorder %v3843, 0.7853982
        %vm3845 = vcmp.lt.s32.totalorder %v911, 0
        %v3846 = vand.u32 %v911, 2139095040
        %v3847 = vshrl.u32 %v3846, 23
        %v3848 = vsub.s32 %v3847, 127
        %v3849 = vand.u32 2147483647, %v911
        %v3850 = vand.u32 %v3849, 8388607
        %v3851 = vor.u32 %v3850, 8388608
        %v3852 = vsub.s32 0, %v3851
        %v3853 = vadd.s32 %v3848, 1
        %vm3854 = vcmp.gt.s32.totalorder %v3853, 0
        %v3855 = vsel %vm3854, %v3853, 0
        %v3856 = vshrl.u32 %v3855, 5
        %v3857 = vand.u32 %v3855, 31
        %v3858 = vsub.s32 32, %v3857
        %v3859 = vshrl.u32 683565275, %v3858
        %v3860 = vshll.u32 683565275, %v3857
        %v3861 = vshrl.u32 2475754826, %v3858
        %v3862 = vor.u32 %v3860, %v3861
        %v3863 = vshll.u32 2475754826, %v3857
        %v3864 = vshrl.u32 2131351028, %v3858
        %v3865 = vor.u32 %v3863, %v3864
        %v3866 = vshll.u32 2131351028, %v3857
        %v3867 = vshrl.u32 2102212464, %v3858
        %v3868 = vor.u32 %v3866, %v3867
        %v3869 = vshll.u32 2102212464, %v3857
        %v3870 = vshrl.u32 920167782, %v3858
        %v3871 = vor.u32 %v3869, %v3870
        %v3872 = vshll.u32 920167782, %v3857
        %v3873 = vshrl.u32 1326507024, %v3858
        %v3874 = vor.u32 %v3872, %v3873
        %vm3875 = vcmp.lt.s32.totalorder %v3856, 1
        %vm3876 = vcmp.lt.s32.totalorder %v3856, 2
        %vm3877 = vcmp.lt.s32.totalorder %v3856, 3
        %vm3878 = vcmp.lt.s32.totalorder %v3856, 4
        %v3879 = vsel %vm3875, %v3859, %v3862
        %v3880 = vsel %vm3878, %v3868, 2102212464
        %v3881 = vsel %vm3877, %v3865, %v3880
        %v3882 = vsel %vm3876, %v3879, %v3881
        %v3883 = vsel %vm3875, %v3862, %v3865
        %v3884 = vsel %vm3878, %v3871, 920167782
        %v3885 = vsel %vm3877, %v3868, %v3884
        %v3886 = vsel %vm3876, %v3883, %v3885
        %v3887 = vsel %vm3875, %v3865, %v3868
        %v3888 = vsel %vm3878, %v3874, 1326507024
        %v3889 = vsel %vm3877, %v3871, %v3888
        %v3890 = vsel %vm3876, %v3887, %v3889
        %v3891 = vshll.u32 %v3851, 8
        %v3892 = vmul.u32.u64.compose %v3891, %v3890
        %v3893 = vextract.low.u32 %v3892
        %v3894 = vextract.high.u32 %v3892
        %v3895 = vmul.u32.u64.compose %v3891, %v3886
        %v3896 = vextract.low.u32 %v3895
        %v3897 = vextract.high.u32 %v3895
        %v3898 = vmul.u32 %v3891, %v3882
        %v3899 = vadd.s32 %v3894, %v3896
        %vm3900 = vc.u32 %v3894, %v3896
        %v3901 = vadd.s32 %v3897, 1
        %v3902 = vsel %vm3900, %v3901, %v3897
        %v3903 = vadd.s32 %v3898, %v3902
        %v3904 = vadd.s32 %v3903, 536870912
        %v3905 = vshrl.u32 %v3904, 30
        %v3906 = vshll.u32 %v3905, 30
        %v3907 = vsub.s32 %v3903, %v3906
        %vm3908 = vcmp.lt.s32.totalorder %v3907, 0
        %v3909 = vsub.s32 0, %v3907
        %v3910 = vsel %vm3908, %v3909, %v3907
        %v3911 = vclz %v3910
        %v3912 = vsub.s32 %v3911, 2
        %vm3913 = vcmp.gt.s32.totalorder 0, %v3912
        %v3914 = vsel %vm3913, 0, %v3912
        %v3915 = vsub.s32 32, %v3914
        %v3916 = vshll.u32 %v3907, %v3914
        %v3917 = vshrl.u32 %v3899, %v3915
        %v3918 = vor.u32 %v3916, %v3917
        %v3919 = vsub.s32 4294967266, %v3914
        %v3920 = vadd.s32 %v3919, 127
        %v3921 = vshll.u32 %v3920, 23
        %v3922 = vor.u32 4788187, %v3921
        %v3923 = vand.u32 2147483647, %v3922
        %v3925 = vcvt.s32.f32 %v3918
        %v3926 = vmul.f32 %v3925, %v3923
        %v3927 = vxor.u32 %v3926, 2147483648
        %v3928 = vsel %vm3845, %v3927, %v3926
        %v3929 = vsub.s32 4, %v3905
        %v3930 = vsel %vm3845, %v3929, %v3905
        %v3931 = vsel %vm3844, %v911, %v3928
        %v3932 = vsel %vm3844, 0, %v3930
        %v3933 = vcosq.f32.pop %v3931
        %v3934 = vsinq.f32.pop %v3931
        %vm3935 = vweird.f32 %v911
        %v3936 = vadd.s32 %v3932, 3
        %v3937 = vand.u32 %v3936, 3
        %vm3938 = vcmp.lt.s32.totalorder %v3937, 2
        %vm3939 = vcmp.eq.s32.totalorder %v3937, 0
        %v3940 = vxor.u32 %v3934, 2147483648
        %v3941 = vsel %vm3939, %v3933, %v3940
        %vm3942 = vcmp.eq.s32.totalorder %v3937, 2
        %v3943 = vxor.u32 %v3933, 2147483648
        %v3944 = vsel %vm3942, %v3943, %v3934
        %v3945 = vsel %vm3938, %v3941, %v3944
        %v3946 = vsel %vm3935, nan, %v3945
        %v3947 = vand.u32 2147483647, %v912
        %vm3948 = vcmp.le.f32.partialorder %v3947, 0.7853982
        %vm3949 = vcmp.lt.s32.totalorder %v912, 0
        %v3950 = vand.u32 %v912, 2139095040
        %v3951 = vshrl.u32 %v3950, 23
        %v3952 = vsub.s32 %v3951, 127
        %v3953 = vand.u32 2147483647, %v912
        %v3954 = vand.u32 %v3953, 8388607
        %v3955 = vor.u32 %v3954, 8388608
        %v3956 = vsub.s32 0, %v3955
        %v3957 = vadd.s32 %v3952, 1
        %vm3958 = vcmp.gt.s32.totalorder %v3957, 0
        %v3959 = vsel %vm3958, %v3957, 0
        %v3960 = vshrl.u32 %v3959, 5
        %v3961 = vand.u32 %v3959, 31
        %v3962 = vsub.s32 32, %v3961
        %v3963 = vshrl.u32 683565275, %v3962
        %v3964 = vshll.u32 683565275, %v3961
        %v3965 = vshrl.u32 2475754826, %v3962
        %v3966 = vor.u32 %v3964, %v3965
        %v3967 = vshll.u32 2475754826, %v3961
        %v3968 = vshrl.u32 2131351028, %v3962
        %v3969 = vor.u32 %v3967, %v3968
        %v3970 = vshll.u32 2131351028, %v3961
        %v3971 = vshrl.u32 2102212464, %v3962
        %v3972 = vor.u32 %v3970, %v3971
        %v3973 = vshll.u32 2102212464, %v3961
        %v3974 = vshrl.u32 920167782, %v3962
        %v3975 = vor.u32 %v3973, %v3974
        %v3976 = vshll.u32 920167782, %v3961
        %v3977 = vshrl.u32 1326507024, %v3962
        %v3978 = vor.u32 %v3976, %v3977
        %vm3979 = vcmp.lt.s32.totalorder %v3960, 1
        %vm3980 = vcmp.lt.s32.totalorder %v3960, 2
        %vm3981 = vcmp.lt.s32.totalorder %v3960, 3
        %vm3982 = vcmp.lt.s32.totalorder %v3960, 4
        %v3983 = vsel %vm3979, %v3963, %v3966
        %v3984 = vsel %vm3982, %v3972, 2102212464
        %v3985 = vsel %vm3981, %v3969, %v3984
        %v3986 = vsel %vm3980, %v3983, %v3985
        %v3987 = vsel %vm3979, %v3966, %v3969
        %v3988 = vsel %vm3982, %v3975, 920167782
        %v3989 = vsel %vm3981, %v3972, %v3988
        %v3990 = vsel %vm3980, %v3987, %v3989
        %v3991 = vsel %vm3979, %v3969, %v3972
        %v3992 = vsel %vm3982, %v3978, 1326507024
        %v3993 = vsel %vm3981, %v3975, %v3992
        %v3994 = vsel %vm3980, %v3991, %v3993
        %v3995 = vshll.u32 %v3955, 8
        %v3996 = vmul.u32.u64.compose %v3995, %v3994
        %v3997 = vextract.low.u32 %v3996
        %v3998 = vextract.high.u32 %v3996
        %v3999 = vmul.u32.u64.compose %v3995, %v3990
        %v4000 = vextract.low.u32 %v3999
        %v4001 = vextract.high.u32 %v3999
        %v4002 = vmul.u32 %v3995, %v3986
        %v4003 = vadd.s32 %v3998, %v4000
        %vm4004 = vc.u32 %v3998, %v4000
        %v4005 = vadd.s32 %v4001, 1
        %v4006 = vsel %vm4004, %v4005, %v4001
        %v4007 = vadd.s32 %v4002, %v4006
        %v4008 = vadd.s32 %v4007, 536870912
        %v4009 = vshrl.u32 %v4008, 30
        %v4010 = vshll.u32 %v4009, 30
        %v4011 = vsub.s32 %v4007, %v4010
        %vm4012 = vcmp.lt.s32.totalorder %v4011, 0
        %v4013 = vsub.s32 0, %v4011
        %v4014 = vsel %vm4012, %v4013, %v4011
        %v4015 = vclz %v4014
        %v4016 = vsub.s32 %v4015, 2
        %vm4017 = vcmp.gt.s32.totalorder 0, %v4016
        %v4018 = vsel %vm4017, 0, %v4016
        %v4019 = vsub.s32 32, %v4018
        %v4020 = vshll.u32 %v4011, %v4018
        %v4021 = vshrl.u32 %v4003, %v4019
        %v4022 = vor.u32 %v4020, %v4021
        %v4023 = vsub.s32 4294967266, %v4018
        %v4024 = vadd.s32 %v4023, 127
        %v4025 = vshll.u32 %v4024, 23
        %v4026 = vor.u32 4788187, %v4025
        %v4027 = vand.u32 2147483647, %v4026
        %v4029 = vcvt.s32.f32 %v4022
        %v4030 = vmul.f32 %v4029, %v4027
        %v4031 = vxor.u32 %v4030, 2147483648
        %v4032 = vsel %vm3949, %v4031, %v4030
        %v4033 = vsub.s32 4, %v4009
        %v4034 = vsel %vm3949, %v4033, %v4009
        %v4035 = vsel %vm3948, %v912, %v4032
        %v4036 = vsel %vm3948, 0, %v4034
        %v4037 = vcosq.f32.pop %v4035
        %v4038 = vsinq.f32.pop %v4035
        %vm4039 = vweird.f32 %v912
        %v4040 = vadd.s32 %v4036, 3
        %v4041 = vand.u32 %v4040, 3
        %vm4042 = vcmp.lt.s32.totalorder %v4041, 2
        %vm4043 = vcmp.eq.s32.totalorder %v4041, 0
        %v4044 = vxor.u32 %v4038, 2147483648
        %v4045 = vsel %vm4043, %v4037, %v4044
        %vm4046 = vcmp.eq.s32.totalorder %v4041, 2
        %v4047 = vxor.u32 %v4037, 2147483648
        %v4048 = vsel %vm4046, %v4047, %v4038
        %v4049 = vsel %vm4042, %v4045, %v4048
        %v4050 = vsel %vm4039, nan, %v4049
        %v4051 = vand.u32 2147483647, %v913
        %vm4052 = vcmp.le.f32.partialorder %v4051, 0.7853982
        %vm4053 = vcmp.lt.s32.totalorder %v913, 0
        %v4054 = vand.u32 %v913, 2139095040
        %v4055 = vshrl.u32 %v4054, 23
        %v4056 = vsub.s32 %v4055, 127
        %v4057 = vand.u32 2147483647, %v913
        %v4058 = vand.u32 %v4057, 8388607
        %v4059 = vor.u32 %v4058, 8388608
        %v4060 = vsub.s32 0, %v4059
        %v4061 = vadd.s32 %v4056, 1
        %vm4062 = vcmp.gt.s32.totalorder %v4061, 0
        %v4063 = vsel %vm4062, %v4061, 0
        %v4064 = vshrl.u32 %v4063, 5
        %v4065 = vand.u32 %v4063, 31
        %v4066 = vsub.s32 32, %v4065
        %v4067 = vshrl.u32 683565275, %v4066
        %v4068 = vshll.u32 683565275, %v4065
        %v4069 = vshrl.u32 2475754826, %v4066
        %v4070 = vor.u32 %v4068, %v4069
        %v4071 = vshll.u32 2475754826, %v4065
        %v4072 = vshrl.u32 2131351028, %v4066
        %v4073 = vor.u32 %v4071, %v4072
        %v4074 = vshll.u32 2131351028, %v4065
        %v4075 = vshrl.u32 2102212464, %v4066
        %v4076 = vor.u32 %v4074, %v4075
        %v4077 = vshll.u32 2102212464, %v4065
        %v4078 = vshrl.u32 920167782, %v4066
        %v4079 = vor.u32 %v4077, %v4078
        %v4080 = vshll.u32 920167782, %v4065
        %v4081 = vshrl.u32 1326507024, %v4066
        %v4082 = vor.u32 %v4080, %v4081
        %vm4083 = vcmp.lt.s32.totalorder %v4064, 1
        %vm4084 = vcmp.lt.s32.totalorder %v4064, 2
        %vm4085 = vcmp.lt.s32.totalorder %v4064, 3
        %vm4086 = vcmp.lt.s32.totalorder %v4064, 4
        %v4087 = vsel %vm4083, %v4067, %v4070
        %v4088 = vsel %vm4086, %v4076, 2102212464
        %v4089 = vsel %vm4085, %v4073, %v4088
        %v4090 = vsel %vm4084, %v4087, %v4089
        %v4091 = vsel %vm4083, %v4070, %v4073
        %v4092 = vsel %vm4086, %v4079, 920167782
        %v4093 = vsel %vm4085, %v4076, %v4092
        %v4094 = vsel %vm4084, %v4091, %v4093
        %v4095 = vsel %vm4083, %v4073, %v4076
        %v4096 = vsel %vm4086, %v4082, 1326507024
        %v4097 = vsel %vm4085, %v4079, %v4096
        %v4098 = vsel %vm4084, %v4095, %v4097
        %v4099 = vshll.u32 %v4059, 8
        %v4100 = vmul.u32.u64.compose %v4099, %v4098
        %v4101 = vextract.low.u32 %v4100
        %v4102 = vextract.high.u32 %v4100
        %v4103 = vmul.u32.u64.compose %v4099, %v4094
        %v4104 = vextract.low.u32 %v4103
        %v4105 = vextract.high.u32 %v4103
        %v4106 = vmul.u32 %v4099, %v4090
        %v4107 = vadd.s32 %v4102, %v4104
        %vm4108 = vc.u32 %v4102, %v4104
        %v4109 = vadd.s32 %v4105, 1
        %v4110 = vsel %vm4108, %v4109, %v4105
        %v4111 = vadd.s32 %v4106, %v4110
        %v4112 = vadd.s32 %v4111, 536870912
        %v4113 = vshrl.u32 %v4112, 30
        %v4114 = vshll.u32 %v4113, 30
        %v4115 = vsub.s32 %v4111, %v4114
        %vm4116 = vcmp.lt.s32.totalorder %v4115, 0
        %v4117 = vsub.s32 0, %v4115
        %v4118 = vsel %vm4116, %v4117, %v4115
        %v4119 = vclz %v4118
        %v4120 = vsub.s32 %v4119, 2
        %vm4121 = vcmp.gt.s32.totalorder 0, %v4120
        %v4122 = vsel %vm4121, 0, %v4120
        %v4123 = vsub.s32 32, %v4122
        %v4124 = vshll.u32 %v4115, %v4122
        %v4125 = vshrl.u32 %v4107, %v4123
        %v4126 = vor.u32 %v4124, %v4125
        %v4127 = vsub.s32 4294967266, %v4122
        %v4128 = vadd.s32 %v4127, 127
        %v4129 = vshll.u32 %v4128, 23
        %v4130 = vor.u32 4788187, %v4129
        %v4131 = vand.u32 2147483647, %v4130
        %v4133 = vcvt.s32.f32 %v4126
        %v4134 = vmul.f32 %v4133, %v4131
        %v4135 = vxor.u32 %v4134, 2147483648
        %v4136 = vsel %vm4053, %v4135, %v4134
        %v4137 = vsub.s32 4, %v4113
        %v4138 = vsel %vm4053, %v4137, %v4113
        %v4139 = vsel %vm4052, %v913, %v4136
        %v4140 = vsel %vm4052, 0, %v4138
        %v4141 = vcosq.f32.pop %v4139
        %v4142 = vsinq.f32.pop %v4139
        %vm4143 = vweird.f32 %v913
        %v4144 = vadd.s32 %v4140, 3
        %v4145 = vand.u32 %v4144, 3
        %vm4146 = vcmp.lt.s32.totalorder %v4145, 2
        %vm4147 = vcmp.eq.s32.totalorder %v4145, 0
        %v4148 = vxor.u32 %v4142, 2147483648
        %v4149 = vsel %vm4147, %v4141, %v4148
        %vm4150 = vcmp.eq.s32.totalorder %v4145, 2
        %v4151 = vxor.u32 %v4141, 2147483648
        %v4152 = vsel %vm4150, %v4151, %v4142
        %v4153 = vsel %vm4146, %v4149, %v4152
        %v4154 = vsel %vm4143, nan, %v4153
        %v4155 = vand.u32 2147483647, %v914
        %vm4156 = vcmp.le.f32.partialorder %v4155, 0.7853982
        %vm4157 = vcmp.lt.s32.totalorder %v914, 0
        %v4158 = vand.u32 %v914, 2139095040
        %v4159 = vshrl.u32 %v4158, 23
        %v4160 = vsub.s32 %v4159, 127
        %v4161 = vand.u32 2147483647, %v914
        %v4162 = vand.u32 %v4161, 8388607
        %v4163 = vor.u32 %v4162, 8388608
        %v4164 = vsub.s32 0, %v4163
        %v4165 = vadd.s32 %v4160, 1
        %vm4166 = vcmp.gt.s32.totalorder %v4165, 0
        %v4167 = vsel %vm4166, %v4165, 0
        %v4168 = vshrl.u32 %v4167, 5
        %v4169 = vand.u32 %v4167, 31
        %v4170 = vsub.s32 32, %v4169
        %v4171 = vshrl.u32 683565275, %v4170
        %v4172 = vshll.u32 683565275, %v4169
        %v4173 = vshrl.u32 2475754826, %v4170
        %v4174 = vor.u32 %v4172, %v4173
        %v4175 = vshll.u32 2475754826, %v4169
        %v4176 = vshrl.u32 2131351028, %v4170
        %v4177 = vor.u32 %v4175, %v4176
        %v4178 = vshll.u32 2131351028, %v4169
        %v4179 = vshrl.u32 2102212464, %v4170
        %v4180 = vor.u32 %v4178, %v4179
        %v4181 = vshll.u32 2102212464, %v4169
        %v4182 = vshrl.u32 920167782, %v4170
        %v4183 = vor.u32 %v4181, %v4182
        %v4184 = vshll.u32 920167782, %v4169
        %v4185 = vshrl.u32 1326507024, %v4170
        %v4186 = vor.u32 %v4184, %v4185
        %vm4187 = vcmp.lt.s32.totalorder %v4168, 1
        %vm4188 = vcmp.lt.s32.totalorder %v4168, 2
        %vm4189 = vcmp.lt.s32.totalorder %v4168, 3
        %vm4190 = vcmp.lt.s32.totalorder %v4168, 4
        %v4191 = vsel %vm4187, %v4171, %v4174
        %v4192 = vsel %vm4190, %v4180, 2102212464
        %v4193 = vsel %vm4189, %v4177, %v4192
        %v4194 = vsel %vm4188, %v4191, %v4193
        %v4195 = vsel %vm4187, %v4174, %v4177
        %v4196 = vsel %vm4190, %v4183, 920167782
        %v4197 = vsel %vm4189, %v4180, %v4196
        %v4198 = vsel %vm4188, %v4195, %v4197
        %v4199 = vsel %vm4187, %v4177, %v4180
        %v4200 = vsel %vm4190, %v4186, 1326507024
        %v4201 = vsel %vm4189, %v4183, %v4200
        %v4202 = vsel %vm4188, %v4199, %v4201
        %v4203 = vshll.u32 %v4163, 8
        %v4204 = vmul.u32.u64.compose %v4203, %v4202
        %v4205 = vextract.low.u32 %v4204
        %v4206 = vextract.high.u32 %v4204
        %v4207 = vmul.u32.u64.compose %v4203, %v4198
        %v4208 = vextract.low.u32 %v4207
        %v4209 = vextract.high.u32 %v4207
        %v4210 = vmul.u32 %v4203, %v4194
        %v4211 = vadd.s32 %v4206, %v4208
        %vm4212 = vc.u32 %v4206, %v4208
        %v4213 = vadd.s32 %v4209, 1
        %v4214 = vsel %vm4212, %v4213, %v4209
        %v4215 = vadd.s32 %v4210, %v4214
        %v4216 = vadd.s32 %v4215, 536870912
        %v4217 = vshrl.u32 %v4216, 30
        %v4218 = vshll.u32 %v4217, 30
        %v4219 = vsub.s32 %v4215, %v4218
        %vm4220 = vcmp.lt.s32.totalorder %v4219, 0
        %v4221 = vsub.s32 0, %v4219
        %v4222 = vsel %vm4220, %v4221, %v4219
        %v4223 = vclz %v4222
        %v4224 = vsub.s32 %v4223, 2
        %vm4225 = vcmp.gt.s32.totalorder 0, %v4224
        %v4226 = vsel %vm4225, 0, %v4224
        %v4227 = vsub.s32 32, %v4226
        %v4228 = vshll.u32 %v4219, %v4226
        %v4229 = vshrl.u32 %v4211, %v4227
        %v4230 = vor.u32 %v4228, %v4229
        %v4231 = vsub.s32 4294967266, %v4226
        %v4232 = vadd.s32 %v4231, 127
        %v4233 = vshll.u32 %v4232, 23
        %v4234 = vor.u32 4788187, %v4233
        %v4235 = vand.u32 2147483647, %v4234
        %v4237 = vcvt.s32.f32 %v4230
        %v4238 = vmul.f32 %v4237, %v4235
        %v4239 = vxor.u32 %v4238, 2147483648
        %v4240 = vsel %vm4157, %v4239, %v4238
        %v4241 = vsub.s32 4, %v4217
        %v4242 = vsel %vm4157, %v4241, %v4217
        %v4243 = vsel %vm4156, %v914, %v4240
        %v4244 = vsel %vm4156, 0, %v4242
        %v4245 = vcosq.f32.pop %v4243
        %v4246 = vsinq.f32.pop %v4243
        %vm4247 = vweird.f32 %v914
        %v4248 = vadd.s32 %v4244, 3
        %v4249 = vand.u32 %v4248, 3
        %vm4250 = vcmp.lt.s32.totalorder %v4249, 2
        %vm4251 = vcmp.eq.s32.totalorder %v4249, 0
        %v4252 = vxor.u32 %v4246, 2147483648
        %v4253 = vsel %vm4251, %v4245, %v4252
        %vm4254 = vcmp.eq.s32.totalorder %v4249, 2
        %v4255 = vxor.u32 %v4245, 2147483648
        %v4256 = vsel %vm4254, %v4255, %v4246
        %v4257 = vsel %vm4250, %v4253, %v4256
        %v4258 = vsel %vm4247, nan, %v4257
        %4259 = vadd.xlane.f32.xlu0 %v2698
        %v4260 = vpop.xlane.xlu0 %4259
        %4261 = vadd.xlane.f32.xlu0 %v2802
        %v4262 = vpop.xlane.xlu0 %4261
        %4263 = vadd.xlane.f32.xlu0 %v2906
        %v4264 = vpop.xlane.xlu0 %4263
        %4265 = vadd.xlane.f32.xlu0 %v3010
        %v4266 = vpop.xlane.xlu0 %4265
        %4267 = vadd.xlane.f32.xlu0 %v3114
        %v4268 = vpop.xlane.xlu0 %4267
        %4269 = vadd.xlane.f32.xlu0 %v3218
        %v4270 = vpop.xlane.xlu0 %4269
        %4271 = vadd.xlane.f32.xlu0 %v3322
        %v4272 = vpop.xlane.xlu0 %4271
        %4273 = vadd.xlane.f32.xlu0 %v3426
        %v4274 = vpop.xlane.xlu0 %4273
        %4275 = vadd.xlane.f32.xlu0 %v3530
        %v4276 = vpop.xlane.xlu0 %4275
        %4277 = vadd.xlane.f32.xlu0 %v3634
        %v4278 = vpop.xlane.xlu0 %4277
        %4279 = vadd.xlane.f32.xlu0 %v3738
        %v4280 = vpop.xlane.xlu0 %4279
        %4281 = vadd.xlane.f32.xlu0 %v3842
        %v4282 = vpop.xlane.xlu0 %4281
        %4283 = vadd.xlane.f32.xlu0 %v3946
        %v4284 = vpop.xlane.xlu0 %4283
        %4285 = vadd.xlane.f32.xlu0 %v4050
        %v4286 = vpop.xlane.xlu0 %4285
        %4287 = vadd.xlane.f32.xlu0 %v4154
        %v4288 = vpop.xlane.xlu0 %4287
        %4289 = vadd.xlane.f32.xlu0 %v4258
        %v4290 = vpop.xlane.xlu0 %4289
        %v4291 = vmul.f32 %v2564, %v2564
        %v4292 = vmul.f32 %v2566, %v2566
        %v4293 = vmul.f32 %v2568, %v2568
        %v4294 = vmul.f32 %v2570, %v2570
        %v4295 = vmul.f32 %v2572, %v2572
        %v4296 = vmul.f32 %v2574, %v2574
        %v4297 = vmul.f32 %v2576, %v2576
        %v4298 = vmul.f32 %v2578, %v2578
        %v4299 = vmul.f32 %v2580, %v2580
        %v4300 = vmul.f32 %v2582, %v2582
        %v4301 = vmul.f32 %v2584, %v2584
        %v4302 = vmul.f32 %v2586, %v2586
        %v4303 = vmul.f32 %v2588, %v2588
        %v4304 = vmul.f32 %v2590, %v2590
        %v4305 = vmul.f32 %v2592, %v2592
        %v4306 = vmul.f32 %v2594, %v2594
        %v4307 = vmul.f32 %v4260, %v4260
        %v4308 = vmul.f32 %v4262, %v4262
        %v4309 = vmul.f32 %v4264, %v4264
        %v4310 = vmul.f32 %v4266, %v4266
        %v4311 = vmul.f32 %v4268, %v4268
        %v4312 = vmul.f32 %v4270, %v4270
        %v4313 = vmul.f32 %v4272, %v4272
        %v4314 = vmul.f32 %v4274, %v4274
        %v4315 = vmul.f32 %v4276, %v4276
        %v4316 = vmul.f32 %v4278, %v4278
        %v4317 = vmul.f32 %v4280, %v4280
        %v4318 = vmul.f32 %v4282, %v4282
        %v4319 = vmul.f32 %v4284, %v4284
        %v4320 = vmul.f32 %v4286, %v4286
        %v4321 = vmul.f32 %v4288, %v4288
        %v4322 = vmul.f32 %v4290, %v4290
        %v4323 = vadd.f32 %v4291, %v4307
        %v4324 = vadd.f32 %v4292, %v4308
        %v4325 = vadd.f32 %v4293, %v4309
        %v4326 = vadd.f32 %v4294, %v4310
        %v4327 = vadd.f32 %v4295, %v4311
        %v4328 = vadd.f32 %v4296, %v4312
        %v4329 = vadd.f32 %v4297, %v4313
        %v4330 = vadd.f32 %v4298, %v4314
        %v4331 = vadd.f32 %v4299, %v4315
        %v4332 = vadd.f32 %v4300, %v4316
        %v4333 = vadd.f32 %v4301, %v4317
        %v4334 = vadd.f32 %v4302, %v4318
        %v4335 = vadd.f32 %v4303, %v4319
        %v4336 = vadd.f32 %v4304, %v4320
        %v4337 = vadd.f32 %v4305, %v4321
        %v4338 = vadd.f32 %v4306, %v4322
        %v4339 = vrsqrt.pop %v4323
        %v4340 = vmul.f32 %v4323, %v4339
        %vm4341 = vcmp.eq.f32.partialorder %v4323, inf
        %v4342 = vsel %vm4341, %v4323, %v4340
        %vm4343 = vcmp.eq.f32.partialorder %v4323, 0.0
        %v4344 = vand.u32 %v4323, 2147483648
        %v4345 = vsel %vm4343, %v4344, %v4342
        %v4346 = vrsqrt.pop %v4324
        %v4347 = vmul.f32 %v4324, %v4346
        %vm4348 = vcmp.eq.f32.partialorder %v4324, inf
        %v4349 = vsel %vm4348, %v4324, %v4347
        %vm4350 = vcmp.eq.f32.partialorder %v4324, 0.0
        %v4351 = vand.u32 %v4324, 2147483648
        %v4352 = vsel %vm4350, %v4351, %v4349
        %v4353 = vrsqrt.pop %v4325
        %v4354 = vmul.f32 %v4325, %v4353
        %vm4355 = vcmp.eq.f32.partialorder %v4325, inf
        %v4356 = vsel %vm4355, %v4325, %v4354
        %vm4357 = vcmp.eq.f32.partialorder %v4325, 0.0
        %v4358 = vand.u32 %v4325, 2147483648
        %v4359 = vsel %vm4357, %v4358, %v4356
        %v4360 = vrsqrt.pop %v4326
        %v4361 = vmul.f32 %v4326, %v4360
        %vm4362 = vcmp.eq.f32.partialorder %v4326, inf
        %v4363 = vsel %vm4362, %v4326, %v4361
        %vm4364 = vcmp.eq.f32.partialorder %v4326, 0.0
        %v4365 = vand.u32 %v4326, 2147483648
        %v4366 = vsel %vm4364, %v4365, %v4363
        %v4367 = vrsqrt.pop %v4327
        %v4368 = vmul.f32 %v4327, %v4367
        %vm4369 = vcmp.eq.f32.partialorder %v4327, inf
        %v4370 = vsel %vm4369, %v4327, %v4368
        %vm4371 = vcmp.eq.f32.partialorder %v4327, 0.0
        %v4372 = vand.u32 %v4327, 2147483648
        %v4373 = vsel %vm4371, %v4372, %v4370
        %v4374 = vrsqrt.pop %v4328
        %v4375 = vmul.f32 %v4328, %v4374
        %vm4376 = vcmp.eq.f32.partialorder %v4328, inf
        %v4377 = vsel %vm4376, %v4328, %v4375
        %vm4378 = vcmp.eq.f32.partialorder %v4328, 0.0
        %v4379 = vand.u32 %v4328, 2147483648
        %v4380 = vsel %vm4378, %v4379, %v4377
        %v4381 = vrsqrt.pop %v4329
        %v4382 = vmul.f32 %v4329, %v4381
        %vm4383 = vcmp.eq.f32.partialorder %v4329, inf
        %v4384 = vsel %vm4383, %v4329, %v4382
        %vm4385 = vcmp.eq.f32.partialorder %v4329, 0.0
        %v4386 = vand.u32 %v4329, 2147483648
        %v4387 = vsel %vm4385, %v4386, %v4384
        %v4388 = vrsqrt.pop %v4330
        %v4389 = vmul.f32 %v4330, %v4388
        %vm4390 = vcmp.eq.f32.partialorder %v4330, inf
        %v4391 = vsel %vm4390, %v4330, %v4389
        %vm4392 = vcmp.eq.f32.partialorder %v4330, 0.0
        %v4393 = vand.u32 %v4330, 2147483648
        %v4394 = vsel %vm4392, %v4393, %v4391
        %v4395 = vrsqrt.pop %v4331
        %v4396 = vmul.f32 %v4331, %v4395
        %vm4397 = vcmp.eq.f32.partialorder %v4331, inf
        %v4398 = vsel %vm4397, %v4331, %v4396
        %vm4399 = vcmp.eq.f32.partialorder %v4331, 0.0
        %v4400 = vand.u32 %v4331, 2147483648
        %v4401 = vsel %vm4399, %v4400, %v4398
        %v4402 = vrsqrt.pop %v4332
        %v4403 = vmul.f32 %v4332, %v4402
        %vm4404 = vcmp.eq.f32.partialorder %v4332, inf
        %v4405 = vsel %vm4404, %v4332, %v4403
        %vm4406 = vcmp.eq.f32.partialorder %v4332, 0.0
        %v4407 = vand.u32 %v4332, 2147483648
        %v4408 = vsel %vm4406, %v4407, %v4405
        %v4409 = vrsqrt.pop %v4333
        %v4410 = vmul.f32 %v4333, %v4409
        %vm4411 = vcmp.eq.f32.partialorder %v4333, inf
        %v4412 = vsel %vm4411, %v4333, %v4410
        %vm4413 = vcmp.eq.f32.partialorder %v4333, 0.0
        %v4414 = vand.u32 %v4333, 2147483648
        %v4415 = vsel %vm4413, %v4414, %v4412
        %v4416 = vrsqrt.pop %v4334
        %v4417 = vmul.f32 %v4334, %v4416
        %vm4418 = vcmp.eq.f32.partialorder %v4334, inf
        %v4419 = vsel %vm4418, %v4334, %v4417
        %vm4420 = vcmp.eq.f32.partialorder %v4334, 0.0
        %v4421 = vand.u32 %v4334, 2147483648
        %v4422 = vsel %vm4420, %v4421, %v4419
        %v4423 = vrsqrt.pop %v4335
        %v4424 = vmul.f32 %v4335, %v4423
        %vm4425 = vcmp.eq.f32.partialorder %v4335, inf
        %v4426 = vsel %vm4425, %v4335, %v4424
        %vm4427 = vcmp.eq.f32.partialorder %v4335, 0.0
        %v4428 = vand.u32 %v4335, 2147483648
        %v4429 = vsel %vm4427, %v4428, %v4426
        %v4430 = vrsqrt.pop %v4336
        %v4431 = vmul.f32 %v4336, %v4430
        %vm4432 = vcmp.eq.f32.partialorder %v4336, inf
        %v4433 = vsel %vm4432, %v4336, %v4431
        %vm4434 = vcmp.eq.f32.partialorder %v4336, 0.0
        %v4435 = vand.u32 %v4336, 2147483648
        %v4436 = vsel %vm4434, %v4435, %v4433
        %v4437 = vrsqrt.pop %v4337
        %v4438 = vmul.f32 %v4337, %v4437
        %vm4439 = vcmp.eq.f32.partialorder %v4337, inf
        %v4440 = vsel %vm4439, %v4337, %v4438
        %vm4441 = vcmp.eq.f32.partialorder %v4337, 0.0
        %v4442 = vand.u32 %v4337, 2147483648
        %v4443 = vsel %vm4441, %v4442, %v4440
        %v4444 = vrsqrt.pop %v4338
        %v4445 = vmul.f32 %v4338, %v4444
        %vm4446 = vcmp.eq.f32.partialorder %v4338, inf
        %v4447 = vsel %vm4446, %v4338, %v4445
        %vm4448 = vcmp.eq.f32.partialorder %v4338, 0.0
        %v4449 = vand.u32 %v4338, 2147483648
        %v4450 = vsel %vm4448, %v4449, %v4447
        %v4451 = vmul.f32 %v4345, 0.5
        %v4452 = vmul.f32 %v4352, 0.5
        %v4453 = vmul.f32 %v4359, 0.5
        %v4454 = vmul.f32 %v4366, 0.5
        %v4455 = vmul.f32 %v4373, 0.5
        %v4456 = vmul.f32 %v4380, 0.5
        %v4457 = vmul.f32 %v4387, 0.5
        %v4458 = vmul.f32 %v4394, 0.5
        %v4459 = vmul.f32 %v4401, 0.5
        %v4460 = vmul.f32 %v4408, 0.5
        %v4461 = vmul.f32 %v4415, 0.5
        %v4462 = vmul.f32 %v4422, 0.5
        %v4463 = vmul.f32 %v4429, 0.5
        %v4464 = vmul.f32 %v4436, 0.5
        %v4465 = vmul.f32 %v4443, 0.5
        %v4466 = vmul.f32 %v4450, 0.5
        %4467 = vmatprep.subr.mxu0 0.0
        %4468 = vmatpush1.xpose.msra.mxu0 %v367
        %4469 = vmatprep.subr.mxu0 0.0
        %4470 = vmatpush1.xpose.msra.mxu0 %v368
        %4471 = vmatprep.subr.mxu0 0.0
        %4472 = vmatpush1.xpose.msra.mxu0 0.0
        %4473 = vmatprep.subr.mxu0 0.0
        %4474 = vmatpush1.xpose.msra.mxu0 0.0
        %4475 = vmatprep.subr.mxu0 0.0
        %4476 = vmatpush1.xpose.msra.mxu0 0.0
        %4477 = vmatprep.subr.mxu0 0.0
        %4478 = vmatpush1.xpose.msra.mxu0 0.0
        %4479 = vmatprep.subr.mxu0 0.0
        %4480 = vmatpush1.xpose.msra.mxu0 0.0
        %4481 = vmatprep.subr.mxu0 0.0
        %4482 = vmatpush1.xpose.msra.mxu0 0.0
        %4483 = vmatprep.subr.mxu0 0.0
        %4484 = vmatpush1.xpose.msra.mxu0 0.0
        %4485 = vmatprep.subr.mxu0 0.0
        %4486 = vmatpush1.xpose.msra.mxu0 0.0
        %4487 = vmatprep.subr.mxu0 0.0
        %4488 = vmatpush1.xpose.msra.mxu0 0.0
        %4489 = vmatprep.subr.mxu0 0.0
        %4490 = vmatpush1.xpose.msra.mxu0 0.0
        %4491 = vmatprep.subr.mxu0 0.0
        %4492 = vmatpush1.xpose.msra.mxu0 0.0
        %4493 = vmatprep.subr.mxu0 0.0
        %4494 = vmatpush1.xpose.msra.mxu0 0.0
        %4495 = vmatprep.subr.mxu0 0.0
        %4496 = vmatpush1.xpose.msra.mxu0 0.0
        %4497 = vmatprep.subr.mxu0 0.0
        %4498 = vmatpush1.xpose.msra.mxu0 0.0
        %4499 = vmatprep.subr.mxu0 0.0
        %4500 = vmatpush1.xpose.msra.mxu0 0.0
        %4501 = vmatprep.subr.mxu0 0.0
        %4502 = vmatpush1.xpose.msra.mxu0 0.0
        %4503 = vmatprep.subr.mxu0 0.0
        %4504 = vmatpush1.xpose.msra.mxu0 0.0
        %4505 = vmatprep.subr.mxu0 0.0
        %4506 = vmatpush1.xpose.msra.mxu0 0.0
        %4507 = vmatprep.subr.mxu0 0.0
        %4508 = vmatpush1.xpose.msra.mxu0 0.0
        %4509 = vmatprep.subr.mxu0 0.0
        %4510 = vmatpush1.xpose.msra.mxu0 0.0
        %4511 = vmatprep.subr.mxu0 0.0
        %4512 = vmatpush1.xpose.msra.mxu0 0.0
        %4513 = vmatprep.subr.mxu0 0.0
        %4514 = vmatpush1.xpose.msra.mxu0 0.0
        %4515 = vmatprep.subr.mxu0 0.0
        %4516 = vmatpush1.xpose.msra.mxu0 0.0
        %4517 = vmatprep.subr.mxu0 0.0
        %4518 = vmatpush1.xpose.msra.mxu0 0.0
        %4519 = vmatprep.subr.mxu0 0.0
        %4520 = vmatpush1.xpose.msra.mxu0 0.0
        %4521 = vmatprep.subr.mxu0 0.0
        %4522 = vmatpush1.xpose.msra.mxu0 0.0
        %4523 = vmatprep.subr.mxu0 0.0
        %4524 = vmatpush1.xpose.msra.mxu0 0.0
        %4525 = vmatprep.subr.mxu0 0.0
        %4526 = vmatpush1.xpose.msra.mxu0 0.0
        %4527 = vmatprep.subr.mxu0 0.0
        %4528 = vmatpush1.xpose.msra.mxu0 0.0
        %4529 = vmatprep.subr.mxu0 0.0
        %4530 = vmatpush1.xpose.msra.mxu0 0.0
        %4531 = vmatprep.mubr.f32.mxu0 0.0
        %4532 = vmatmul.mubr.f32.gmra.mrb[0].mxu0 %v412
        %v4533 = vpop.f32.mrb[0].mxu0
        %v4534 = vadd.f32 1.0, %v4533
        %v4535 = vpop.f32.mrb[0].mxu0
        %4536 = vdwg.mxu0
        %v4538 = vlaneseq
        %v4539 = vshrl.u32 %v4538, 7
        %v4540 = vsub.s32 0, %v4539
        %v4541 = vrot.slane %v4534, %v4540
        %4543 = vbcast.lane.b32.xlu0 %v4541, 256
        %v4544 = vpop.permute.xlu0 %4543
        %s4546 = sor.u32 256, 8
        %4547 = vbcast.lane.b32.xlu0 %v4541, %s4546
        %v4548 = vpop.permute.xlu0 %4547
        %v4549 = vlaneseq
        %v4550 = vshrl.u32 %v4549, 7
        %v4551 = vsub.s32 1, %v4550
        %v4552 = vrot.slane %v4534, %v4551
        %4554 = vbcast.lane.b32.xlu0 %v4552, 256
        %v4555 = vpop.permute.xlu0 %4554
        %s4557 = sor.u32 256, 8
        %4558 = vbcast.lane.b32.xlu0 %v4552, %s4557
        %v4559 = vpop.permute.xlu0 %4558
        %v4560 = vlaneseq
        %v4561 = vshrl.u32 %v4560, 7
        %v4562 = vsub.s32 2, %v4561
        %v4563 = vrot.slane %v4534, %v4562
        %4565 = vbcast.lane.b32.xlu0 %v4563, 256
        %v4566 = vpop.permute.xlu0 %4565
        %s4568 = sor.u32 256, 8
        %4569 = vbcast.lane.b32.xlu0 %v4563, %s4568
        %v4570 = vpop.permute.xlu0 %4569
        %v4571 = vlaneseq
        %v4572 = vshrl.u32 %v4571, 7
        %v4573 = vsub.s32 3, %v4572
        %v4574 = vrot.slane %v4534, %v4573
        %4576 = vbcast.lane.b32.xlu0 %v4574, 256
        %v4577 = vpop.permute.xlu0 %4576
        %s4579 = sor.u32 256, 8
        %4580 = vbcast.lane.b32.xlu0 %v4574, %s4579
        %v4581 = vpop.permute.xlu0 %4580
        %v4582 = vlaneseq
        %v4583 = vshrl.u32 %v4582, 7
        %v4584 = vsub.s32 4, %v4583
        %v4585 = vrot.slane %v4534, %v4584
        %4587 = vbcast.lane.b32.xlu0 %v4585, 256
        %v4588 = vpop.permute.xlu0 %4587
        %s4590 = sor.u32 256, 8
        %4591 = vbcast.lane.b32.xlu0 %v4585, %s4590
        %v4592 = vpop.permute.xlu0 %4591
        %v4593 = vlaneseq
        %v4594 = vshrl.u32 %v4593, 7
        %v4595 = vsub.s32 5, %v4594
        %v4596 = vrot.slane %v4534, %v4595
        %4598 = vbcast.lane.b32.xlu0 %v4596, 256
        %v4599 = vpop.permute.xlu0 %4598
        %s4601 = sor.u32 256, 8
        %4602 = vbcast.lane.b32.xlu0 %v4596, %s4601
        %v4603 = vpop.permute.xlu0 %4602
        %v4604 = vlaneseq
        %v4605 = vshrl.u32 %v4604, 7
        %v4606 = vsub.s32 6, %v4605
        %v4607 = vrot.slane %v4534, %v4606
        %4609 = vbcast.lane.b32.xlu0 %v4607, 256
        %v4610 = vpop.permute.xlu0 %4609
        %s4612 = sor.u32 256, 8
        %4613 = vbcast.lane.b32.xlu0 %v4607, %s4612
        %v4614 = vpop.permute.xlu0 %4613
        %v4615 = vlaneseq
        %v4616 = vshrl.u32 %v4615, 7
        %v4617 = vsub.s32 7, %v4616
        %v4618 = vrot.slane %v4534, %v4617
        %4620 = vbcast.lane.b32.xlu0 %v4618, 256
        %v4621 = vpop.permute.xlu0 %4620
        %s4623 = sor.u32 256, 8
        %4624 = vbcast.lane.b32.xlu0 %v4618, %s4623
        %v4625 = vpop.permute.xlu0 %4624
        %v4642 = vmul.f32 %v4451, %v4544
        %v4643 = vmul.f32 %v4452, %v4548
        %v4644 = vmul.f32 %v4453, %v4555
        %v4645 = vmul.f32 %v4454, %v4559
        %v4646 = vmul.f32 %v4455, %v4566
        %v4647 = vmul.f32 %v4456, %v4570
        %v4648 = vmul.f32 %v4457, %v4577
        %v4649 = vmul.f32 %v4458, %v4581
        %v4650 = vmul.f32 %v4459, %v4588
        %v4651 = vmul.f32 %v4460, %v4592
        %v4652 = vmul.f32 %v4461, %v4599
        %v4653 = vmul.f32 %v4462, %v4603
        %v4654 = vmul.f32 %v4463, %v4610
        %v4655 = vmul.f32 %v4464, %v4614
        %v4656 = vmul.f32 %v4465, %v4621
        %v4657 = vmul.f32 %v4466, %v4625
        %v4658 = vmax.f32 %v4642, 0.0
        %v4659 = vmax.f32 %v4643, 0.0
        %v4660 = vmax.f32 %v4644, 0.0
        %v4661 = vmax.f32 %v4645, 0.0
        %v4662 = vmax.f32 %v4646, 0.0
        %v4663 = vmax.f32 %v4647, 0.0
        %v4664 = vmax.f32 %v4648, 0.0
        %v4665 = vmax.f32 %v4649, 0.0
        %v4666 = vmax.f32 %v4650, 0.0
        %v4667 = vmax.f32 %v4651, 0.0
        %v4668 = vmax.f32 %v4652, 0.0
        %v4669 = vmax.f32 %v4653, 0.0
        %v4670 = vmax.f32 %v4654, 0.0
        %v4671 = vmax.f32 %v4655, 0.0
        %v4672 = vmax.f32 %v4656, 0.0
        %v4673 = vmax.f32 %v4657, 0.0
        %v4674 = vmin.f32 %v4658, 1.0
        %v4675 = vmin.f32 %v4659, 1.0
        %v4676 = vmin.f32 %v4660, 1.0
        %v4677 = vmin.f32 %v4661, 1.0
        %v4678 = vmin.f32 %v4662, 1.0
        %v4679 = vmin.f32 %v4663, 1.0
        %v4680 = vmin.f32 %v4664, 1.0
        %v4681 = vmin.f32 %v4665, 1.0
        %v4682 = vmin.f32 %v4666, 1.0
        %v4683 = vmin.f32 %v4667, 1.0
        %v4684 = vmin.f32 %v4668, 1.0
        %v4685 = vmin.f32 %v4669, 1.0
        %v4686 = vmin.f32 %v4670, 1.0
        %v4687 = vmin.f32 %v4671, 1.0
        %v4688 = vmin.f32 %v4672, 1.0
        %v4689 = vmin.f32 %v4673, 1.0
        %v4690 = vld [vmem:[%s344] sm:$0xff]
        %v4691 = vlaneseq
        %v4692 = vshrl.u32 %v4691, 7
        %v4693 = vstv %s403
        %v4694 = vadd.s32 %v4692, %v4693
        %vm4695 = vcmp.gt.f32.partialorder %v4690, 0.5
        %v4696 = vsub.f32 1.0, %v4674
        %v4697 = vsub.f32 1.0, %v4675
        %v4698 = vsub.f32 1.0, %v4676
        %v4699 = vsub.f32 1.0, %v4677
        %v4700 = vsub.f32 1.0, %v4678
        %v4701 = vsub.f32 1.0, %v4679
        %v4702 = vsub.f32 1.0, %v4680
        %v4703 = vsub.f32 1.0, %v4681
        %v4704 = vsub.f32 1.0, %v4682
        %v4705 = vsub.f32 1.0, %v4683
        %v4706 = vsub.f32 1.0, %v4684
        %v4707 = vsub.f32 1.0, %v4685
        %v4708 = vsub.f32 1.0, %v4686
        %v4709 = vsub.f32 1.0, %v4687
        %v4710 = vsub.f32 1.0, %v4688
        %v4711 = vsub.f32 1.0, %v4689
        %4728 = vset.pattern.permute.xlu0 0
        %4729 = vperm.xlu0 %4728, %v4696
        %v4730 = vpop.permute.xlu0 %4729
        %4731 = vset.pattern.permute.xlu0 0
        %4732 = vperm.xlu0 %4731, %v4697
        %v4733 = vpop.permute.xlu0 %4732
        %4734 = vset.pattern.permute.xlu0 0
        %4735 = vperm.xlu0 %4734, %v4698
        %v4736 = vpop.permute.xlu0 %4735
        %4737 = vset.pattern.permute.xlu0 0
        %4738 = vperm.xlu0 %4737, %v4699
        %v4739 = vpop.permute.xlu0 %4738
        %4740 = vset.pattern.permute.xlu0 0
        %4741 = vperm.xlu0 %4740, %v4700
        %v4742 = vpop.permute.xlu0 %4741
        %4743 = vset.pattern.permute.xlu0 0
        %4744 = vperm.xlu0 %4743, %v4701
        %v4745 = vpop.permute.xlu0 %4744
        %4746 = vset.pattern.permute.xlu0 0
        %4747 = vperm.xlu0 %4746, %v4702
        %v4748 = vpop.permute.xlu0 %4747
        %4749 = vset.pattern.permute.xlu0 0
        %4750 = vperm.xlu0 %4749, %v4703
        %v4751 = vpop.permute.xlu0 %4750
        %4752 = vset.pattern.permute.xlu0 0
        %4753 = vperm.xlu0 %4752, %v4704
        %v4754 = vpop.permute.xlu0 %4753
        %4755 = vset.pattern.permute.xlu0 0
        %4756 = vperm.xlu0 %4755, %v4705
        %v4757 = vpop.permute.xlu0 %4756
        %4758 = vset.pattern.permute.xlu0 0
        %4759 = vperm.xlu0 %4758, %v4706
        %v4760 = vpop.permute.xlu0 %4759
        %4761 = vset.pattern.permute.xlu0 0
        %4762 = vperm.xlu0 %4761, %v4707
        %v4763 = vpop.permute.xlu0 %4762
        %4764 = vset.pattern.permute.xlu0 0
        %4765 = vperm.xlu0 %4764, %v4708
        %v4766 = vpop.permute.xlu0 %4765
        %4767 = vset.pattern.permute.xlu0 0
        %4768 = vperm.xlu0 %4767, %v4709
        %v4769 = vpop.permute.xlu0 %4768
        %4770 = vset.pattern.permute.xlu0 0
        %4771 = vperm.xlu0 %4770, %v4710
        %v4772 = vpop.permute.xlu0 %4771
        %4773 = vset.pattern.permute.xlu0 0
        %4774 = vperm.xlu0 %4773, %v4711
        %v4775 = vpop.permute.xlu0 %4774
        %v4776 = vlaneseq
        %v4777 = vshrl.u32 %v4776, 7
        %v4778 = vsub.s32 %v378, %v4777
        %v4779 = vrot.slane %v4730, %v4778
        %v4780 = vadd.s32 %v378, 4294967288
        %v4781 = vlaneseq
        %v4782 = vshrl.u32 %v4781, 7
        %v4783 = vsub.s32 %v4780, %v4782
        %v4784 = vrot.slane %v4733, %v4783
        %vm4785 = vcmask 130112
        %v4786 = vsel %vm4785, %v4784, %v4779
        %v4787 = vlaneseq
        %v4788 = vshrl.u32 %v4787, 7
        %v4789 = vsub.s32 %v378, %v4788
        %v4790 = vrot.slane %v4736, %v4789
        %v4791 = vlaneseq
        %v4792 = vshrl.u32 %v4791, 7
        %v4793 = vsub.s32 %v4780, %v4792
        %v4794 = vrot.slane %v4739, %v4793
        %v4795 = vsel %vm4785, %v4794, %v4790
        %v4796 = vlaneseq
        %v4797 = vshrl.u32 %v4796, 7
        %v4798 = vsub.s32 %v378, %v4797
        %v4799 = vrot.slane %v4742, %v4798
        %v4800 = vlaneseq
        %v4801 = vshrl.u32 %v4800, 7
        %v4802 = vsub.s32 %v4780, %v4801
        %v4803 = vrot.slane %v4745, %v4802
        %v4804 = vsel %vm4785, %v4803, %v4799
        %v4805 = vlaneseq
        %v4806 = vshrl.u32 %v4805, 7
        %v4807 = vsub.s32 %v378, %v4806
        %v4808 = vrot.slane %v4748, %v4807
        %v4809 = vlaneseq
        %v4810 = vshrl.u32 %v4809, 7
        %v4811 = vsub.s32 %v4780, %v4810
        %v4812 = vrot.slane %v4751, %v4811
        %v4813 = vsel %vm4785, %v4812, %v4808
        %v4814 = vlaneseq
        %v4815 = vshrl.u32 %v4814, 7
        %v4816 = vsub.s32 %v378, %v4815
        %v4817 = vrot.slane %v4754, %v4816
        %v4818 = vlaneseq
        %v4819 = vshrl.u32 %v4818, 7
        %v4820 = vsub.s32 %v4780, %v4819
        %v4821 = vrot.slane %v4757, %v4820
        %v4822 = vsel %vm4785, %v4821, %v4817
        %v4823 = vlaneseq
        %v4824 = vshrl.u32 %v4823, 7
        %v4825 = vsub.s32 %v378, %v4824
        %v4826 = vrot.slane %v4760, %v4825
        %v4827 = vlaneseq
        %v4828 = vshrl.u32 %v4827, 7
        %v4829 = vsub.s32 %v4780, %v4828
        %v4830 = vrot.slane %v4763, %v4829
        %v4831 = vsel %vm4785, %v4830, %v4826
        %v4832 = vlaneseq
        %v4833 = vshrl.u32 %v4832, 7
        %v4834 = vsub.s32 %v378, %v4833
        %v4835 = vrot.slane %v4766, %v4834
        %v4836 = vlaneseq
        %v4837 = vshrl.u32 %v4836, 7
        %v4838 = vsub.s32 %v4780, %v4837
        %v4839 = vrot.slane %v4769, %v4838
        %v4840 = vsel %vm4785, %v4839, %v4835
        %v4841 = vlaneseq
        %v4842 = vshrl.u32 %v4841, 7
        %v4843 = vsub.s32 %v378, %v4842
        %v4844 = vrot.slane %v4772, %v4843
        %v4845 = vlaneseq
        %v4846 = vshrl.u32 %v4845, 7
        %v4847 = vsub.s32 %v4780, %v4846
        %v4848 = vrot.slane %v4775, %v4847
        %v4849 = vsel %vm4785, %v4848, %v4844
        %vm4850 = vcmask 1041409
        %v4851 = vsel %vm4850, %v4795, %v4786
        %vm4852 = vcmask 1042434
        %v4853 = vsel %vm4852, %v4804, %v4851
        %vm4854 = vcmask 1043459
        %v4855 = vsel %vm4854, %v4813, %v4853
        %vm4856 = vcmask 1044484
        %v4857 = vsel %vm4856, %v4822, %v4855
        %vm4858 = vcmask 1045509
        %v4859 = vsel %vm4858, %v4831, %v4857
        %vm4860 = vcmask 1046534
        %v4861 = vsel %vm4860, %v4840, %v4859
        %vm4862 = vcmask 1047559
        %v4863 = vsel %vm4862, %v4849, %v4861
        %4881 = vset.pattern.permute.xlu0 0
        %4882 = vperm.xlu0 %4881, %v4674
        %v4883 = vpop.permute.xlu0 %4882
        %4884 = vset.pattern.permute.xlu0 0
        %4885 = vperm.xlu0 %4884, %v4675
        %v4886 = vpop.permute.xlu0 %4885
        %4887 = vset.pattern.permute.xlu0 0
        %4888 = vperm.xlu0 %4887, %v4676
        %v4889 = vpop.permute.xlu0 %4888
        %4890 = vset.pattern.permute.xlu0 0
        %4891 = vperm.xlu0 %4890, %v4677
        %v4892 = vpop.permute.xlu0 %4891
        %4893 = vset.pattern.permute.xlu0 0
        %4894 = vperm.xlu0 %4893, %v4678
        %v4895 = vpop.permute.xlu0 %4894
        %4896 = vset.pattern.permute.xlu0 0
        %4897 = vperm.xlu0 %4896, %v4679
        %v4898 = vpop.permute.xlu0 %4897
        %4899 = vset.pattern.permute.xlu0 0
        %4900 = vperm.xlu0 %4899, %v4680
        %v4901 = vpop.permute.xlu0 %4900
        %4902 = vset.pattern.permute.xlu0 0
        %4903 = vperm.xlu0 %4902, %v4681
        %v4904 = vpop.permute.xlu0 %4903
        %4905 = vset.pattern.permute.xlu0 0
        %4906 = vperm.xlu0 %4905, %v4682
        %v4907 = vpop.permute.xlu0 %4906
        %4908 = vset.pattern.permute.xlu0 0
        %4909 = vperm.xlu0 %4908, %v4683
        %v4910 = vpop.permute.xlu0 %4909
        %4911 = vset.pattern.permute.xlu0 0
        %4912 = vperm.xlu0 %4911, %v4684
        %v4913 = vpop.permute.xlu0 %4912
        %4914 = vset.pattern.permute.xlu0 0
        %4915 = vperm.xlu0 %4914, %v4685
        %v4916 = vpop.permute.xlu0 %4915
        %4917 = vset.pattern.permute.xlu0 0
        %4918 = vperm.xlu0 %4917, %v4686
        %v4919 = vpop.permute.xlu0 %4918
        %4920 = vset.pattern.permute.xlu0 0
        %4921 = vperm.xlu0 %4920, %v4687
        %v4922 = vpop.permute.xlu0 %4921
        %4923 = vset.pattern.permute.xlu0 0
        %4924 = vperm.xlu0 %4923, %v4688
        %v4925 = vpop.permute.xlu0 %4924
        %4926 = vset.pattern.permute.xlu0 0
        %4927 = vperm.xlu0 %4926, %v4689
        %v4928 = vpop.permute.xlu0 %4927
        %v4929 = vlaneseq
        %v4930 = vshrl.u32 %v4929, 7
        %v4931 = vsub.s32 %v378, %v4930
        %v4932 = vrot.slane %v4883, %v4931
        %v4933 = vlaneseq
        %v4934 = vshrl.u32 %v4933, 7
        %v4935 = vsub.s32 %v4780, %v4934
        %v4936 = vrot.slane %v4886, %v4935
        %v4937 = vsel %vm4785, %v4936, %v4932
        %v4938 = vlaneseq
        %v4939 = vshrl.u32 %v4938, 7
        %v4940 = vsub.s32 %v378, %v4939
        %v4941 = vrot.slane %v4889, %v4940
        %v4942 = vlaneseq
        %v4943 = vshrl.u32 %v4942, 7
        %v4944 = vsub.s32 %v4780, %v4943
        %v4945 = vrot.slane %v4892, %v4944
        %v4946 = vsel %vm4785, %v4945, %v4941
        %v4947 = vlaneseq
        %v4948 = vshrl.u32 %v4947, 7
        %v4949 = vsub.s32 %v378, %v4948
        %v4950 = vrot.slane %v4895, %v4949
        %v4951 = vlaneseq
        %v4952 = vshrl.u32 %v4951, 7
        %v4953 = vsub.s32 %v4780, %v4952
        %v4954 = vrot.slane %v4898, %v4953
        %v4955 = vsel %vm4785, %v4954, %v4950
        %v4956 = vlaneseq
        %v4957 = vshrl.u32 %v4956, 7
        %v4958 = vsub.s32 %v378, %v4957
        %v4959 = vrot.slane %v4901, %v4958
        %v4960 = vlaneseq
        %v4961 = vshrl.u32 %v4960, 7
        %v4962 = vsub.s32 %v4780, %v4961
        %v4963 = vrot.slane %v4904, %v4962
        %v4964 = vsel %vm4785, %v4963, %v4959
        %v4965 = vlaneseq
        %v4966 = vshrl.u32 %v4965, 7
        %v4967 = vsub.s32 %v378, %v4966
        %v4968 = vrot.slane %v4907, %v4967
        %v4969 = vlaneseq
        %v4970 = vshrl.u32 %v4969, 7
        %v4971 = vsub.s32 %v4780, %v4970
        %v4972 = vrot.slane %v4910, %v4971
        %v4973 = vsel %vm4785, %v4972, %v4968
        %v4974 = vlaneseq
        %v4975 = vshrl.u32 %v4974, 7
        %v4976 = vsub.s32 %v378, %v4975
        %v4977 = vrot.slane %v4913, %v4976
        %v4978 = vlaneseq
        %v4979 = vshrl.u32 %v4978, 7
        %v4980 = vsub.s32 %v4780, %v4979
        %v4981 = vrot.slane %v4916, %v4980
        %v4982 = vsel %vm4785, %v4981, %v4977
        %v4983 = vlaneseq
        %v4984 = vshrl.u32 %v4983, 7
        %v4985 = vsub.s32 %v378, %v4984
        %v4986 = vrot.slane %v4919, %v4985
        %v4987 = vlaneseq
        %v4988 = vshrl.u32 %v4987, 7
        %v4989 = vsub.s32 %v4780, %v4988
        %v4990 = vrot.slane %v4922, %v4989
        %v4991 = vsel %vm4785, %v4990, %v4986
        %v4992 = vlaneseq
        %v4993 = vshrl.u32 %v4992, 7
        %v4994 = vsub.s32 %v378, %v4993
        %v4995 = vrot.slane %v4925, %v4994
        %v4996 = vlaneseq
        %v4997 = vshrl.u32 %v4996, 7
        %v4998 = vsub.s32 %v4780, %v4997
        %v4999 = vrot.slane %v4928, %v4998
        %v5000 = vsel %vm4785, %v4999, %v4995
        %v5001 = vsel %vm4850, %v4946, %v4937
        %v5002 = vsel %vm4852, %v4955, %v5001
        %v5003 = vsel %vm4854, %v4964, %v5002
        %v5004 = vsel %vm4856, %v4973, %v5003
        %v5005 = vsel %vm4858, %v4982, %v5004
        %v5006 = vsel %vm4860, %v4991, %v5005
        %v5007 = vsel %vm4862, %v5000, %v5006
        %v5009 = vsel %vm4695, %v4863, %v5007
        %vm5010 = vcmp.eq.s32.totalorder %v4694, %v378
        %v5011 = vsel %vm5010, 0.0, %v5009
        %v5012 = vld [vmem:[#allocation2] sm:$0x1]
        %vm5013 = vcmask 130048
        %v5014 = vsel %vm5013, %v5011, 0.0
        %5015 = vadd.xlane.f32.xlu0 %v5014
        %v5016 = vpop.xlane.xlu0 %5015
        %v5017 = vrot.slane %v5016, 4
        %v5018 = vadd.f32 %v5016, %v5017
        %v5019 = vrot.slane %v5018, 2
        %v5020 = vadd.f32 %v5018, %v5019
        %v5021 = vrot.slane %v5020, 1
        %v5022 = vadd.f32 %v5020, %v5021
        %s5023 = vtos %v5022
        %v5024 = vstv %s5023
        %v5025 = vadd.f32 %v5012, %v5024
        %vm5026 = vcmask 0
        %5027 = vst.msk [vmem:[#allocation2] sm:$0x1] %vm5026, %v5025
        %p5028 = scmp.eq.s32.totalorder %s24, 1
        // Predicated region
        $region65: #{tpu_custom_call.1} parent=51 // pred_check
          %p5029 = pneg %p5028
        $region66: #{tpu_custom_call.1} parent=51 // pred_check_branch
          %5031 = sbr.rel (%p5029) target = $region68
        $region67: #{tpu_custom_call.1} parent=51 // pred_region
          %v5032 = vld [vmem:[%s1] sm:$0xff]
          %v5033 = vld [vmem:[%s1 + $0x8] sm:$0xff]
          %v5034 = vld [vmem:[%s2] sm:$0xff]
          %v5035 = vld [vmem:[%s2 + $0x8] sm:$0xff]
          %v5036 = vld [vmem:[%s3] sm:$0x1]
          %vm5037 = vcmask 31744
          %v5038 = vsel %vm5037, %v5032, -inf
          %5039 = vmax.xlane.f32.xlu0 %v5038
          %v5040 = vpop.xlane.xlu0 %5039
          %v5041 = vsel %vm5037, %v5033, -inf
          %5042 = vmax.xlane.f32.xlu0 %v5041
          %v5043 = vpop.xlane.xlu0 %5042
          %v5044 = vsub.f32 %v5032, %v5040
          %v5045 = vsub.f32 %v5033, %v5043
          %v5046 = vmul.f32 %v5044, 1.442695
          %v5047 = vpow.pop %v5046
          %v5048 = vmul.f32 %v5045, 1.442695
          %v5049 = vpow.pop %v5048
          %v5050 = vsel %vm5037, %v5047, 0.0
          %5051 = vadd.xlane.f32.xlu0 %v5050
          %v5052 = vpop.xlane.xlu0 %5051
          %v5053 = vsel %vm5037, %v5049, 0.0
          %5054 = vadd.xlane.f32.xlu0 %v5053
          %v5055 = vpop.xlane.xlu0 %5054
          %v5056 = vlog2.pop %v5052
          %v5057 = vmul.f32 %v5056, 0.6931472
          %v5058 = vlog2.pop %v5055
          %v5059 = vmul.f32 %v5058, 0.6931472
          %v5060 = vsub.f32 %v5044, %v5057
          %v5061 = vsub.f32 %v5045, %v5059
          %v5062 = vmul.f32 %v5034, %v5060
          %v5063 = vmul.f32 %v5035, %v5061
          %v5064 = vsel %vm5037, %v5062, 0.0
          %5065 = vadd.xlane.f32.xlu0 %v5064
          %v5066 = vpop.xlane.xlu0 %5065
          %v5067 = vsel %vm5037, %v5063, 0.0
          %5068 = vadd.xlane.f32.xlu0 %v5067
          %v5069 = vpop.xlane.xlu0 %5068
          %v5070 = vsub.f32 0.0, %v5066
          %v5071 = vsub.f32 0.0, %v5069
          %v5073 = vlaneseq
          %v5074 = vshrl.u32 %v5073, 7
          %v5075 = vsub.s32 0, %v5074
          %v5076 = vrot.slane %v5036, %v5075
          %v5078 = vmul.f32 %v5034, %v5076
          %v5079 = vmul.f32 %v5035, %v5076
          %v5080 = vsel %vm5037, %v5078, 0.0
          %5081 = vadd.xlane.f32.xlu0 %v5080
          %v5082 = vpop.xlane.xlu0 %5081
          %v5083 = vsel %vm5037, %v5079, 0.0
          %5084 = vadd.xlane.f32.xlu0 %v5083
          %v5085 = vpop.xlane.xlu0 %5084
          %v5086 = vmul.f32 %v5082, %v5070
          %v5087 = vmul.f32 %v5085, %v5071
          %vm5088 = vcmask 7168
          %v5089 = vsel %vm5088, %v5086, 0.0
          %v5090 = vsel %vm5088, %v5087, 0.0
          %v5091 = vadd.f32 %v5089, %v5090
          %5092 = vadd.xlane.f32.xlu0 %v5091
          %v5093 = vpop.xlane.xlu0 %5092
          %v5094 = vrot.slane %v5093, 4
          %v5095 = vadd.f32 %v5093, %v5094
          %v5096 = vrot.slane %v5095, 2
          %v5097 = vadd.f32 %v5095, %v5096
          %v5098 = vrot.slane %v5097, 1
          %v5099 = vadd.f32 %v5097, %v5098
          %s5100 = vtos %v5099
          %v5101 = vsel %vm5088, %v5082, 0.0
          %v5102 = vsel %vm5088, %v5085, 0.0
          %v5103 = vadd.f32 %v5101, %v5102
          %5104 = vadd.xlane.f32.xlu0 %v5103
          %v5105 = vpop.xlane.xlu0 %5104
          %v5106 = vrot.slane %v5105, 4
          %v5107 = vadd.f32 %v5105, %v5106
          %v5108 = vrot.slane %v5107, 2
          %v5109 = vadd.f32 %v5107, %v5108
          %v5110 = vrot.slane %v5109, 1
          %v5111 = vadd.f32 %v5109, %v5110
          %s5112 = vtos %v5111
          %v5113 = vstv %s5112
          %v5114 = vrcp.pop %v5113
          %s5115 = vtos %v5114
          %s5116 = smul.f32 %s5100, %s5115
          %v5117 = vld [vmem:[#allocation2] sm:$0x1]
          %v5118 = vrcp.pop 240.0
          %v5119 = vmul.f32 %v5117, %v5118
          %s5120 = smul.f32 %s5116, 0.7
          %v5121 = vmul.f32 %v5119, 0.2
          %v5122 = vstv %s5120
          %v5123 = vadd.f32 %v5122, %v5121
          %5124 = vst.msk [vmem:[#allocation8] sm:$0x1] %vm5026, %v5123
        $region68: #{tpu_custom_call.1} parent=51 // pred_fallthru
          _
        // Predicated region
        $region69: #{tpu_custom_call.1} parent=51 // pred_check
          %p5125 = pneg %p215
        $region70: #{tpu_custom_call.1} parent=51 // pred_check_branch
          %5127 = sbr.rel (%p5125) target = $region72
        $region71: #{tpu_custom_call.1} parent=51 // pred_region
          %s5129 = ssub.s32 16, 16
          %5130 = vsyncadd [#allocation5], %s5129
          %s5132 = sshll.u32 [#allocation8], 4
          %s5133 = int_to_ptr.vmem [resolvable:$true] %s5132
          %5135 = dma.vmem_to_hbm [thread:$0]  %s5133, 16, %s8, [#allocation5]
        $region72: #{tpu_custom_call.1} parent=51 // pred_fallthru
          _
        // Predicated region
        $region73: #{tpu_custom_call.1} parent=51 // pred_check
          %p5136 = pneg %p215
        $region74: #{tpu_custom_call.1} parent=51 // pred_check_branch
          %5138 = sbr.rel (%p5136) target = $region76
        $region75: #{tpu_custom_call.1} parent=51 // pred_region
          %5139 = dma.done [#allocation5], 16
        $region76: #{tpu_custom_call.1} parent=51 // pred_fallthru
          _
      $region52: #{tpu_custom_call.1} parent=5 // pred_fallthru
        _
      %p5140 = scmp.le.s32.totalorder 2, %s19
      // Predicated region
      $region77: #{tpu_custom_call.1} parent=5 // pred_check
        %p5141 = pneg %p5140
      $region78: #{tpu_custom_call.1} parent=5 // pred_check_branch
        %5143 = sbr.rel (%p5141) target = $region80
      $region79: #{tpu_custom_call.1} parent=5 // pred_region
        %s5144 = ssub.s32 %s19, 2
      $region80: #{tpu_custom_call.1} parent=5 // pred_fallthru
        _
    $region6: #{tpu_custom_call.1} parent=1 // loop_footer
      %s23 = sadd.s32 1, %s19
    $region7: #{tpu_custom_call.1} parent=1 // loop_footer_branch
      %18 = sbr.rel target = $region3
    $region8: #{tpu_custom_call.1} parent=1 // loop_exit
      _
    %5145 = vsyncpa [#allocation4], 1
    %s5146 = scalar_lea.sflag [#allocation4], 1
    %5147 = vsyncpa %s5146, 1
    %5148 = vsyncpa [#allocation7], 1
    %s5149 = scalar_lea.sflag [#allocation7], 1
    %5150 = vsyncpa %s5149, 1
    %5151 = vsyncpa [#allocation5], 1
    %s5152 = scalar_lea.sflag [#allocation5], 1
    %5153 = vsyncpa %s5152, 1

</llo_original>
